<compile_context>
chip_gen: v6e
topology: v6e:2x2x1
jax: 0.10.0
libtpu: 0.0.40
codegen_flags: <defaults>
</compile_context>

<pallas_src>
import functools
import math

import jax
import jax.numpy as jnp
from jax.experimental import pallas as pl
from jax.experimental.pallas import tpu as pltpu


CFG = dict(
    image_size=16,
    patch_size=4,
    num_channels=3,
    hidden=32,
    layers=2,
    heads=4,
    intermediate=64,
    eps=1e-12,
)

_SUBLANE = 8


def _round_up(x, m):
    return (x + m - 1) // m * m


def _pick_batch_tile(B):
    """Images per grid step.

    v7x has 2 TensorCores per chip -> keep 2 grid steps so dimension_semantics
    ("parallel",) can shard the batch across cores. v5e/v6e have 1 TC -> one
    big step amortizes the ~600-cycle per-step overhead best.
    """
    try:
        kind = jax.devices()[0].device_kind.lower()
    except Exception:  # pragma: no cover - defensive, never expected on TPU
        kind = ""
    if ("v7" in kind) and B >= 2 and B % 2 == 0:
        return B // 2
    return B


# ----------------------------- fused Pallas kernel -------------------------- #

def _vit_fused_kernel(
    patches_ref, base_ref, mask_ref, patch_w_ref,
    ln1_g_ref, ln1_b_ref, qkv_w_ref, qkv_b_ref, o_w_ref, o_b_ref,
    ln2_g_ref, ln2_b_ref, fc1_w_ref, fc1_b_ref, fc2_w_ref, fc2_b_ref,
    lnf_g_ref, lnf_b_ref,
    out_ref,
    *, num_layers, num_heads, head_dim, eps,
):
    Bt, Sp, Cpp = patches_ref.shape        # batch tile, padded seq, C*p*p
    D = patch_w_ref.shape[1]               # hidden size
    M = Bt * Sp                            # flattened token count

    def layer_norm(x, g, b):
        mean = jnp.mean(x, axis=-1, keepdims=True)
        var = jnp.mean(jnp.square(x - mean), axis=-1, keepdims=True)
        return (x - mean) * jax.lax.rsqrt(var + eps) * g + b

    def gelu_tanh(y):
        # TODO(synk): HF ViT's default hidden_act is exact erf-GELU; this is the
        # "gelu_pytorch_tanh" approximation used by the synthetic config.
        c = math.sqrt(2.0 / math.pi)
        return 0.5 * y * (1.0 + jnp.tanh(c * (y + 0.044715 * (y * y * y))))

    # --- patch embedding; cls token, position emb and conv bias folded into
    #     `base` on the host side (base already tiled to (M, D)).
    patches = jnp.concatenate([patches_ref[b] for b in range(Bt)], axis=0)  # (M, Cpp)
    hs = jnp.dot(patches, patch_w_ref[...],
                 preferred_element_type=jnp.float32) + base_ref[...]        # (M, D)

    # Precomputed additive attention bias: block-diagonal across the Bt packed
    # images, padded key columns disabled. 0 where valid, -1e30 where masked.
    mask_bias = mask_ref[...]                                               # (M, M)

    for l in range(num_layers):
        # ---- self-attention block (pre-LN) ----
        xn = layer_norm(hs, ln1_g_ref[l], ln1_b_ref[l])
        # softmax scale already folded into the Q columns of qkv_w / qkv_b
        qkv = jnp.dot(xn, qkv_w_ref[l],
                      preferred_element_type=jnp.float32) + qkv_b_ref[l]    # (M, 3D)
        q = qkv[:, 0:D]
        k = qkv[:, D:2 * D]
        v = qkv[:, 2 * D:3 * D]
        o_w_l = o_w_ref[l]                                                  # (D, D)

        attn_acc = None
        for h in range(num_heads):
            lo, hi = h * head_dim, (h + 1) * head_dim
            qh, kh, vh = q[:, lo:hi], k[:, lo:hi], v[:, lo:hi]              # (M, hd)
            s = jax.lax.dot_general(                                        # q @ k^T
                qh, kh, (((1,), (1,)), ((), ())),
                preferred_element_type=jnp.float32)                         # (M, M)
            s = s + mask_bias
            m = jnp.max(s, axis=-1, keepdims=True)
            p = jnp.exp(s - m)
            denom = jnp.sum(p, axis=-1, keepdims=True)
            ctx_h = jnp.dot(p, vh, preferred_element_type=jnp.float32)      # (M, hd)
            ctx_h = ctx_h * pl.reciprocal(denom, approx=True)
            # fold output projection into the head loop (no lane concat)
            term = jnp.dot(ctx_h, o_w_l[lo:hi, :],
                           preferred_element_type=jnp.float32)              # (M, D)
            attn_acc = term if attn_acc is None else attn_acc + term

        hs = hs + attn_acc + o_b_ref[l]                                     # residual 1

        # ---- MLP block (pre-LN) ----
        xn2 = layer_norm(hs, ln2_g_ref[l], ln2_b_ref[l])
        inter = gelu_tanh(
            jnp.dot(xn2, fc1_w_ref[l],
                    preferred_element_type=jnp.float32) + fc1_b_ref[l])
        mlp_out = jnp.dot(inter, fc2_w_ref[l],
                          preferred_element_type=jnp.float32) + fc2_b_ref[l]
        hs = hs + mlp_out                                                   # residual 2

    # ---- final LayerNorm applied only to the CLS rows; single batched store
    cls_rows = jnp.concatenate(
        [hs[b * Sp:b * Sp + 1, :] for b in range(Bt)], axis=0)              # (Bt, D)
    cls_rows = layer_norm(cls_rows, lnf_g_ref[...], lnf_b_ref[...])
    out_ref[0] = cls_rows.astype(out_ref.dtype)


# ------------------------------- ViT model ---------------------------------- #

def init_params(key, cfg):
    p = cfg["patch_size"]
    C = cfg["num_channels"]
    D = cfg["hidden"]
    I = cfg["intermediate"]
    L = cfg["layers"]
    num_patches = (cfg["image_size"] // p) ** 2
    S = num_patches + 1

    def nrm(k, shape):
        return 0.02 * jax.random.normal(k, shape, dtype=jnp.float32)

    keys = iter(jax.random.split(key, 4 + 8 * L))

    params = {
        # Conv2d(C, D, kernel=p, stride=p) expressed as matmul: (C*p*p, D)
        "patch_w": nrm(next(keys), (C * p * p, D)),
        "patch_b": jnp.zeros((D,), jnp.float32),
        "cls": nrm(next(keys), (1, 1, D)),
        "pos": nrm(next(keys), (1, S, D)),
        "lnf_g": jnp.ones((D,), jnp.float32),
        "lnf_b": jnp.zeros((D,), jnp.float32),
    }

    names = ["ln1_g", "ln1_b", "qkv_w", "qkv_b", "o_w", "o_b",
             "ln2_g", "ln2_b", "fc1_w", "fc1_b", "fc2_w", "fc2_b"]
    st = {n: [] for n in names}
    for _ in range(L):
        q_w = nrm(next(keys), (D, D))
        k_w = nrm(next(keys), (D, D))
        v_w = nrm(next(keys), (D, D))
        st["ln1_g"].append(jnp.ones((1, D), jnp.float32))
        st["ln1_b"].append(jnp.zeros((1, D), jnp.float32))
        st["qkv_w"].append(jnp.concatenate([q_w, k_w, v_w], axis=1))   # (D, 3D)
        st["qkv_b"].append(jnp.zeros((1, 3 * D), jnp.float32))
        st["o_w"].append(nrm(next(keys), (D, D)))
        st["o_b"].append(jnp.zeros((1, D), jnp.float32))
        st["ln2_g"].append(jnp.ones((1, D), jnp.float32))
        st["ln2_b"].append(jnp.zeros((1, D), jnp.float32))
        st["fc1_w"].append(nrm(next(keys), (D, I)))
        st["fc1_b"].append(jnp.zeros((1, I), jnp.float32))
        st["fc2_w"].append(nrm(next(keys), (I, D)))
        st["fc2_b"].append(jnp.zeros((1, D), jnp.float32))
    params["stacked"] = {n: jnp.stack(v, axis=0) for n, v in st.items()}
    return params


def vit_forward(params, x, cfg=CFG):
    B, C, H, W = x.shape
    p = cfg["patch_size"]
    D = cfg["hidden"]
    I = cfg["intermediate"]
    L = cfg["layers"]
    nh = cfg["heads"]
    hd = D // nh
    hp, wp = H // p, W // p
    num_patches = hp * wp
    S = num_patches + 1
    Sp = _round_up(S, _SUBLANE)
    Cpp = C * p * p

    Bt = _pick_batch_tile(B)        # images per grid step
    nsteps = B // Bt
    M = Bt * Sp                     # flattened tokens per grid step

    # --- patchify (plain-JAX glue == Conv2d(stride=patch_size) im2col) --------
    # Channel-major (c, u, v) flattening matches PyTorch Conv2d weight layout.
    patches = (
        x.reshape(B, C, hp, p, wp, p)
        .transpose(0, 2, 4, 1, 3, 5)
        .reshape(B, num_patches, Cpp)
    )
    # Row 0 (CLS slot) and pad rows are zero, so their matmul contribution is 0.
    patches_padded = jnp.pad(patches, ((0, 0), (1, Sp - 1 - num_patches), (0, 0)))

    # Fold cls token, position embedding and patch-projection bias into `base`:
    #   row 0        = cls + pos[0]
    #   rows 1..S-1  = pos[1:] + patch_b
    #   pad rows     = 0
    cls = params["cls"][0]                       # (1, D)
    pos = params["pos"][0]                       # (S, D)
    base_valid = jnp.concatenate(
        [cls + pos[0:1], pos[1:] + params["patch_b"][None, :]], axis=0)  # (S, D)
    base = jnp.pad(base_valid, ((0, Sp - S), (0, 0)))                    # (Sp, D)
    base_tiled = jnp.tile(base, (Bt, 1))                                 # (M, D)

    # Additive attention mask: block-diagonal across the Bt packed images,
    # padded key columns (>= S within each image) masked out.
    row = jnp.arange(M)[:, None]
    col = jnp.arange(M)[None, :]
    valid = ((row // Sp) == (col // Sp)) & ((col % Sp) < S)
    mask_bias = jnp.where(valid, 0.0, -1e30).astype(jnp.float32)         # (M, M)

    st = params["stacked"]

    # Fold the 1/sqrt(head_dim) softmax scale into the Q columns of the fused
    # QKV weight/bias (done once, outside the kernel's serial chain).
    scale = 1.0 / math.sqrt(hd)
    qkv_w = jnp.concatenate(
        [st["qkv_w"][:, :, :D] * scale, st["qkv_w"][:, :, D:]], axis=-1)
    qkv_b = jnp.concatenate(
        [st["qkv_b"][:, :, :D] * scale, st["qkv_b"][:, :, D:]], axis=-1)

    kernel = functools.partial(
        _vit_fused_kernel,
        num_layers=L, num_heads=nh, head_dim=hd, eps=cfg["eps"])

    def full2d(shape):
        return pl.BlockSpec(shape, lambda g: (0, 0))

    def full3d(shape):
        return pl.BlockSpec(shape, lambda g: (0, 0, 0))

    out = pl.pallas_call(
        kernel,
        grid=(nsteps,),
        in_specs=[
            pl.BlockSpec((Bt, Sp, Cpp), lambda g: (g, 0, 0)),  # patches (per block)
            full2d((M, D)),                                    # base (tiled)
            full2d((M, M)),                                    # additive attn mask
            full2d((Cpp, D)),                                  # patch_w
            full3d((L, 1, D)), full3d((L, 1, D)),              # ln1 gamma/beta
            full3d((L, D, 3 * D)), full3d((L, 1, 3 * D)),      # fused qkv w/b (Q scaled)
            full3d((L, D, D)), full3d((L, 1, D)),              # attn output w/b
            full3d((L, 1, D)), full3d((L, 1, D)),              # ln2 gamma/beta
            full3d((L, D, I)), full3d((L, 1, I)),              # fc1 w/b
            full3d((L, I, D)), full3d((L, 1, D)),              # fc2 w/b
            full2d((1, D)), full2d((1, D)),                    # final ln gamma/beta
        ],
        out_specs=pl.BlockSpec((1, Bt, D), lambda g: (g, 0, 0)),
        out_shape=jax.ShapeDtypeStruct((nsteps, Bt, D), jnp.float32),
        compiler_params=pltpu.CompilerParams(
            dimension_semantics=("parallel",)),
    )(
        patches_padded, base_tiled, mask_bias, params["patch_w"],
        st["ln1_g"], st["ln1_b"], qkv_w, qkv_b,
        st["o_w"], st["o_b"], st["ln2_g"], st["ln2_b"],
        st["fc1_w"], st["fc1_b"], st["fc2_w"], st["fc2_b"],
        params["lnf_g"].reshape(1, D), params["lnf_b"].reshape(1, D),
    )
    return out.reshape(B, D)


# --------------------------------- main -------------------------------------- #

if __name__ == "__main__":
    key = jax.random.PRNGKey(0)
    k_param, k_x = jax.random.split(key)

    params = init_params(k_param, CFG)
    # layout: NCHW, matching the PyTorch module's forward(x) input.
    x = jax.random.normal(
        k_x,
        (2, CFG["num_channels"], CFG["image_size"], CFG["image_size"]),
        dtype=jnp.float32,
    )

    fwd = jax.jit(vit_forward)
    out = fwd(params, x)
    jax.block_until_ready(out)

    assert out.shape == (2, CFG["hidden"]), out.shape
    assert bool(jnp.all(jnp.isfinite(out)))
    print("KERNEL_OK")
</pallas_src>

<mosaic_0001>
module attributes {stable_mosaic.version = 11 : i64} {
  func.func @_vit_fused_kernel(%arg0: i32, %arg1: memref<2x24x48xf32, #tpu.memory_space<vmem>>, %arg2: memref<48x32xf32, #tpu.memory_space<vmem>>, %arg3: memref<48x48xf32, #tpu.memory_space<vmem>>, %arg4: memref<48x32xf32, #tpu.memory_space<vmem>>, %arg5: memref<2x1x32xf32, #tpu.memory_space<vmem>>, %arg6: memref<2x1x32xf32, #tpu.memory_space<vmem>>, %arg7: memref<2x32x96xf32, #tpu.memory_space<vmem>>, %arg8: memref<2x1x96xf32, #tpu.memory_space<vmem>>, %arg9: memref<2x32x32xf32, #tpu.memory_space<vmem>>, %arg10: memref<2x1x32xf32, #tpu.memory_space<vmem>>, %arg11: memref<2x1x32xf32, #tpu.memory_space<vmem>>, %arg12: memref<2x1x32xf32, #tpu.memory_space<vmem>>, %arg13: memref<2x32x64xf32, #tpu.memory_space<vmem>>, %arg14: memref<2x1x64xf32, #tpu.memory_space<vmem>>, %arg15: memref<2x64x32xf32, #tpu.memory_space<vmem>>, %arg16: memref<2x1x32xf32, #tpu.memory_space<vmem>>, %arg17: memref<1x32xf32, #tpu.memory_space<vmem>>, %arg18: memref<1x32xf32, #tpu.memory_space<vmem>>, %arg19: memref<1x2x32xf32, #tpu.memory_space<vmem>>) attributes {dimension_semantics = [#tpu.dimension_semantics<parallel>], iteration_bounds = array<i64: 1>, scalar_prefetch = 0 : i64, scratch_operands = 0 : i64, tpu.core_type = #tpu.core_type<tc>, window_params = [{transform_indices = @transform_0, window_bounds = array<i64: 2, 24, 48>}, {pipeline_mode = #tpu.pipeline_mode<synchronous>, transform_indices = @transform_1, window_bounds = array<i64: 48, 32>}, {pipeline_mode = #tpu.pipeline_mode<synchronous>, transform_indices = @transform_2, window_bounds = array<i64: 48, 48>}, {pipeline_mode = #tpu.pipeline_mode<synchronous>, transform_indices = @transform_3, window_bounds = array<i64: 48, 32>}, {pipeline_mode = #tpu.pipeline_mode<synchronous>, transform_indices = @transform_4, window_bounds = array<i64: 2, 1, 32>}, {pipeline_mode = #tpu.pipeline_mode<synchronous>, transform_indices = @transform_5, window_bounds = array<i64: 2, 1, 32>}, {pipeline_mode = #tpu.pipeline_mode<synchronous>, transform_indices = @transform_6, window_bounds = array<i64: 2, 32, 96>}, {pipeline_mode = #tpu.pipeline_mode<synchronous>, transform_indices = @transform_7, window_bounds = array<i64: 2, 1, 96>}, {pipeline_mode = #tpu.pipeline_mode<synchronous>, transform_indices = @transform_8, window_bounds = array<i64: 2, 32, 32>}, {pipeline_mode = #tpu.pipeline_mode<synchronous>, transform_indices = @transform_9, window_bounds = array<i64: 2, 1, 32>}, {pipeline_mode = #tpu.pipeline_mode<synchronous>, transform_indices = @transform_10, window_bounds = array<i64: 2, 1, 32>}, {pipeline_mode = #tpu.pipeline_mode<synchronous>, transform_indices = @transform_11, window_bounds = array<i64: 2, 1, 32>}, {pipeline_mode = #tpu.pipeline_mode<synchronous>, transform_indices = @transform_12, window_bounds = array<i64: 2, 32, 64>}, {pipeline_mode = #tpu.pipeline_mode<synchronous>, transform_indices = @transform_13, window_bounds = array<i64: 2, 1, 64>}, {pipeline_mode = #tpu.pipeline_mode<synchronous>, transform_indices = @transform_14, window_bounds = array<i64: 2, 64, 32>}, {pipeline_mode = #tpu.pipeline_mode<synchronous>, transform_indices = @transform_15, window_bounds = array<i64: 2, 1, 32>}, {pipeline_mode = #tpu.pipeline_mode<synchronous>, transform_indices = @transform_16, window_bounds = array<i64: 1, 32>}, {pipeline_mode = #tpu.pipeline_mode<synchronous>, transform_indices = @transform_17, window_bounds = array<i64: 1, 32>}, {transform_indices = @transform_18, window_bounds = array<i64: 1, 2, 32>}]} {
    %c0 = arith.constant 0 : index
    %c0_0 = arith.constant 0 : index
    %c0_1 = arith.constant 0 : index
    %0 = vector.load %arg1[%c0, %c0_0, %c0_1] : memref<2x24x48xf32, #tpu.memory_space<vmem>>, vector<1x24x48xf32>
    %1 = vector.shape_cast %0 : vector<1x24x48xf32> to vector<24x48xf32>
    %c1 = arith.constant 1 : index
    %c0_2 = arith.constant 0 : index
    %c0_3 = arith.constant 0 : index
    %2 = vector.load %arg1[%c1, %c0_2, %c0_3] : memref<2x24x48xf32, #tpu.memory_space<vmem>>, vector<1x24x48xf32>
    %3 = vector.shape_cast %2 : vector<1x24x48xf32> to vector<24x48xf32>
    %4 = tpu.concatenate %1, %3 in 0 : vector<24x48xf32>, vector<24x48xf32> -> vector<48x48xf32>
    %c0_4 = arith.constant 0 : index
    %c0_5 = arith.constant 0 : index
    %5 = vector.load %arg4[%c0_4, %c0_5] : memref<48x32xf32, #tpu.memory_space<vmem>>, vector<48x32xf32>
    %cst = arith.constant dense<0.000000e+00> : vector<48x32xf32>
    %6 = tpu.matmul %4, %5, %cst {dimension_numbers = #tpu.dot_dimension_numbers<[1], [0], [0], [1], [0, 0, 1, 1], [], []>} : vector<48x48xf32>, vector<48x32xf32>, vector<48x32xf32> -> vector<48x32xf32>
    %c0_6 = arith.constant 0 : index
    %c0_7 = arith.constant 0 : index
    %7 = vector.load %arg2[%c0_6, %c0_7] : memref<48x32xf32, #tpu.memory_space<vmem>>, vector<48x32xf32>
    %8 = arith.addf %6, %7 : vector<48x32xf32>
    %c0_8 = arith.constant 0 : index
    %c0_9 = arith.constant 0 : index
    %9 = vector.load %arg3[%c0_8, %c0_9] : memref<48x48xf32, #tpu.memory_space<vmem>>, vector<48x48xf32>
    %c0_10 = arith.constant 0 : index
    %c0_11 = arith.constant 0 : index
    %c0_12 = arith.constant 0 : index
    %10 = vector.load %arg5[%c0_10, %c0_11, %c0_12] : memref<2x1x32xf32, #tpu.memory_space<vmem>>, vector<1x1x32xf32>
    %11 = vector.shape_cast %10 : vector<1x1x32xf32> to vector<1x32xf32>
    %c0_13 = arith.constant 0 : index
    %c0_14 = arith.constant 0 : index
    %c0_15 = arith.constant 0 : index
    %12 = vector.load %arg6[%c0_13, %c0_14, %c0_15] : memref<2x1x32xf32, #tpu.memory_space<vmem>>, vector<1x1x32xf32>
    %13 = vector.shape_cast %12 : vector<1x1x32xf32> to vector<1x32xf32>
    %cst_16 = arith.constant dense<0.000000e+00> : vector<48xf32>
    %14 = vector.multi_reduction <add>, %8, %cst_16 [1] : vector<48x32xf32> to vector<48xf32>
    %15 = vector.shape_cast %14 : vector<48xf32> to vector<48x1xf32>
    %cst_17 = arith.constant 3.200000e+01 : f32
    %16 = vector.broadcast %cst_17 : f32 to vector<48x1xf32>
    %17 = arith.divf %15, %16 : vector<48x1xf32>
    %18 = vector.broadcast %17 : vector<48x1xf32> to vector<48x32xf32>
    %19 = arith.subf %8, %18 : vector<48x32xf32>
    %20 = arith.mulf %19, %19 : vector<48x32xf32>
    %cst_18 = arith.constant dense<0.000000e+00> : vector<48xf32>
    %21 = vector.multi_reduction <add>, %20, %cst_18 [1] : vector<48x32xf32> to vector<48xf32>
    %22 = vector.shape_cast %21 : vector<48xf32> to vector<48x1xf32>
    %cst_19 = arith.constant 3.200000e+01 : f32
    %23 = vector.broadcast %cst_19 : f32 to vector<48x1xf32>
    %24 = arith.divf %22, %23 : vector<48x1xf32>
    %25 = vector.broadcast %17 : vector<48x1xf32> to vector<48x32xf32>
    %26 = arith.subf %8, %25 : vector<48x32xf32>
    %cst_20 = arith.constant 9.99999996E-13 : f32
    %27 = vector.broadcast %cst_20 : f32 to vector<48x1xf32>
    %28 = arith.addf %24, %27 : vector<48x1xf32>
    %29 = math.rsqrt %28 : vector<48x1xf32>
    %30 = vector.broadcast %29 : vector<48x1xf32> to vector<48x32xf32>
    %31 = arith.mulf %26, %30 : vector<48x32xf32>
    %32 = vector.broadcast %11 : vector<1x32xf32> to vector<48x32xf32>
    %33 = arith.mulf %31, %32 : vector<48x32xf32>
    %34 = vector.broadcast %13 : vector<1x32xf32> to vector<48x32xf32>
    %35 = arith.addf %33, %34 : vector<48x32xf32>
    %c0_21 = arith.constant 0 : index
    %c0_22 = arith.constant 0 : index
    %c0_23 = arith.constant 0 : index
    %36 = vector.load %arg7[%c0_21, %c0_22, %c0_23] : memref<2x32x96xf32, #tpu.memory_space<vmem>>, vector<1x32x96xf32>
    %37 = vector.shape_cast %36 : vector<1x32x96xf32> to vector<32x96xf32>
    %cst_24 = arith.constant dense<0.000000e+00> : vector<48x96xf32>
    %38 = tpu.matmul %35, %37, %cst_24 {dimension_numbers = #tpu.dot_dimension_numbers<[1], [0], [0], [1], [0, 0, 1, 1], [], []>} : vector<48x32xf32>, vector<32x96xf32>, vector<48x96xf32> -> vector<48x96xf32>
    %c0_25 = arith.constant 0 : index
    %c0_26 = arith.constant 0 : index
    %c0_27 = arith.constant 0 : index
    %39 = vector.load %arg8[%c0_25, %c0_26, %c0_27] : memref<2x1x96xf32, #tpu.memory_space<vmem>>, vector<1x1x96xf32>
    %40 = vector.shape_cast %39 : vector<1x1x96xf32> to vector<1x96xf32>
    %41 = vector.broadcast %40 : vector<1x96xf32> to vector<48x96xf32>
    %42 = arith.addf %38, %41 : vector<48x96xf32>
    %43 = vector.extract_strided_slice %42 {offsets = [0, 0], sizes = [48, 32], strides = [1, 1]} : vector<48x96xf32> to vector<48x32xf32>
    %44 = vector.extract_strided_slice %42 {offsets = [0, 32], sizes = [48, 32], strides = [1, 1]} : vector<48x96xf32> to vector<48x32xf32>
    %45 = vector.extract_strided_slice %42 {offsets = [0, 64], sizes = [48, 32], strides = [1, 1]} : vector<48x96xf32> to vector<48x32xf32>
    %c0_28 = arith.constant 0 : index
    %c0_29 = arith.constant 0 : index
    %c0_30 = arith.constant 0 : index
    %46 = vector.load %arg9[%c0_28, %c0_29, %c0_30] : memref<2x32x32xf32, #tpu.memory_space<vmem>>, vector<1x32x32xf32>
    %47 = vector.shape_cast %46 : vector<1x32x32xf32> to vector<32x32xf32>
    %48 = vector.extract_strided_slice %43 {offsets = [0, 0], sizes = [48, 8], strides = [1, 1]} : vector<48x32xf32> to vector<48x8xf32>
    %49 = vector.extract_strided_slice %44 {offsets = [0, 0], sizes = [48, 8], strides = [1, 1]} : vector<48x32xf32> to vector<48x8xf32>
    %50 = vector.extract_strided_slice %45 {offsets = [0, 0], sizes = [48, 8], strides = [1, 1]} : vector<48x32xf32> to vector<48x8xf32>
    %cst_31 = arith.constant dense<0.000000e+00> : vector<48x48xf32>
    %51 = tpu.matmul %48, %49, %cst_31 {dimension_numbers = #tpu.dot_dimension_numbers<[1], [1], [0], [0], [0, 0, 1, 0], [], []>} : vector<48x8xf32>, vector<48x8xf32>, vector<48x48xf32> -> vector<48x48xf32>
    %52 = arith.addf %51, %9 : vector<48x48xf32>
    %cst_32 = arith.constant dense<0xFF800000> : vector<48xf32>
    %53 = vector.multi_reduction <maximumf>, %52, %cst_32 [1] : vector<48x48xf32> to vector<48xf32>
    %54 = vector.shape_cast %53 : vector<48xf32> to vector<48x1xf32>
    %55 = vector.broadcast %54 : vector<48x1xf32> to vector<48x48xf32>
    %56 = arith.subf %52, %55 : vector<48x48xf32>
    %57 = math.exp %56 : vector<48x48xf32>
    %cst_33 = arith.constant dense<0.000000e+00> : vector<48xf32>
    %58 = vector.multi_reduction <add>, %57, %cst_33 [1] : vector<48x48xf32> to vector<48xf32>
    %59 = vector.shape_cast %58 : vector<48xf32> to vector<48x1xf32>
    %cst_34 = arith.constant dense<0.000000e+00> : vector<48x8xf32>
    %60 = tpu.matmul %57, %50, %cst_34 {dimension_numbers = #tpu.dot_dimension_numbers<[1], [0], [0], [1], [0, 0, 1, 1], [], []>} : vector<48x48xf32>, vector<48x8xf32>, vector<48x8xf32> -> vector<48x8xf32>
    %61 = tpu.reciprocal %59 {approx = true} : vector<48x1xf32> -> vector<48x1xf32>
    %62 = vector.broadcast %61 : vector<48x1xf32> to vector<48x8xf32>
    %63 = arith.mulf %60, %62 : vector<48x8xf32>
    %64 = vector.extract_strided_slice %47 {offsets = [0, 0], sizes = [8, 32], strides = [1, 1]} : vector<32x32xf32> to vector<8x32xf32>
    %cst_35 = arith.constant dense<0.000000e+00> : vector<48x32xf32>
    %65 = tpu.matmul %63, %64, %cst_35 {dimension_numbers = #tpu.dot_dimension_numbers<[1], [0], [0], [1], [0, 0, 1, 1], [], []>} : vector<48x8xf32>, vector<8x32xf32>, vector<48x32xf32> -> vector<48x32xf32>
    %66 = vector.extract_strided_slice %43 {offsets = [0, 8], sizes = [48, 8], strides = [1, 1]} : vector<48x32xf32> to vector<48x8xf32>
    %67 = vector.extract_strided_slice %44 {offsets = [0, 8], sizes = [48, 8], strides = [1, 1]} : vector<48x32xf32> to vector<48x8xf32>
    %68 = vector.extract_strided_slice %45 {offsets = [0, 8], sizes = [48, 8], strides = [1, 1]} : vector<48x32xf32> to vector<48x8xf32>
    %cst_36 = arith.constant dense<0.000000e+00> : vector<48x48xf32>
    %69 = tpu.matmul %66, %67, %cst_36 {dimension_numbers = #tpu.dot_dimension_numbers<[1], [1], [0], [0], [0, 0, 1, 0], [], []>} : vector<48x8xf32>, vector<48x8xf32>, vector<48x48xf32> -> vector<48x48xf32>
    %70 = arith.addf %69, %9 : vector<48x48xf32>
    %cst_37 = arith.constant dense<0xFF800000> : vector<48xf32>
    %71 = vector.multi_reduction <maximumf>, %70, %cst_37 [1] : vector<48x48xf32> to vector<48xf32>
    %72 = vector.shape_cast %71 : vector<48xf32> to vector<48x1xf32>
    %73 = vector.broadcast %72 : vector<48x1xf32> to vector<48x48xf32>
    %74 = arith.subf %70, %73 : vector<48x48xf32>
    %75 = math.exp %74 : vector<48x48xf32>
    %cst_38 = arith.constant dense<0.000000e+00> : vector<48xf32>
    %76 = vector.multi_reduction <add>, %75, %cst_38 [1] : vector<48x48xf32> to vector<48xf32>
    %77 = vector.shape_cast %76 : vector<48xf32> to vector<48x1xf32>
    %cst_39 = arith.constant dense<0.000000e+00> : vector<48x8xf32>
    %78 = tpu.matmul %75, %68, %cst_39 {dimension_numbers = #tpu.dot_dimension_numbers<[1], [0], [0], [1], [0, 0, 1, 1], [], []>} : vector<48x48xf32>, vector<48x8xf32>, vector<48x8xf32> -> vector<48x8xf32>
    %79 = tpu.reciprocal %77 {approx = true} : vector<48x1xf32> -> vector<48x1xf32>
    %80 = vector.broadcast %79 : vector<48x1xf32> to vector<48x8xf32>
    %81 = arith.mulf %78, %80 : vector<48x8xf32>
    %82 = vector.extract_strided_slice %47 {offsets = [8, 0], sizes = [8, 32], strides = [1, 1]} : vector<32x32xf32> to vector<8x32xf32>
    %cst_40 = arith.constant dense<0.000000e+00> : vector<48x32xf32>
    %83 = tpu.matmul %81, %82, %cst_40 {dimension_numbers = #tpu.dot_dimension_numbers<[1], [0], [0], [1], [0, 0, 1, 1], [], []>} : vector<48x8xf32>, vector<8x32xf32>, vector<48x32xf32> -> vector<48x32xf32>
    %84 = arith.addf %65, %83 : vector<48x32xf32>
    %85 = vector.extract_strided_slice %43 {offsets = [0, 16], sizes = [48, 8], strides = [1, 1]} : vector<48x32xf32> to vector<48x8xf32>
    %86 = vector.extract_strided_slice %44 {offsets = [0, 16], sizes = [48, 8], strides = [1, 1]} : vector<48x32xf32> to vector<48x8xf32>
    %87 = vector.extract_strided_slice %45 {offsets = [0, 16], sizes = [48, 8], strides = [1, 1]} : vector<48x32xf32> to vector<48x8xf32>
    %cst_41 = arith.constant dense<0.000000e+00> : vector<48x48xf32>
    %88 = tpu.matmul %85, %86, %cst_41 {dimension_numbers = #tpu.dot_dimension_numbers<[1], [1], [0], [0], [0, 0, 1, 0], [], []>} : vector<48x8xf32>, vector<48x8xf32>, vector<48x48xf32> -> vector<48x48xf32>
    %89 = arith.addf %88, %9 : vector<48x48xf32>
    %cst_42 = arith.constant dense<0xFF800000> : vector<48xf32>
    %90 = vector.multi_reduction <maximumf>, %89, %cst_42 [1] : vector<48x48xf32> to vector<48xf32>
    %91 = vector.shape_cast %90 : vector<48xf32> to vector<48x1xf32>
    %92 = vector.broadcast %91 : vector<48x1xf32> to vector<48x48xf32>
    %93 = arith.subf %89, %92 : vector<48x48xf32>
    %94 = math.exp %93 : vector<48x48xf32>
    %cst_43 = arith.constant dense<0.000000e+00> : vector<48xf32>
    %95 = vector.multi_reduction <add>, %94, %cst_43 [1] : vector<48x48xf32> to vector<48xf32>
    %96 = vector.shape_cast %95 : vector<48xf32> to vector<48x1xf32>
    %cst_44 = arith.constant dense<0.000000e+00> : vector<48x8xf32>
    %97 = tpu.matmul %94, %87, %cst_44 {dimension_numbers = #tpu.dot_dimension_numbers<[1], [0], [0], [1], [0, 0, 1, 1], [], []>} : vector<48x48xf32>, vector<48x8xf32>, vector<48x8xf32> -> vector<48x8xf32>
    %98 = tpu.reciprocal %96 {approx = true} : vector<48x1xf32> -> vector<48x1xf32>
    %99 = vector.broadcast %98 : vector<48x1xf32> to vector<48x8xf32>
    %100 = arith.mulf %97, %99 : vector<48x8xf32>
    %101 = vector.extract_strided_slice %47 {offsets = [16, 0], sizes = [8, 32], strides = [1, 1]} : vector<32x32xf32> to vector<8x32xf32>
    %cst_45 = arith.constant dense<0.000000e+00> : vector<48x32xf32>
    %102 = tpu.matmul %100, %101, %cst_45 {dimension_numbers = #tpu.dot_dimension_numbers<[1], [0], [0], [1], [0, 0, 1, 1], [], []>} : vector<48x8xf32>, vector<8x32xf32>, vector<48x32xf32> -> vector<48x32xf32>
    %103 = arith.addf %84, %102 : vector<48x32xf32>
    %104 = vector.extract_strided_slice %43 {offsets = [0, 24], sizes = [48, 8], strides = [1, 1]} : vector<48x32xf32> to vector<48x8xf32>
    %105 = vector.extract_strided_slice %44 {offsets = [0, 24], sizes = [48, 8], strides = [1, 1]} : vector<48x32xf32> to vector<48x8xf32>
    %106 = vector.extract_strided_slice %45 {offsets = [0, 24], sizes = [48, 8], strides = [1, 1]} : vector<48x32xf32> to vector<48x8xf32>
    %cst_46 = arith.constant dense<0.000000e+00> : vector<48x48xf32>
    %107 = tpu.matmul %104, %105, %cst_46 {dimension_numbers = #tpu.dot_dimension_numbers<[1], [1], [0], [0], [0, 0, 1, 0], [], []>} : vector<48x8xf32>, vector<48x8xf32>, vector<48x48xf32> -> vector<48x48xf32>
    %108 = arith.addf %107, %9 : vector<48x48xf32>
    %cst_47 = arith.constant dense<0xFF800000> : vector<48xf32>
    %109 = vector.multi_reduction <maximumf>, %108, %cst_47 [1] : vector<48x48xf32> to vector<48xf32>
    %110 = vector.shape_cast %109 : vector<48xf32> to vector<48x1xf32>
    %111 = vector.broadcast %110 : vector<48x1xf32> to vector<48x48xf32>
    %112 = arith.subf %108, %111 : vector<48x48xf32>
    %113 = math.exp %112 : vector<48x48xf32>
    %cst_48 = arith.constant dense<0.000000e+00> : vector<48xf32>
    %114 = vector.multi_reduction <add>, %113, %cst_48 [1] : vector<48x48xf32> to vector<48xf32>
    %115 = vector.shape_cast %114 : vector<48xf32> to vector<48x1xf32>
    %cst_49 = arith.constant dense<0.000000e+00> : vector<48x8xf32>
    %116 = tpu.matmul %113, %106, %cst_49 {dimension_numbers = #tpu.dot_dimension_numbers<[1], [0], [0], [1], [0, 0, 1, 1], [], []>} : vector<48x48xf32>, vector<48x8xf32>, vector<48x8xf32> -> vector<48x8xf32>
    %117 = tpu.reciprocal %115 {approx = true} : vector<48x1xf32> -> vector<48x1xf32>
    %118 = vector.broadcast %117 : vector<48x1xf32> to vector<48x8xf32>
    %119 = arith.mulf %116, %118 : vector<48x8xf32>
    %120 = vector.extract_strided_slice %47 {offsets = [24, 0], sizes = [8, 32], strides = [1, 1]} : vector<32x32xf32> to vector<8x32xf32>
    %cst_50 = arith.constant dense<0.000000e+00> : vector<48x32xf32>
    %121 = tpu.matmul %119, %120, %cst_50 {dimension_numbers = #tpu.dot_dimension_numbers<[1], [0], [0], [1], [0, 0, 1, 1], [], []>} : vector<48x8xf32>, vector<8x32xf32>, vector<48x32xf32> -> vector<48x32xf32>
    %122 = arith.addf %103, %121 : vector<48x32xf32>
    %123 = arith.addf %8, %122 : vector<48x32xf32>
    %c0_51 = arith.constant 0 : index
    %c0_52 = arith.constant 0 : index
    %c0_53 = arith.constant 0 : index
    %124 = vector.load %arg10[%c0_51, %c0_52, %c0_53] : memref<2x1x32xf32, #tpu.memory_space<vmem>>, vector<1x1x32xf32>
    %125 = vector.shape_cast %124 : vector<1x1x32xf32> to vector<1x32xf32>
    %126 = vector.broadcast %125 : vector<1x32xf32> to vector<48x32xf32>
    %127 = arith.addf %123, %126 : vector<48x32xf32>
    %c0_54 = arith.constant 0 : index
    %c0_55 = arith.constant 0 : index
    %c0_56 = arith.constant 0 : index
    %128 = vector.load %arg11[%c0_54, %c0_55, %c0_56] : memref<2x1x32xf32, #tpu.memory_space<vmem>>, vector<1x1x32xf32>
    %129 = vector.shape_cast %128 : vector<1x1x32xf32> to vector<1x32xf32>
    %c0_57 = arith.constant 0 : index
    %c0_58 = arith.constant 0 : index
    %c0_59 = arith.constant 0 : index
    %130 = vector.load %arg12[%c0_57, %c0_58, %c0_59] : memref<2x1x32xf32, #tpu.memory_space<vmem>>, vector<1x1x32xf32>
    %131 = vector.shape_cast %130 : vector<1x1x32xf32> to vector<1x32xf32>
    %cst_60 = arith.constant dense<0.000000e+00> : vector<48xf32>
    %132 = vector.multi_reduction <add>, %127, %cst_60 [1] : vector<48x32xf32> to vector<48xf32>
    %133 = vector.shape_cast %132 : vector<48xf32> to vector<48x1xf32>
    %cst_61 = arith.constant 3.200000e+01 : f32
    %134 = vector.broadcast %cst_61 : f32 to vector<48x1xf32>
    %135 = arith.divf %133, %134 : vector<48x1xf32>
    %136 = vector.broadcast %135 : vector<48x1xf32> to vector<48x32xf32>
    %137 = arith.subf %127, %136 : vector<48x32xf32>
    %138 = arith.mulf %137, %137 : vector<48x32xf32>
    %cst_62 = arith.constant dense<0.000000e+00> : vector<48xf32>
    %139 = vector.multi_reduction <add>, %138, %cst_62 [1] : vector<48x32xf32> to vector<48xf32>
    %140 = vector.shape_cast %139 : vector<48xf32> to vector<48x1xf32>
    %cst_63 = arith.constant 3.200000e+01 : f32
    %141 = vector.broadcast %cst_63 : f32 to vector<48x1xf32>
    %142 = arith.divf %140, %141 : vector<48x1xf32>
    %143 = vector.broadcast %135 : vector<48x1xf32> to vector<48x32xf32>
    %144 = arith.subf %127, %143 : vector<48x32xf32>
    %cst_64 = arith.constant 9.99999996E-13 : f32
    %145 = vector.broadcast %cst_64 : f32 to vector<48x1xf32>
    %146 = arith.addf %142, %145 : vector<48x1xf32>
    %147 = math.rsqrt %146 : vector<48x1xf32>
    %148 = vector.broadcast %147 : vector<48x1xf32> to vector<48x32xf32>
    %149 = arith.mulf %144, %148 : vector<48x32xf32>
    %150 = vector.broadcast %129 : vector<1x32xf32> to vector<48x32xf32>
    %151 = arith.mulf %149, %150 : vector<48x32xf32>
    %152 = vector.broadcast %131 : vector<1x32xf32> to vector<48x32xf32>
    %153 = arith.addf %151, %152 : vector<48x32xf32>
    %c0_65 = arith.constant 0 : index
    %c0_66 = arith.constant 0 : index
    %c0_67 = arith.constant 0 : index
    %154 = vector.load %arg13[%c0_65, %c0_66, %c0_67] : memref<2x32x64xf32, #tpu.memory_space<vmem>>, vector<1x32x64xf32>
    %155 = vector.shape_cast %154 : vector<1x32x64xf32> to vector<32x64xf32>
    %cst_68 = arith.constant dense<0.000000e+00> : vector<48x64xf32>
    %156 = tpu.matmul %153, %155, %cst_68 {dimension_numbers = #tpu.dot_dimension_numbers<[1], [0], [0], [1], [0, 0, 1, 1], [], []>} : vector<48x32xf32>, vector<32x64xf32>, vector<48x64xf32> -> vector<48x64xf32>
    %c0_69 = arith.constant 0 : index
    %c0_70 = arith.constant 0 : index
    %c0_71 = arith.constant 0 : index
    %157 = vector.load %arg14[%c0_69, %c0_70, %c0_71] : memref<2x1x64xf32, #tpu.memory_space<vmem>>, vector<1x1x64xf32>
    %158 = vector.shape_cast %157 : vector<1x1x64xf32> to vector<1x64xf32>
    %159 = vector.broadcast %158 : vector<1x64xf32> to vector<48x64xf32>
    %160 = arith.addf %156, %159 : vector<48x64xf32>
    %cst_72 = arith.constant 5.000000e-01 : f32
    %161 = vector.broadcast %cst_72 : f32 to vector<48x64xf32>
    %162 = arith.mulf %161, %160 : vector<48x64xf32>
    %163 = arith.mulf %160, %160 : vector<48x64xf32>
    %164 = arith.mulf %163, %160 : vector<48x64xf32>
    %cst_73 = arith.constant 4.471500e-02 : f32
    %165 = vector.broadcast %cst_73 : f32 to vector<48x64xf32>
    %166 = arith.mulf %165, %164 : vector<48x64xf32>
    %167 = arith.addf %160, %166 : vector<48x64xf32>
    %cst_74 = arith.constant 0.797884583 : f32
    %168 = vector.broadcast %cst_74 : f32 to vector<48x64xf32>
    %169 = arith.mulf %168, %167 : vector<48x64xf32>
    %170 = math.tanh %169 : vector<48x64xf32>
    %cst_75 = arith.constant 1.000000e+00 : f32
    %171 = vector.broadcast %cst_75 : f32 to vector<48x64xf32>
    %172 = arith.addf %171, %170 : vector<48x64xf32>
    %173 = arith.mulf %162, %172 : vector<48x64xf32>
    %c0_76 = arith.constant 0 : index
    %c0_77 = arith.constant 0 : index
    %c0_78 = arith.constant 0 : index
    %174 = vector.load %arg15[%c0_76, %c0_77, %c0_78] : memref<2x64x32xf32, #tpu.memory_space<vmem>>, vector<1x64x32xf32>
    %175 = vector.shape_cast %174 : vector<1x64x32xf32> to vector<64x32xf32>
    %cst_79 = arith.constant dense<0.000000e+00> : vector<48x32xf32>
    %176 = tpu.matmul %173, %175, %cst_79 {dimension_numbers = #tpu.dot_dimension_numbers<[1], [0], [0], [1], [0, 0, 1, 1], [], []>} : vector<48x64xf32>, vector<64x32xf32>, vector<48x32xf32> -> vector<48x32xf32>
    %c0_80 = arith.constant 0 : index
    %c0_81 = arith.constant 0 : index
    %c0_82 = arith.constant 0 : index
    %177 = vector.load %arg16[%c0_80, %c0_81, %c0_82] : memref<2x1x32xf32, #tpu.memory_space<vmem>>, vector<1x1x32xf32>
    %178 = vector.shape_cast %177 : vector<1x1x32xf32> to vector<1x32xf32>
    %179 = vector.broadcast %178 : vector<1x32xf32> to vector<48x32xf32>
    %180 = arith.addf %176, %179 : vector<48x32xf32>
    %181 = arith.addf %127, %180 : vector<48x32xf32>
    %c1_83 = arith.constant 1 : index
    %c0_84 = arith.constant 0 : index
    %c0_85 = arith.constant 0 : index
    %182 = vector.load %arg5[%c1_83, %c0_84, %c0_85] : memref<2x1x32xf32, #tpu.memory_space<vmem>>, vector<1x1x32xf32>
    %183 = vector.shape_cast %182 : vector<1x1x32xf32> to vector<1x32xf32>
    %c1_86 = arith.constant 1 : index
    %c0_87 = arith.constant 0 : index
    %c0_88 = arith.constant 0 : index
    %184 = vector.load %arg6[%c1_86, %c0_87, %c0_88] : memref<2x1x32xf32, #tpu.memory_space<vmem>>, vector<1x1x32xf32>
    %185 = vector.shape_cast %184 : vector<1x1x32xf32> to vector<1x32xf32>
    %cst_89 = arith.constant dense<0.000000e+00> : vector<48xf32>
    %186 = vector.multi_reduction <add>, %181, %cst_89 [1] : vector<48x32xf32> to vector<48xf32>
    %187 = vector.shape_cast %186 : vector<48xf32> to vector<48x1xf32>
    %cst_90 = arith.constant 3.200000e+01 : f32
    %188 = vector.broadcast %cst_90 : f32 to vector<48x1xf32>
    %189 = arith.divf %187, %188 : vector<48x1xf32>
    %190 = vector.broadcast %189 : vector<48x1xf32> to vector<48x32xf32>
    %191 = arith.subf %181, %190 : vector<48x32xf32>
    %192 = arith.mulf %191, %191 : vector<48x32xf32>
    %cst_91 = arith.constant dense<0.000000e+00> : vector<48xf32>
    %193 = vector.multi_reduction <add>, %192, %cst_91 [1] : vector<48x32xf32> to vector<48xf32>
    %194 = vector.shape_cast %193 : vector<48xf32> to vector<48x1xf32>
    %cst_92 = arith.constant 3.200000e+01 : f32
    %195 = vector.broadcast %cst_92 : f32 to vector<48x1xf32>
    %196 = arith.divf %194, %195 : vector<48x1xf32>
    %197 = vector.broadcast %189 : vector<48x1xf32> to vector<48x32xf32>
    %198 = arith.subf %181, %197 : vector<48x32xf32>
    %cst_93 = arith.constant 9.99999996E-13 : f32
    %199 = vector.broadcast %cst_93 : f32 to vector<48x1xf32>
    %200 = arith.addf %196, %199 : vector<48x1xf32>
    %201 = math.rsqrt %200 : vector<48x1xf32>
    %202 = vector.broadcast %201 : vector<48x1xf32> to vector<48x32xf32>
    %203 = arith.mulf %198, %202 : vector<48x32xf32>
    %204 = vector.broadcast %183 : vector<1x32xf32> to vector<48x32xf32>
    %205 = arith.mulf %203, %204 : vector<48x32xf32>
    %206 = vector.broadcast %185 : vector<1x32xf32> to vector<48x32xf32>
    %207 = arith.addf %205, %206 : vector<48x32xf32>
    %c1_94 = arith.constant 1 : index
    %c0_95 = arith.constant 0 : index
    %c0_96 = arith.constant 0 : index
    %208 = vector.load %arg7[%c1_94, %c0_95, %c0_96] : memref<2x32x96xf32, #tpu.memory_space<vmem>>, vector<1x32x96xf32>
    %209 = vector.shape_cast %208 : vector<1x32x96xf32> to vector<32x96xf32>
    %cst_97 = arith.constant dense<0.000000e+00> : vector<48x96xf32>
    %210 = tpu.matmul %207, %209, %cst_97 {dimension_numbers = #tpu.dot_dimension_numbers<[1], [0], [0], [1], [0, 0, 1, 1], [], []>} : vector<48x32xf32>, vector<32x96xf32>, vector<48x96xf32> -> vector<48x96xf32>
    %c1_98 = arith.constant 1 : index
    %c0_99 = arith.constant 0 : index
    %c0_100 = arith.constant 0 : index
    %211 = vector.load %arg8[%c1_98, %c0_99, %c0_100] : memref<2x1x96xf32, #tpu.memory_space<vmem>>, vector<1x1x96xf32>
    %212 = vector.shape_cast %211 : vector<1x1x96xf32> to vector<1x96xf32>
    %213 = vector.broadcast %212 : vector<1x96xf32> to vector<48x96xf32>
    %214 = arith.addf %210, %213 : vector<48x96xf32>
    %215 = vector.extract_strided_slice %214 {offsets = [0, 0], sizes = [48, 32], strides = [1, 1]} : vector<48x96xf32> to vector<48x32xf32>
    %216 = vector.extract_strided_slice %214 {offsets = [0, 32], sizes = [48, 32], strides = [1, 1]} : vector<48x96xf32> to vector<48x32xf32>
    %217 = vector.extract_strided_slice %214 {offsets = [0, 64], sizes = [48, 32], strides = [1, 1]} : vector<48x96xf32> to vector<48x32xf32>
    %c1_101 = arith.constant 1 : index
    %c0_102 = arith.constant 0 : index
    %c0_103 = arith.constant 0 : index
    %218 = vector.load %arg9[%c1_101, %c0_102, %c0_103] : memref<2x32x32xf32, #tpu.memory_space<vmem>>, vector<1x32x32xf32>
    %219 = vector.shape_cast %218 : vector<1x32x32xf32> to vector<32x32xf32>
    %220 = vector.extract_strided_slice %215 {offsets = [0, 0], sizes = [48, 8], strides = [1, 1]} : vector<48x32xf32> to vector<48x8xf32>
    %221 = vector.extract_strided_slice %216 {offsets = [0, 0], sizes = [48, 8], strides = [1, 1]} : vector<48x32xf32> to vector<48x8xf32>
    %222 = vector.extract_strided_slice %217 {offsets = [0, 0], sizes = [48, 8], strides = [1, 1]} : vector<48x32xf32> to vector<48x8xf32>
    %cst_104 = arith.constant dense<0.000000e+00> : vector<48x48xf32>
    %223 = tpu.matmul %220, %221, %cst_104 {dimension_numbers = #tpu.dot_dimension_numbers<[1], [1], [0], [0], [0, 0, 1, 0], [], []>} : vector<48x8xf32>, vector<48x8xf32>, vector<48x48xf32> -> vector<48x48xf32>
    %224 = arith.addf %223, %9 : vector<48x48xf32>
    %cst_105 = arith.constant dense<0xFF800000> : vector<48xf32>
    %225 = vector.multi_reduction <maximumf>, %224, %cst_105 [1] : vector<48x48xf32> to vector<48xf32>
    %226 = vector.shape_cast %225 : vector<48xf32> to vector<48x1xf32>
    %227 = vector.broadcast %226 : vector<48x1xf32> to vector<48x48xf32>
    %228 = arith.subf %224, %227 : vector<48x48xf32>
    %229 = math.exp %228 : vector<48x48xf32>
    %cst_106 = arith.constant dense<0.000000e+00> : vector<48xf32>
    %230 = vector.multi_reduction <add>, %229, %cst_106 [1] : vector<48x48xf32> to vector<48xf32>
    %231 = vector.shape_cast %230 : vector<48xf32> to vector<48x1xf32>
    %cst_107 = arith.constant dense<0.000000e+00> : vector<48x8xf32>
    %232 = tpu.matmul %229, %222, %cst_107 {dimension_numbers = #tpu.dot_dimension_numbers<[1], [0], [0], [1], [0, 0, 1, 1], [], []>} : vector<48x48xf32>, vector<48x8xf32>, vector<48x8xf32> -> vector<48x8xf32>
    %233 = tpu.reciprocal %231 {approx = true} : vector<48x1xf32> -> vector<48x1xf32>
    %234 = vector.broadcast %233 : vector<48x1xf32> to vector<48x8xf32>
    %235 = arith.mulf %232, %234 : vector<48x8xf32>
    %236 = vector.extract_strided_slice %219 {offsets = [0, 0], sizes = [8, 32], strides = [1, 1]} : vector<32x32xf32> to vector<8x32xf32>
    %cst_108 = arith.constant dense<0.000000e+00> : vector<48x32xf32>
    %237 = tpu.matmul %235, %236, %cst_108 {dimension_numbers = #tpu.dot_dimension_numbers<[1], [0], [0], [1], [0, 0, 1, 1], [], []>} : vector<48x8xf32>, vector<8x32xf32>, vector<48x32xf32> -> vector<48x32xf32>
    %238 = vector.extract_strided_slice %215 {offsets = [0, 8], sizes = [48, 8], strides = [1, 1]} : vector<48x32xf32> to vector<48x8xf32>
    %239 = vector.extract_strided_slice %216 {offsets = [0, 8], sizes = [48, 8], strides = [1, 1]} : vector<48x32xf32> to vector<48x8xf32>
    %240 = vector.extract_strided_slice %217 {offsets = [0, 8], sizes = [48, 8], strides = [1, 1]} : vector<48x32xf32> to vector<48x8xf32>
    %cst_109 = arith.constant dense<0.000000e+00> : vector<48x48xf32>
    %241 = tpu.matmul %238, %239, %cst_109 {dimension_numbers = #tpu.dot_dimension_numbers<[1], [1], [0], [0], [0, 0, 1, 0], [], []>} : vector<48x8xf32>, vector<48x8xf32>, vector<48x48xf32> -> vector<48x48xf32>
    %242 = arith.addf %241, %9 : vector<48x48xf32>
    %cst_110 = arith.constant dense<0xFF800000> : vector<48xf32>
    %243 = vector.multi_reduction <maximumf>, %242, %cst_110 [1] : vector<48x48xf32> to vector<48xf32>
    %244 = vector.shape_cast %243 : vector<48xf32> to vector<48x1xf32>
    %245 = vector.broadcast %244 : vector<48x1xf32> to vector<48x48xf32>
    %246 = arith.subf %242, %245 : vector<48x48xf32>
    %247 = math.exp %246 : vector<48x48xf32>
    %cst_111 = arith.constant dense<0.000000e+00> : vector<48xf32>
    %248 = vector.multi_reduction <add>, %247, %cst_111 [1] : vector<48x48xf32> to vector<48xf32>
    %249 = vector.shape_cast %248 : vector<48xf32> to vector<48x1xf32>
    %cst_112 = arith.constant dense<0.000000e+00> : vector<48x8xf32>
    %250 = tpu.matmul %247, %240, %cst_112 {dimension_numbers = #tpu.dot_dimension_numbers<[1], [0], [0], [1], [0, 0, 1, 1], [], []>} : vector<48x48xf32>, vector<48x8xf32>, vector<48x8xf32> -> vector<48x8xf32>
    %251 = tpu.reciprocal %249 {approx = true} : vector<48x1xf32> -> vector<48x1xf32>
    %252 = vector.broadcast %251 : vector<48x1xf32> to vector<48x8xf32>
    %253 = arith.mulf %250, %252 : vector<48x8xf32>
    %254 = vector.extract_strided_slice %219 {offsets = [8, 0], sizes = [8, 32], strides = [1, 1]} : vector<32x32xf32> to vector<8x32xf32>
    %cst_113 = arith.constant dense<0.000000e+00> : vector<48x32xf32>
    %255 = tpu.matmul %253, %254, %cst_113 {dimension_numbers = #tpu.dot_dimension_numbers<[1], [0], [0], [1], [0, 0, 1, 1], [], []>} : vector<48x8xf32>, vector<8x32xf32>, vector<48x32xf32> -> vector<48x32xf32>
    %256 = arith.addf %237, %255 : vector<48x32xf32>
    %257 = vector.extract_strided_slice %215 {offsets = [0, 16], sizes = [48, 8], strides = [1, 1]} : vector<48x32xf32> to vector<48x8xf32>
    %258 = vector.extract_strided_slice %216 {offsets = [0, 16], sizes = [48, 8], strides = [1, 1]} : vector<48x32xf32> to vector<48x8xf32>
    %259 = vector.extract_strided_slice %217 {offsets = [0, 16], sizes = [48, 8], strides = [1, 1]} : vector<48x32xf32> to vector<48x8xf32>
    %cst_114 = arith.constant dense<0.000000e+00> : vector<48x48xf32>
    %260 = tpu.matmul %257, %258, %cst_114 {dimension_numbers = #tpu.dot_dimension_numbers<[1], [1], [0], [0], [0, 0, 1, 0], [], []>} : vector<48x8xf32>, vector<48x8xf32>, vector<48x48xf32> -> vector<48x48xf32>
    %261 = arith.addf %260, %9 : vector<48x48xf32>
    %cst_115 = arith.constant dense<0xFF800000> : vector<48xf32>
    %262 = vector.multi_reduction <maximumf>, %261, %cst_115 [1] : vector<48x48xf32> to vector<48xf32>
    %263 = vector.shape_cast %262 : vector<48xf32> to vector<48x1xf32>
    %264 = vector.broadcast %263 : vector<48x1xf32> to vector<48x48xf32>
    %265 = arith.subf %261, %264 : vector<48x48xf32>
    %266 = math.exp %265 : vector<48x48xf32>
    %cst_116 = arith.constant dense<0.000000e+00> : vector<48xf32>
    %267 = vector.multi_reduction <add>, %266, %cst_116 [1] : vector<48x48xf32> to vector<48xf32>
    %268 = vector.shape_cast %267 : vector<48xf32> to vector<48x1xf32>
    %cst_117 = arith.constant dense<0.000000e+00> : vector<48x8xf32>
    %269 = tpu.matmul %266, %259, %cst_117 {dimension_numbers = #tpu.dot_dimension_numbers<[1], [0], [0], [1], [0, 0, 1, 1], [], []>} : vector<48x48xf32>, vector<48x8xf32>, vector<48x8xf32> -> vector<48x8xf32>
    %270 = tpu.reciprocal %268 {approx = true} : vector<48x1xf32> -> vector<48x1xf32>
    %271 = vector.broadcast %270 : vector<48x1xf32> to vector<48x8xf32>
    %272 = arith.mulf %269, %271 : vector<48x8xf32>
    %273 = vector.extract_strided_slice %219 {offsets = [16, 0], sizes = [8, 32], strides = [1, 1]} : vector<32x32xf32> to vector<8x32xf32>
    %cst_118 = arith.constant dense<0.000000e+00> : vector<48x32xf32>
    %274 = tpu.matmul %272, %273, %cst_118 {dimension_numbers = #tpu.dot_dimension_numbers<[1], [0], [0], [1], [0, 0, 1, 1], [], []>} : vector<48x8xf32>, vector<8x32xf32>, vector<48x32xf32> -> vector<48x32xf32>
    %275 = arith.addf %256, %274 : vector<48x32xf32>
    %276 = vector.extract_strided_slice %215 {offsets = [0, 24], sizes = [48, 8], strides = [1, 1]} : vector<48x32xf32> to vector<48x8xf32>
    %277 = vector.extract_strided_slice %216 {offsets = [0, 24], sizes = [48, 8], strides = [1, 1]} : vector<48x32xf32> to vector<48x8xf32>
    %278 = vector.extract_strided_slice %217 {offsets = [0, 24], sizes = [48, 8], strides = [1, 1]} : vector<48x32xf32> to vector<48x8xf32>
    %cst_119 = arith.constant dense<0.000000e+00> : vector<48x48xf32>
    %279 = tpu.matmul %276, %277, %cst_119 {dimension_numbers = #tpu.dot_dimension_numbers<[1], [1], [0], [0], [0, 0, 1, 0], [], []>} : vector<48x8xf32>, vector<48x8xf32>, vector<48x48xf32> -> vector<48x48xf32>
    %280 = arith.addf %279, %9 : vector<48x48xf32>
    %cst_120 = arith.constant dense<0xFF800000> : vector<48xf32>
    %281 = vector.multi_reduction <maximumf>, %280, %cst_120 [1] : vector<48x48xf32> to vector<48xf32>
    %282 = vector.shape_cast %281 : vector<48xf32> to vector<48x1xf32>
    %283 = vector.broadcast %282 : vector<48x1xf32> to vector<48x48xf32>
    %284 = arith.subf %280, %283 : vector<48x48xf32>
    %285 = math.exp %284 : vector<48x48xf32>
    %cst_121 = arith.constant dense<0.000000e+00> : vector<48xf32>
    %286 = vector.multi_reduction <add>, %285, %cst_121 [1] : vector<48x48xf32> to vector<48xf32>
    %287 = vector.shape_cast %286 : vector<48xf32> to vector<48x1xf32>
    %cst_122 = arith.constant dense<0.000000e+00> : vector<48x8xf32>
    %288 = tpu.matmul %285, %278, %cst_122 {dimension_numbers = #tpu.dot_dimension_numbers<[1], [0], [0], [1], [0, 0, 1, 1], [], []>} : vector<48x48xf32>, vector<48x8xf32>, vector<48x8xf32> -> vector<48x8xf32>
    %289 = tpu.reciprocal %287 {approx = true} : vector<48x1xf32> -> vector<48x1xf32>
    %290 = vector.broadcast %289 : vector<48x1xf32> to vector<48x8xf32>
    %291 = arith.mulf %288, %290 : vector<48x8xf32>
    %292 = vector.extract_strided_slice %219 {offsets = [24, 0], sizes = [8, 32], strides = [1, 1]} : vector<32x32xf32> to vector<8x32xf32>
    %cst_123 = arith.constant dense<0.000000e+00> : vector<48x32xf32>
    %293 = tpu.matmul %291, %292, %cst_123 {dimension_numbers = #tpu.dot_dimension_numbers<[1], [0], [0], [1], [0, 0, 1, 1], [], []>} : vector<48x8xf32>, vector<8x32xf32>, vector<48x32xf32> -> vector<48x32xf32>
    %294 = arith.addf %275, %293 : vector<48x32xf32>
    %295 = arith.addf %181, %294 : vector<48x32xf32>
    %c1_124 = arith.constant 1 : index
    %c0_125 = arith.constant 0 : index
    %c0_126 = arith.constant 0 : index
    %296 = vector.load %arg10[%c1_124, %c0_125, %c0_126] : memref<2x1x32xf32, #tpu.memory_space<vmem>>, vector<1x1x32xf32>
    %297 = vector.shape_cast %296 : vector<1x1x32xf32> to vector<1x32xf32>
    %298 = vector.broadcast %297 : vector<1x32xf32> to vector<48x32xf32>
    %299 = arith.addf %295, %298 : vector<48x32xf32>
    %c1_127 = arith.constant 1 : index
    %c0_128 = arith.constant 0 : index
    %c0_129 = arith.constant 0 : index
    %300 = vector.load %arg11[%c1_127, %c0_128, %c0_129] : memref<2x1x32xf32, #tpu.memory_space<vmem>>, vector<1x1x32xf32>
    %301 = vector.shape_cast %300 : vector<1x1x32xf32> to vector<1x32xf32>
    %c1_130 = arith.constant 1 : index
    %c0_131 = arith.constant 0 : index
    %c0_132 = arith.constant 0 : index
    %302 = vector.load %arg12[%c1_130, %c0_131, %c0_132] : memref<2x1x32xf32, #tpu.memory_space<vmem>>, vector<1x1x32xf32>
    %303 = vector.shape_cast %302 : vector<1x1x32xf32> to vector<1x32xf32>
    %cst_133 = arith.constant dense<0.000000e+00> : vector<48xf32>
    %304 = vector.multi_reduction <add>, %299, %cst_133 [1] : vector<48x32xf32> to vector<48xf32>
    %305 = vector.shape_cast %304 : vector<48xf32> to vector<48x1xf32>
    %cst_134 = arith.constant 3.200000e+01 : f32
    %306 = vector.broadcast %cst_134 : f32 to vector<48x1xf32>
    %307 = arith.divf %305, %306 : vector<48x1xf32>
    %308 = vector.broadcast %307 : vector<48x1xf32> to vector<48x32xf32>
    %309 = arith.subf %299, %308 : vector<48x32xf32>
    %310 = arith.mulf %309, %309 : vector<48x32xf32>
    %cst_135 = arith.constant dense<0.000000e+00> : vector<48xf32>
    %311 = vector.multi_reduction <add>, %310, %cst_135 [1] : vector<48x32xf32> to vector<48xf32>
    %312 = vector.shape_cast %311 : vector<48xf32> to vector<48x1xf32>
    %cst_136 = arith.constant 3.200000e+01 : f32
    %313 = vector.broadcast %cst_136 : f32 to vector<48x1xf32>
    %314 = arith.divf %312, %313 : vector<48x1xf32>
    %315 = vector.broadcast %307 : vector<48x1xf32> to vector<48x32xf32>
    %316 = arith.subf %299, %315 : vector<48x32xf32>
    %cst_137 = arith.constant 9.99999996E-13 : f32
    %317 = vector.broadcast %cst_137 : f32 to vector<48x1xf32>
    %318 = arith.addf %314, %317 : vector<48x1xf32>
    %319 = math.rsqrt %318 : vector<48x1xf32>
    %320 = vector.broadcast %319 : vector<48x1xf32> to vector<48x32xf32>
    %321 = arith.mulf %316, %320 : vector<48x32xf32>
    %322 = vector.broadcast %301 : vector<1x32xf32> to vector<48x32xf32>
    %323 = arith.mulf %321, %322 : vector<48x32xf32>
    %324 = vector.broadcast %303 : vector<1x32xf32> to vector<48x32xf32>
    %325 = arith.addf %323, %324 : vector<48x32xf32>
    %c1_138 = arith.constant 1 : index
    %c0_139 = arith.constant 0 : index
    %c0_140 = arith.constant 0 : index
    %326 = vector.load %arg13[%c1_138, %c0_139, %c0_140] : memref<2x32x64xf32, #tpu.memory_space<vmem>>, vector<1x32x64xf32>
    %327 = vector.shape_cast %326 : vector<1x32x64xf32> to vector<32x64xf32>
    %cst_141 = arith.constant dense<0.000000e+00> : vector<48x64xf32>
    %328 = tpu.matmul %325, %327, %cst_141 {dimension_numbers = #tpu.dot_dimension_numbers<[1], [0], [0], [1], [0, 0, 1, 1], [], []>} : vector<48x32xf32>, vector<32x64xf32>, vector<48x64xf32> -> vector<48x64xf32>
    %c1_142 = arith.constant 1 : index
    %c0_143 = arith.constant 0 : index
    %c0_144 = arith.constant 0 : index
    %329 = vector.load %arg14[%c1_142, %c0_143, %c0_144] : memref<2x1x64xf32, #tpu.memory_space<vmem>>, vector<1x1x64xf32>
    %330 = vector.shape_cast %329 : vector<1x1x64xf32> to vector<1x64xf32>
    %331 = vector.broadcast %330 : vector<1x64xf32> to vector<48x64xf32>
    %332 = arith.addf %328, %331 : vector<48x64xf32>
    %cst_145 = arith.constant 5.000000e-01 : f32
    %333 = vector.broadcast %cst_145 : f32 to vector<48x64xf32>
    %334 = arith.mulf %333, %332 : vector<48x64xf32>
    %335 = arith.mulf %332, %332 : vector<48x64xf32>
    %336 = arith.mulf %335, %332 : vector<48x64xf32>
    %cst_146 = arith.constant 4.471500e-02 : f32
    %337 = vector.broadcast %cst_146 : f32 to vector<48x64xf32>
    %338 = arith.mulf %337, %336 : vector<48x64xf32>
    %339 = arith.addf %332, %338 : vector<48x64xf32>
    %cst_147 = arith.constant 0.797884583 : f32
    %340 = vector.broadcast %cst_147 : f32 to vector<48x64xf32>
    %341 = arith.mulf %340, %339 : vector<48x64xf32>
    %342 = math.tanh %341 : vector<48x64xf32>
    %cst_148 = arith.constant 1.000000e+00 : f32
    %343 = vector.broadcast %cst_148 : f32 to vector<48x64xf32>
    %344 = arith.addf %343, %342 : vector<48x64xf32>
    %345 = arith.mulf %334, %344 : vector<48x64xf32>
    %c1_149 = arith.constant 1 : index
    %c0_150 = arith.constant 0 : index
    %c0_151 = arith.constant 0 : index
    %346 = vector.load %arg15[%c1_149, %c0_150, %c0_151] : memref<2x64x32xf32, #tpu.memory_space<vmem>>, vector<1x64x32xf32>
    %347 = vector.shape_cast %346 : vector<1x64x32xf32> to vector<64x32xf32>
    %cst_152 = arith.constant dense<0.000000e+00> : vector<48x32xf32>
    %348 = tpu.matmul %345, %347, %cst_152 {dimension_numbers = #tpu.dot_dimension_numbers<[1], [0], [0], [1], [0, 0, 1, 1], [], []>} : vector<48x64xf32>, vector<64x32xf32>, vector<48x32xf32> -> vector<48x32xf32>
    %c1_153 = arith.constant 1 : index
    %c0_154 = arith.constant 0 : index
    %c0_155 = arith.constant 0 : index
    %349 = vector.load %arg16[%c1_153, %c0_154, %c0_155] : memref<2x1x32xf32, #tpu.memory_space<vmem>>, vector<1x1x32xf32>
    %350 = vector.shape_cast %349 : vector<1x1x32xf32> to vector<1x32xf32>
    %351 = vector.broadcast %350 : vector<1x32xf32> to vector<48x32xf32>
    %352 = arith.addf %348, %351 : vector<48x32xf32>
    %353 = arith.addf %299, %352 : vector<48x32xf32>
    %354 = vector.extract_strided_slice %353 {offsets = [0, 0], sizes = [1, 32], strides = [1, 1]} : vector<48x32xf32> to vector<1x32xf32>
    %355 = vector.extract_strided_slice %353 {offsets = [24, 0], sizes = [1, 32], strides = [1, 1]} : vector<48x32xf32> to vector<1x32xf32>
    %356 = tpu.concatenate %354, %355 in 0 : vector<1x32xf32>, vector<1x32xf32> -> vector<2x32xf32>
    %c0_156 = arith.constant 0 : index
    %c0_157 = arith.constant 0 : index
    %357 = vector.load %arg17[%c0_156, %c0_157] : memref<1x32xf32, #tpu.memory_space<vmem>>, vector<1x32xf32>
    %c0_158 = arith.constant 0 : index
    %c0_159 = arith.constant 0 : index
    %358 = vector.load %arg18[%c0_158, %c0_159] : memref<1x32xf32, #tpu.memory_space<vmem>>, vector<1x32xf32>
    %cst_160 = arith.constant dense<0.000000e+00> : vector<2xf32>
    %359 = vector.multi_reduction <add>, %356, %cst_160 [1] : vector<2x32xf32> to vector<2xf32>
    %360 = vector.shape_cast %359 : vector<2xf32> to vector<2x1xf32>
    %cst_161 = arith.constant 3.200000e+01 : f32
    %361 = vector.broadcast %cst_161 : f32 to vector<2x1xf32>
    %362 = arith.divf %360, %361 : vector<2x1xf32>
    %363 = vector.broadcast %362 : vector<2x1xf32> to vector<2x32xf32>
    %364 = arith.subf %356, %363 : vector<2x32xf32>
    %365 = arith.mulf %364, %364 : vector<2x32xf32>
    %cst_162 = arith.constant dense<0.000000e+00> : vector<2xf32>
    %366 = vector.multi_reduction <add>, %365, %cst_162 [1] : vector<2x32xf32> to vector<2xf32>
    %367 = vector.shape_cast %366 : vector<2xf32> to vector<2x1xf32>
    %cst_163 = arith.constant 3.200000e+01 : f32
    %368 = vector.broadcast %cst_163 : f32 to vector<2x1xf32>
    %369 = arith.divf %367, %368 : vector<2x1xf32>
    %370 = vector.broadcast %362 : vector<2x1xf32> to vector<2x32xf32>
    %371 = arith.subf %356, %370 : vector<2x32xf32>
    %cst_164 = arith.constant 9.99999996E-13 : f32
    %372 = vector.broadcast %cst_164 : f32 to vector<2x1xf32>
    %373 = arith.addf %369, %372 : vector<2x1xf32>
    %374 = math.rsqrt %373 : vector<2x1xf32>
    %375 = vector.broadcast %374 : vector<2x1xf32> to vector<2x32xf32>
    %376 = arith.mulf %371, %375 : vector<2x32xf32>
    %377 = vector.broadcast %357 : vector<1x32xf32> to vector<2x32xf32>
    %378 = arith.mulf %376, %377 : vector<2x32xf32>
    %379 = vector.broadcast %358 : vector<1x32xf32> to vector<2x32xf32>
    %380 = arith.addf %378, %379 : vector<2x32xf32>
    %c0_165 = arith.constant 0 : index
    %c0_166 = arith.constant 0 : index
    %c0_167 = arith.constant 0 : index
    %381 = vector.load %arg19[%c0_165, %c0_166, %c0_167] : memref<1x2x32xf32, #tpu.memory_space<vmem>>, vector<1x2x32xf32>
    %382 = vector.shape_cast %381 : vector<1x2x32xf32> to vector<2x32xf32>
    %383 = vector.shape_cast %380 : vector<2x32xf32> to vector<1x2x32xf32>
    tpu.vector_store %arg19[%c0_165, %c0_166, %c0_167], %383 {strides = array<i32>} : memref<1x2x32xf32, #tpu.memory_space<vmem>>, vector<1x2x32xf32>,
    return
  }
  func.func @transform_0(%arg0: i32) -> (i32, i32, i32) {
    %c0_i32 = arith.constant 0 : i32
    %c0_i32_0 = arith.constant 0 : i32
    %c0_i32_1 = arith.constant 0 : i32
    return %arg0, %c0_i32, %c0_i32_0 : i32, i32, i32
  }
  func.func @transform_1(%arg0: i32) -> (i32, i32) {
    %c0_i32 = arith.constant 0 : i32
    %c0_i32_0 = arith.constant 0 : i32
    %c0_i32_1 = arith.constant 0 : i32
    return %c0_i32, %c0_i32_0 : i32, i32
  }
  func.func @transform_2(%arg0: i32) -> (i32, i32) {
    %c0_i32 = arith.constant 0 : i32
    %c0_i32_0 = arith.constant 0 : i32
    %c0_i32_1 = arith.constant 0 : i32
    return %c0_i32, %c0_i32_0 : i32, i32
  }
  func.func @transform_3(%arg0: i32) -> (i32, i32) {
    %c0_i32 = arith.constant 0 : i32
    %c0_i32_0 = arith.constant 0 : i32
    %c0_i32_1 = arith.constant 0 : i32
    return %c0_i32, %c0_i32_0 : i32, i32
  }
  func.func @transform_4(%arg0: i32) -> (i32, i32, i32) {
    %c0_i32 = arith.constant 0 : i32
    %c0_i32_0 = arith.constant 0 : i32
    %c0_i32_1 = arith.constant 0 : i32
    %c0_i32_2 = arith.constant 0 : i32
    return %c0_i32, %c0_i32_0, %c0_i32_1 : i32, i32, i32
  }
  func.func @transform_5(%arg0: i32) -> (i32, i32, i32) {
    %c0_i32 = arith.constant 0 : i32
    %c0_i32_0 = arith.constant 0 : i32
    %c0_i32_1 = arith.constant 0 : i32
    %c0_i32_2 = arith.constant 0 : i32
    return %c0_i32, %c0_i32_0, %c0_i32_1 : i32, i32, i32
  }
  func.func @transform_6(%arg0: i32) -> (i32, i32, i32) {
    %c0_i32 = arith.constant 0 : i32
    %c0_i32_0 = arith.constant 0 : i32
    %c0_i32_1 = arith.constant 0 : i32
    %c0_i32_2 = arith.constant 0 : i32
    return %c0_i32, %c0_i32_0, %c0_i32_1 : i32, i32, i32
  }
  func.func @transform_7(%arg0: i32) -> (i32, i32, i32) {
    %c0_i32 = arith.constant 0 : i32
    %c0_i32_0 = arith.constant 0 : i32
    %c0_i32_1 = arith.constant 0 : i32
    %c0_i32_2 = arith.constant 0 : i32
    return %c0_i32, %c0_i32_0, %c0_i32_1 : i32, i32, i32
  }
  func.func @transform_8(%arg0: i32) -> (i32, i32, i32) {
    %c0_i32 = arith.constant 0 : i32
    %c0_i32_0 = arith.constant 0 : i32
    %c0_i32_1 = arith.constant 0 : i32
    %c0_i32_2 = arith.constant 0 : i32
    return %c0_i32, %c0_i32_0, %c0_i32_1 : i32, i32, i32
  }
  func.func @transform_9(%arg0: i32) -> (i32, i32, i32) {
    %c0_i32 = arith.constant 0 : i32
    %c0_i32_0 = arith.constant 0 : i32
    %c0_i32_1 = arith.constant 0 : i32
    %c0_i32_2 = arith.constant 0 : i32
    return %c0_i32, %c0_i32_0, %c0_i32_1 : i32, i32, i32
  }
  func.func @transform_10(%arg0: i32) -> (i32, i32, i32) {
    %c0_i32 = arith.constant 0 : i32
    %c0_i32_0 = arith.constant 0 : i32
    %c0_i32_1 = arith.constant 0 : i32
    %c0_i32_2 = arith.constant 0 : i32
    return %c0_i32, %c0_i32_0, %c0_i32_1 : i32, i32, i32
  }
  func.func @transform_11(%arg0: i32) -> (i32, i32, i32) {
    %c0_i32 = arith.constant 0 : i32
    %c0_i32_0 = arith.constant 0 : i32
    %c0_i32_1 = arith.constant 0 : i32
    %c0_i32_2 = arith.constant 0 : i32
    return %c0_i32, %c0_i32_0, %c0_i32_1 : i32, i32, i32
  }
  func.func @transform_12(%arg0: i32) -> (i32, i32, i32) {
    %c0_i32 = arith.constant 0 : i32
    %c0_i32_0 = arith.constant 0 : i32
    %c0_i32_1 = arith.constant 0 : i32
    %c0_i32_2 = arith.constant 0 : i32
    return %c0_i32, %c0_i32_0, %c0_i32_1 : i32, i32, i32
  }
  func.func @transform_13(%arg0: i32) -> (i32, i32, i32) {
    %c0_i32 = arith.constant 0 : i32
    %c0_i32_0 = arith.constant 0 : i32
    %c0_i32_1 = arith.constant 0 : i32
    %c0_i32_2 = arith.constant 0 : i32
    return %c0_i32, %c0_i32_0, %c0_i32_1 : i32, i32, i32
  }
  func.func @transform_14(%arg0: i32) -> (i32, i32, i32) {
    %c0_i32 = arith.constant 0 : i32
    %c0_i32_0 = arith.constant 0 : i32
    %c0_i32_1 = arith.constant 0 : i32
    %c0_i32_2 = arith.constant 0 : i32
    return %c0_i32, %c0_i32_0, %c0_i32_1 : i32, i32, i32
  }
  func.func @transform_15(%arg0: i32) -> (i32, i32, i32) {
    %c0_i32 = arith.constant 0 : i32
    %c0_i32_0 = arith.constant 0 : i32
    %c0_i32_1 = arith.constant 0 : i32
    %c0_i32_2 = arith.constant 0 : i32
    return %c0_i32, %c0_i32_0, %c0_i32_1 : i32, i32, i32
  }
  func.func @transform_16(%arg0: i32) -> (i32, i32) {
    %c0_i32 = arith.constant 0 : i32
    %c0_i32_0 = arith.constant 0 : i32
    %c0_i32_1 = arith.constant 0 : i32
    return %c0_i32, %c0_i32_0 : i32, i32
  }
  func.func @transform_17(%arg0: i32) -> (i32, i32) {
    %c0_i32 = arith.constant 0 : i32
    %c0_i32_0 = arith.constant 0 : i32
    %c0_i32_1 = arith.constant 0 : i32
    return %c0_i32, %c0_i32_0 : i32, i32
  }
  func.func @transform_18(%arg0: i32) -> (i32, i32, i32) {
    %c0_i32 = arith.constant 0 : i32
    %c0_i32_0 = arith.constant 0 : i32
    %c0_i32_1 = arith.constant 0 : i32
    return %arg0, %c0_i32, %c0_i32_0 : i32, i32, i32
  }
}

</mosaic_0001>

<llo_original>
// kernel: vit_forward.1
$region0: #{vit_forward.1}
  #allocation0 [shape = 'u32[]', space=smem, size = 0x4, offset = 0x4, fixed_abs, tag = 'smem constant byte address 0x4 - core index']
  #allocation1 [shape = 'u32[144,128]{1,0:T(1,128)}', space=vmem, size = 0x12000, scoped, tag = 'internal scratch']
  %s0 = inlined_call_operand.vmem [shape: f32[2,24,48], index: 0, kind: input, shape index: {}]
  %s1 = inlined_call_operand.vmem [shape: f32[48,32], index: 1, kind: input, shape index: {}]
  %s2 = inlined_call_operand.vmem [shape: f32[48,48], index: 2, kind: input, shape index: {}]
  %s3 = inlined_call_operand.vmem [shape: f32[48,32], index: 3, kind: input, shape index: {}]
  %s4 = inlined_call_operand.vmem [shape: f32[2,1,32], index: 4, kind: input, shape index: {}]
  %s5 = inlined_call_operand.vmem [shape: f32[2,1,32], index: 5, kind: input, shape index: {}]
  %s6 = inlined_call_operand.vmem [shape: f32[2,32,96], index: 6, kind: input, shape index: {}]
  %s7 = inlined_call_operand.vmem [shape: f32[2,1,96], index: 7, kind: input, shape index: {}]
  %s8 = inlined_call_operand.vmem [shape: f32[2,32,32], index: 8, kind: input, shape index: {}]
  %s9 = inlined_call_operand.vmem [shape: f32[2,1,32], index: 9, kind: input, shape index: {}]
  %s10 = inlined_call_operand.vmem [shape: f32[2,1,32], index: 10, kind: input, shape index: {}]
  %s11 = inlined_call_operand.vmem [shape: f32[2,1,32], index: 11, kind: input, shape index: {}]
  %s12 = inlined_call_operand.vmem [shape: f32[2,32,64], index: 12, kind: input, shape index: {}]
  %s13 = inlined_call_operand.vmem [shape: f32[2,1,64], index: 13, kind: input, shape index: {}]
  %s14 = inlined_call_operand.vmem [shape: f32[2,64,32], index: 14, kind: input, shape index: {}]
  %s15 = inlined_call_operand.vmem [shape: f32[2,1,32], index: 15, kind: input, shape index: {}]
  %s16 = inlined_call_operand.vmem [shape: f32[1,32], index: 16, kind: input, shape index: {}]
  %s17 = inlined_call_operand.vmem [shape: f32[1,32], index: 17, kind: input, shape index: {}]
  %s18 = inlined_call_operand.hbm [shape: f32[1,2,32], index: 18, kind: output, shape index: {}]
  %s19 = sld [smem:[#allocation0]]
  $region82: #{vit_forward.1} parent=0
    _
  %s21 = ssub.s32 1, %s19
  %s22 = scalar_select 0, %s21, %s19
  $region1: #{vit_forward.1} parent=0
    #allocation2 [shape = 'u8[1024]{0}', space=vmem, size = 0x400, scoped, tag = 'output window, operand 0, single buffered']
    #allocation3 [shape = 's32[1]{0}', space=sflag, size = 0x4, scoped, tag = 'scoped memory for vit_forward.1']
    %23 = vsyncpa [#allocation3], 0
    // Predicated region
    $region2: #{vit_forward.1} parent=1 // pred_check
      _
    $region3: #{vit_forward.1} parent=1 // pred_check_branch
      %25 = sbr.rel (0) target = $region5
    $region4: #{vit_forward.1} parent=1 // pred_region
      _
    $region5: #{vit_forward.1} parent=1 // pred_fallthru
      _
    // Predicated region
    $region6: #{vit_forward.1} parent=1 // pred_check
      _
    $region7: #{vit_forward.1} parent=1 // pred_check_branch
      %27 = sbr.rel (0) target = $region9
    $region8: #{vit_forward.1} parent=1 // pred_region
      _
    $region9: #{vit_forward.1} parent=1 // pred_fallthru
      _
    // Predicated region
    $region10: #{vit_forward.1} parent=1 // pred_check
      _
    $region11: #{vit_forward.1} parent=1 // pred_check_branch
      %29 = sbr.rel (0) target = $region13
    $region12: #{vit_forward.1} parent=1 // pred_region
      _
    $region13: #{vit_forward.1} parent=1 // pred_fallthru
      _
    // Predicated region
    $region14: #{vit_forward.1} parent=1 // pred_check
      _
    $region15: #{vit_forward.1} parent=1 // pred_check_branch
      %31 = sbr.rel (0) target = $region17
    $region16: #{vit_forward.1} parent=1 // pred_region
      _
    $region17: #{vit_forward.1} parent=1 // pred_fallthru
      _
    // Predicated region
    $region18: #{vit_forward.1} parent=1 // pred_check
      _
    $region19: #{vit_forward.1} parent=1 // pred_check_branch
      %33 = sbr.rel (0) target = $region21
    $region20: #{vit_forward.1} parent=1 // pred_region
      _
    $region21: #{vit_forward.1} parent=1 // pred_fallthru
      _
    // Predicated region
    $region22: #{vit_forward.1} parent=1 // pred_check
      _
    $region23: #{vit_forward.1} parent=1 // pred_check_branch
      %35 = sbr.rel (0) target = $region25
    $region24: #{vit_forward.1} parent=1 // pred_region
      _
    $region25: #{vit_forward.1} parent=1 // pred_fallthru
      _
    // Predicated region
    $region26: #{vit_forward.1} parent=1 // pred_check
      _
    $region27: #{vit_forward.1} parent=1 // pred_check_branch
      %37 = sbr.rel (0) target = $region29
    $region28: #{vit_forward.1} parent=1 // pred_region
      _
    $region29: #{vit_forward.1} parent=1 // pred_fallthru
      _
    // Predicated region
    $region30: #{vit_forward.1} parent=1 // pred_check
      _
    $region31: #{vit_forward.1} parent=1 // pred_check_branch
      %39 = sbr.rel (0) target = $region33
    $region32: #{vit_forward.1} parent=1 // pred_region
      _
    $region33: #{vit_forward.1} parent=1 // pred_fallthru
      _
    // Predicated region
    $region34: #{vit_forward.1} parent=1 // pred_check
      _
    $region35: #{vit_forward.1} parent=1 // pred_check_branch
      %41 = sbr.rel (0) target = $region37
    $region36: #{vit_forward.1} parent=1 // pred_region
      _
    $region37: #{vit_forward.1} parent=1 // pred_fallthru
      _
    // Predicated region
    $region38: #{vit_forward.1} parent=1 // pred_check
      _
    $region39: #{vit_forward.1} parent=1 // pred_check_branch
      %43 = sbr.rel (0) target = $region41
    $region40: #{vit_forward.1} parent=1 // pred_region
      _
    $region41: #{vit_forward.1} parent=1 // pred_fallthru
      _
    // Predicated region
    $region42: #{vit_forward.1} parent=1 // pred_check
      _
    $region43: #{vit_forward.1} parent=1 // pred_check_branch
      %45 = sbr.rel (0) target = $region45
    $region44: #{vit_forward.1} parent=1 // pred_region
      _
    $region45: #{vit_forward.1} parent=1 // pred_fallthru
      _
    // Predicated region
    $region46: #{vit_forward.1} parent=1 // pred_check
      _
    $region47: #{vit_forward.1} parent=1 // pred_check_branch
      %47 = sbr.rel (0) target = $region49
    $region48: #{vit_forward.1} parent=1 // pred_region
      _
    $region49: #{vit_forward.1} parent=1 // pred_fallthru
      _
    // Predicated region
    $region50: #{vit_forward.1} parent=1 // pred_check
      _
    $region51: #{vit_forward.1} parent=1 // pred_check_branch
      %49 = sbr.rel (0) target = $region53
    $region52: #{vit_forward.1} parent=1 // pred_region
      _
    $region53: #{vit_forward.1} parent=1 // pred_fallthru
      _
    // Predicated region
    $region54: #{vit_forward.1} parent=1 // pred_check
      _
    $region55: #{vit_forward.1} parent=1 // pred_check_branch
      %51 = sbr.rel (0) target = $region57
    $region56: #{vit_forward.1} parent=1 // pred_region
      _
    $region57: #{vit_forward.1} parent=1 // pred_fallthru
      _
    // Predicated region
    $region58: #{vit_forward.1} parent=1 // pred_check
      _
    $region59: #{vit_forward.1} parent=1 // pred_check_branch
      %53 = sbr.rel (0) target = $region61
    $region60: #{vit_forward.1} parent=1 // pred_region
      _
    $region61: #{vit_forward.1} parent=1 // pred_fallthru
      _
    // Predicated region
    $region62: #{vit_forward.1} parent=1 // pred_check
      _
    $region63: #{vit_forward.1} parent=1 // pred_check_branch
      %55 = sbr.rel (0) target = $region65
    $region64: #{vit_forward.1} parent=1 // pred_region
      _
    $region65: #{vit_forward.1} parent=1 // pred_fallthru
      _
    // Predicated region
    $region66: #{vit_forward.1} parent=1 // pred_check
      _
    $region67: #{vit_forward.1} parent=1 // pred_check_branch
      %57 = sbr.rel (0) target = $region69
    $region68: #{vit_forward.1} parent=1 // pred_region
      _
    $region69: #{vit_forward.1} parent=1 // pred_fallthru
      _
    // Predicated region
    $region70: #{vit_forward.1} parent=1 // pred_check
      _
    $region71: #{vit_forward.1} parent=1 // pred_check_branch
      %59 = sbr.rel (0) target = $region73
    $region72: #{vit_forward.1} parent=1 // pred_region
      _
    $region73: #{vit_forward.1} parent=1 // pred_fallthru
      _
    %v60 = vld [vmem:[%s0] sm:$0xff]
    %v61 = vld [vmem:[%s0 + $0x8] sm:$0xff]
    %v62 = vld [vmem:[%s0 + $0x10] sm:$0xff]
    %s63 = scalar_lea.vmem %s0, 24
    %v64 = vld [vmem:[%s63] sm:$0xff]
    %v65 = vld [vmem:[%s63 + $0x8] sm:$0xff]
    %v66 = vld [vmem:[%s63 + $0x10] sm:$0xff]
    %v67 = vld [vmem:[%s3] sm:$0xff]
    %v68 = vld [vmem:[%s3 + $0x8] sm:$0xff]
    %v69 = vld [vmem:[%s3 + $0x10] sm:$0xff]
    %v70 = vld [vmem:[%s3 + $0x18] sm:$0xff]
    %v71 = vld [vmem:[%s3 + $0x20] sm:$0xff]
    %v72 = vld [vmem:[%s3 + $0x28] sm:$0xff]
    %v73 = vld [vmem:[%s1] sm:$0xff]
    %v74 = vld [vmem:[%s1 + $0x8] sm:$0xff]
    %v75 = vld [vmem:[%s1 + $0x10] sm:$0xff]
    %v76 = vld [vmem:[%s1 + $0x18] sm:$0xff]
    %v77 = vld [vmem:[%s1 + $0x20] sm:$0xff]
    %v78 = vld [vmem:[%s1 + $0x28] sm:$0xff]
    %vm79 = vcmask 392192
    %v81 = vsel %vm79, %v60, 0
    %v84 = vsel %vm79, %v61, 0
    %v87 = vsel %vm79, %v62, 0
    %v90 = vsel %vm79, %v64, 0
    %v93 = vsel %vm79, %v65, 0
    %v96 = vsel %vm79, %v66, 0
    %98 = vmatprep.subr.mxu0 0.0
    %99 = vmatpush1.msra.mxu0 0.0
    %100 = vmatprep.subr.mxu0 0.0
    %101 = vmatpush1.msra.mxu0 0.0
    %102 = vmatprep.subr.mxu0 0.0
    %103 = vmatpush1.msra.mxu0 0.0
    %104 = vmatprep.subr.mxu0 0.0
    %105 = vmatpush1.msra.mxu0 0.0
    %106 = vmatprep.subr.mxu0 0.0
    %107 = vmatpush1.msra.mxu0 0.0
    %108 = vmatprep.subr.mxu0 0.0
    %109 = vmatpush1.msra.mxu0 0.0
    %110 = vmatprep.subr.mxu0 0.0
    %111 = vmatpush1.msra.mxu0 0.0
    %112 = vmatprep.subr.mxu0 0.0
    %113 = vmatpush1.msra.mxu0 0.0
    %114 = vmatprep.subr.mxu0 0.0
    %115 = vmatpush1.msra.mxu0 0.0
    %116 = vmatprep.subr.mxu0 0.0
    %117 = vmatpush1.msra.mxu0 0.0
    %118 = vmatprep.subr.mxu0 0.0
    %119 = vmatpush1.msra.mxu0 %v72
    %120 = vmatprep.subr.mxu0 0.0
    %121 = vmatpush1.msra.mxu0 %v71
    %122 = vmatprep.subr.mxu0 0.0
    %123 = vmatpush1.msra.mxu0 %v70
    %124 = vmatprep.subr.mxu0 0.0
    %125 = vmatpush1.msra.mxu0 %v69
    %126 = vmatprep.subr.mxu0 0.0
    %127 = vmatpush1.msra.mxu0 %v68
    %128 = vmatprep.subr.mxu0 0.0
    %129 = vmatpush1.msra.mxu0 %v67
    %130 = vmatprep.subr.mxu0 0.0
    %131 = vmatpush2.msra.mxu0 0.0
    %132 = vmatprep.subr.mxu0 0.0
    %133 = vmatpush2.msra.mxu0 0.0
    %134 = vmatprep.subr.mxu0 0.0
    %135 = vmatpush2.msra.mxu0 0.0
    %136 = vmatprep.subr.mxu0 0.0
    %137 = vmatpush2.msra.mxu0 0.0
    %138 = vmatprep.subr.mxu0 0.0
    %139 = vmatpush2.msra.mxu0 0.0
    %140 = vmatprep.subr.mxu0 0.0
    %141 = vmatpush2.msra.mxu0 0.0
    %142 = vmatprep.subr.mxu0 0.0
    %143 = vmatpush2.msra.mxu0 0.0
    %144 = vmatprep.subr.mxu0 0.0
    %145 = vmatpush2.msra.mxu0 0.0
    %146 = vmatprep.subr.mxu0 0.0
    %147 = vmatpush2.msra.mxu0 0.0
    %148 = vmatprep.subr.mxu0 0.0
    %149 = vmatpush2.msra.mxu0 0.0
    %150 = vmatprep.subr.mxu0 0.0
    %151 = vmatpush2.msra.mxu0 0.0
    %152 = vmatprep.subr.mxu0 0.0
    %153 = vmatpush2.msra.mxu0 0.0
    %154 = vmatprep.subr.mxu0 0.0
    %155 = vmatpush2.msra.mxu0 0.0
    %156 = vmatprep.subr.mxu0 0.0
    %157 = vmatpush2.msra.mxu0 0.0
    %158 = vmatprep.subr.mxu0 0.0
    %159 = vmatpush2.msra.mxu0 0.0
    %160 = vmatprep.subr.mxu0 0.0
    %161 = vmatpush2.msra.mxu0 0.0
    %162 = vmatprep.mubr.f32.mxu0 0.0
    %163 = vmatmul.mubr.f32.gmra.mxu0 %v81
    %v164 = vpop.f32.mrf.mxu0
    %v165 = vadd.f32 %v73, %v164
    %v166 = vpop.f32.mrf.mxu0
    %167 = vmatprep.mubr.f32.mxu0 0.0
    %168 = vmatmul.mubr.f32.gmra.mxu0 %v84
    %v169 = vpop.f32.mrf.mxu0
    %v170 = vadd.f32 %v74, %v169
    %v171 = vpop.f32.mrf.mxu0
    %172 = vmatprep.mubr.f32.mxu0 0.0
    %173 = vmatmul.mubr.f32.gmra.mxu0 %v87
    %v174 = vpop.f32.mrf.mxu0
    %v175 = vadd.f32 %v75, %v174
    %v176 = vpop.f32.mrf.mxu0
    %177 = vmatprep.mubr.f32.mxu0 0.0
    %178 = vmatmul.mubr.f32.gmra.mxu0 %v90
    %v179 = vpop.f32.mrf.mxu0
    %v180 = vadd.f32 %v76, %v179
    %v181 = vpop.f32.mrf.mxu0
    %182 = vmatprep.mubr.f32.mxu0 0.0
    %183 = vmatmul.mubr.f32.gmra.mxu0 %v93
    %v184 = vpop.f32.mrf.mxu0
    %v185 = vadd.f32 %v77, %v184
    %v186 = vpop.f32.mrf.mxu0
    %187 = vmatprep.mubr.f32.mxu0 0.0
    %188 = vmatmul.mubr.f32.gmra.mxu0 %v96
    %v189 = vpop.f32.mrf.mxu0
    %v190 = vadd.f32 %v78, %v189
    %v191 = vpop.f32.mrf.mxu0
    %192 = vdwg.mxu0
    %v193 = vld [vmem:[%s2] sm:$0xff]
    %v194 = vld [vmem:[%s2 + $0x8] sm:$0xff]
    %v195 = vld [vmem:[%s2 + $0x10] sm:$0xff]
    %v196 = vld [vmem:[%s2 + $0x18] sm:$0xff]
    %v197 = vld [vmem:[%s2 + $0x20] sm:$0xff]
    %v198 = vld [vmem:[%s2 + $0x28] sm:$0xff]
    %v199 = vld [vmem:[%s4] sm:$0x1]
    %v200 = vld [vmem:[%s5] sm:$0x1]
    %vm201 = vcmask 261120
    %v202 = vsel %vm201, %v165, 0.0
    %203 = vadd.xlane.f32.xlu0 %v202
    %v204 = vpop.xlane.xlu0 %203
    %v205 = vsel %vm201, %v170, 0.0
    %206 = vadd.xlane.f32.xlu0 %v205
    %v207 = vpop.xlane.xlu0 %206
    %v208 = vsel %vm201, %v175, 0.0
    %209 = vadd.xlane.f32.xlu0 %v208
    %v210 = vpop.xlane.xlu0 %209
    %v211 = vsel %vm201, %v180, 0.0
    %212 = vadd.xlane.f32.xlu0 %v211
    %v213 = vpop.xlane.xlu0 %212
    %v214 = vsel %vm201, %v185, 0.0
    %215 = vadd.xlane.f32.xlu0 %v214
    %v216 = vpop.xlane.xlu0 %215
    %v217 = vsel %vm201, %v190, 0.0
    %218 = vadd.xlane.f32.xlu0 %v217
    %v219 = vpop.xlane.xlu0 %218
    %v220 = vrcp.pop 32.0
    %v221 = vmul.f32 %v204, %v220
    %v222 = vmul.f32 %v207, %v220
    %v223 = vmul.f32 %v210, %v220
    %v224 = vmul.f32 %v213, %v220
    %v225 = vmul.f32 %v216, %v220
    %v226 = vmul.f32 %v219, %v220
    %v227 = vsub.f32 %v165, %v221
    %v228 = vsub.f32 %v170, %v222
    %v229 = vsub.f32 %v175, %v223
    %v230 = vsub.f32 %v180, %v224
    %v231 = vsub.f32 %v185, %v225
    %v232 = vsub.f32 %v190, %v226
    %v233 = vmul.f32 %v227, %v227
    %v234 = vmul.f32 %v228, %v228
    %v235 = vmul.f32 %v229, %v229
    %v236 = vmul.f32 %v230, %v230
    %v237 = vmul.f32 %v231, %v231
    %v238 = vmul.f32 %v232, %v232
    %v239 = vsel %vm201, %v233, 0.0
    %240 = vadd.xlane.f32.xlu0 %v239
    %v241 = vpop.xlane.xlu0 %240
    %v242 = vsel %vm201, %v234, 0.0
    %243 = vadd.xlane.f32.xlu0 %v242
    %v244 = vpop.xlane.xlu0 %243
    %v245 = vsel %vm201, %v235, 0.0
    %246 = vadd.xlane.f32.xlu0 %v245
    %v247 = vpop.xlane.xlu0 %246
    %v248 = vsel %vm201, %v236, 0.0
    %249 = vadd.xlane.f32.xlu0 %v248
    %v250 = vpop.xlane.xlu0 %249
    %v251 = vsel %vm201, %v237, 0.0
    %252 = vadd.xlane.f32.xlu0 %v251
    %v253 = vpop.xlane.xlu0 %252
    %v254 = vsel %vm201, %v238, 0.0
    %255 = vadd.xlane.f32.xlu0 %v254
    %v256 = vpop.xlane.xlu0 %255
    %v257 = vmul.f32 %v241, %v220
    %v258 = vmul.f32 %v244, %v220
    %v259 = vmul.f32 %v247, %v220
    %v260 = vmul.f32 %v250, %v220
    %v261 = vmul.f32 %v253, %v220
    %v262 = vmul.f32 %v256, %v220
    %v263 = vadd.f32 %v257, 1e-12
    %v264 = vadd.f32 %v258, 1e-12
    %v265 = vadd.f32 %v259, 1e-12
    %v266 = vadd.f32 %v260, 1e-12
    %v267 = vadd.f32 %v261, 1e-12
    %v268 = vadd.f32 %v262, 1e-12
    %v269 = vrsqrt.pop %v263
    %v270 = vrsqrt.pop %v264
    %v271 = vrsqrt.pop %v265
    %v272 = vrsqrt.pop %v266
    %v273 = vrsqrt.pop %v267
    %v274 = vrsqrt.pop %v268
    %v275 = vmul.f32 %v227, %v269
    %v276 = vmul.f32 %v228, %v270
    %v277 = vmul.f32 %v229, %v271
    %v278 = vmul.f32 %v230, %v272
    %v279 = vmul.f32 %v231, %v273
    %v280 = vmul.f32 %v232, %v274
    %v282 = vlaneseq
    %v283 = vshrl.u32 %v282, 7
    %v284 = vsub.s32 0, %v283
    %v285 = vrot.slane %v199, %v284
    %v287 = vmul.f32 %v275, %v285
    %v288 = vmul.f32 %v276, %v285
    %v289 = vmul.f32 %v277, %v285
    %v290 = vmul.f32 %v278, %v285
    %v291 = vmul.f32 %v279, %v285
    %v292 = vmul.f32 %v280, %v285
    %v294 = vlaneseq
    %v295 = vshrl.u32 %v294, 7
    %v296 = vsub.s32 0, %v295
    %v297 = vrot.slane %v200, %v296
    %v299 = vadd.f32 %v287, %v297
    %v300 = vadd.f32 %v288, %v297
    %v301 = vadd.f32 %v289, %v297
    %v302 = vadd.f32 %v290, %v297
    %v303 = vadd.f32 %v291, %v297
    %v304 = vadd.f32 %v292, %v297
    %v305 = vld [vmem:[%s6] sm:$0xff]
    %v306 = vld [vmem:[%s6 + $0x8] sm:$0xff]
    %v307 = vld [vmem:[%s6 + $0x10] sm:$0xff]
    %v308 = vld [vmem:[%s6 + $0x18] sm:$0xff]
    %v309 = vld [vmem:[%s7] sm:$0x1]
    %v311 = vlaneseq
    %v312 = vshrl.u32 %v311, 7
    %v313 = vsub.s32 0, %v312
    %v314 = vrot.slane %v309, %v313
    %v317 = vsel %vm201, %v299, 0
    %v320 = vsel %vm201, %v300, 0
    %v323 = vsel %vm201, %v301, 0
    %v326 = vsel %vm201, %v302, 0
    %v329 = vsel %vm201, %v303, 0
    %v332 = vsel %vm201, %v304, 0
    %334 = vmatprep.subr.mxu0 0.0
    %335 = vmatpush1.msra.mxu0 0.0
    %336 = vmatprep.subr.mxu0 0.0
    %337 = vmatpush1.msra.mxu0 0.0
    %338 = vmatprep.subr.mxu0 0.0
    %339 = vmatpush1.msra.mxu0 0.0
    %340 = vmatprep.subr.mxu0 0.0
    %341 = vmatpush1.msra.mxu0 0.0
    %342 = vmatprep.subr.mxu0 0.0
    %343 = vmatpush1.msra.mxu0 0.0
    %344 = vmatprep.subr.mxu0 0.0
    %345 = vmatpush1.msra.mxu0 0.0
    %346 = vmatprep.subr.mxu0 0.0
    %347 = vmatpush1.msra.mxu0 0.0
    %348 = vmatprep.subr.mxu0 0.0
    %349 = vmatpush1.msra.mxu0 0.0
    %350 = vmatprep.subr.mxu0 0.0
    %351 = vmatpush1.msra.mxu0 0.0
    %352 = vmatprep.subr.mxu0 0.0
    %353 = vmatpush1.msra.mxu0 0.0
    %354 = vmatprep.subr.mxu0 0.0
    %355 = vmatpush1.msra.mxu0 0.0
    %356 = vmatprep.subr.mxu0 0.0
    %357 = vmatpush1.msra.mxu0 0.0
    %358 = vmatprep.subr.mxu0 0.0
    %359 = vmatpush1.msra.mxu0 %v308
    %360 = vmatprep.subr.mxu0 0.0
    %361 = vmatpush1.msra.mxu0 %v307
    %362 = vmatprep.subr.mxu0 0.0
    %363 = vmatpush1.msra.mxu0 %v306
    %364 = vmatprep.subr.mxu0 0.0
    %365 = vmatpush1.msra.mxu0 %v305
    %366 = vmatprep.subr.mxu0 0.0
    %367 = vmatpush2.msra.mxu0 0.0
    %368 = vmatprep.subr.mxu0 0.0
    %369 = vmatpush2.msra.mxu0 0.0
    %370 = vmatprep.subr.mxu0 0.0
    %371 = vmatpush2.msra.mxu0 0.0
    %372 = vmatprep.subr.mxu0 0.0
    %373 = vmatpush2.msra.mxu0 0.0
    %374 = vmatprep.subr.mxu0 0.0
    %375 = vmatpush2.msra.mxu0 0.0
    %376 = vmatprep.subr.mxu0 0.0
    %377 = vmatpush2.msra.mxu0 0.0
    %378 = vmatprep.subr.mxu0 0.0
    %379 = vmatpush2.msra.mxu0 0.0
    %380 = vmatprep.subr.mxu0 0.0
    %381 = vmatpush2.msra.mxu0 0.0
    %382 = vmatprep.subr.mxu0 0.0
    %383 = vmatpush2.msra.mxu0 0.0
    %384 = vmatprep.subr.mxu0 0.0
    %385 = vmatpush2.msra.mxu0 0.0
    %386 = vmatprep.subr.mxu0 0.0
    %387 = vmatpush2.msra.mxu0 0.0
    %388 = vmatprep.subr.mxu0 0.0
    %389 = vmatpush2.msra.mxu0 0.0
    %390 = vmatprep.subr.mxu0 0.0
    %391 = vmatpush2.msra.mxu0 0.0
    %392 = vmatprep.subr.mxu0 0.0
    %393 = vmatpush2.msra.mxu0 0.0
    %394 = vmatprep.subr.mxu0 0.0
    %395 = vmatpush2.msra.mxu0 0.0
    %396 = vmatprep.subr.mxu0 0.0
    %397 = vmatpush2.msra.mxu0 0.0
    %398 = vmatprep.mubr.f32.mxu0 0.0
    %399 = vmatmul.mubr.f32.gmra.mxu0 %v317
    %v400 = vpop.f32.mrf.mxu0
    %v401 = vadd.f32 %v314, %v400
    %v402 = vpop.f32.mrf.mxu0
    %403 = vmatprep.mubr.f32.mxu0 0.0
    %404 = vmatmul.mubr.f32.gmra.mxu0 %v320
    %v405 = vpop.f32.mrf.mxu0
    %v406 = vadd.f32 %v314, %v405
    %v407 = vpop.f32.mrf.mxu0
    %408 = vmatprep.mubr.f32.mxu0 0.0
    %409 = vmatmul.mubr.f32.gmra.mxu0 %v323
    %v410 = vpop.f32.mrf.mxu0
    %v411 = vadd.f32 %v314, %v410
    %v412 = vpop.f32.mrf.mxu0
    %413 = vmatprep.mubr.f32.mxu0 0.0
    %414 = vmatmul.mubr.f32.gmra.mxu0 %v326
    %v415 = vpop.f32.mrf.mxu0
    %v416 = vadd.f32 %v314, %v415
    %v417 = vpop.f32.mrf.mxu0
    %418 = vmatprep.mubr.f32.mxu0 0.0
    %419 = vmatmul.mubr.f32.gmra.mxu0 %v329
    %v420 = vpop.f32.mrf.mxu0
    %v421 = vadd.f32 %v314, %v420
    %v422 = vpop.f32.mrf.mxu0
    %423 = vmatprep.mubr.f32.mxu0 0.0
    %424 = vmatmul.mubr.f32.gmra.mxu0 %v332
    %v425 = vpop.f32.mrf.mxu0
    %v426 = vadd.f32 %v314, %v425
    %v427 = vpop.f32.mrf.mxu0
    %428 = vdwg.mxu0
    %v429 = vld [vmem:[%s8] sm:$0xff]
    %v430 = vld [vmem:[%s8 + $0x8] sm:$0xff]
    %v431 = vld [vmem:[%s8 + $0x10] sm:$0xff]
    %v432 = vld [vmem:[%s8 + $0x18] sm:$0xff]
    %439 = vrot.lane.b32.xlu0 %v401, 96
    %v440 = vpop.permute.xlu0 %439
    %441 = vrot.lane.b32.xlu0 %v406, 96
    %v442 = vpop.permute.xlu0 %441
    %443 = vrot.lane.b32.xlu0 %v411, 96
    %v444 = vpop.permute.xlu0 %443
    %445 = vrot.lane.b32.xlu0 %v416, 96
    %v446 = vpop.permute.xlu0 %445
    %447 = vrot.lane.b32.xlu0 %v421, 96
    %v448 = vpop.permute.xlu0 %447
    %449 = vrot.lane.b32.xlu0 %v426, 96
    %v450 = vpop.permute.xlu0 %449
    %vm451 = vcmask 64512
    %v452 = vsel %vm451, %v401, 0
    %v454 = vsel %vm451, %v406, 0
    %v456 = vsel %vm451, %v411, 0
    %v458 = vsel %vm451, %v416, 0
    %v460 = vsel %vm451, %v421, 0
    %v462 = vsel %vm451, %v426, 0
    %v464 = vsel %vm451, %v440, 0
    %v466 = vsel %vm451, %v442, 0
    %v468 = vsel %vm451, %v444, 0
    %v470 = vsel %vm451, %v446, 0
    %v472 = vsel %vm451, %v448, 0
    %v474 = vsel %vm451, %v450, 0
    %476 = vmatprep.subr.mxu0 0.0
    %477 = vmatpush1.xpose.msra.mxu0 0.0
    %478 = vmatprep.subr.mxu0 0.0
    %479 = vmatpush1.xpose.msra.mxu0 0.0
    %480 = vmatprep.subr.mxu0 0.0
    %481 = vmatpush1.xpose.msra.mxu0 0.0
    %482 = vmatprep.subr.mxu0 0.0
    %483 = vmatpush1.xpose.msra.mxu0 0.0
    %484 = vmatprep.subr.mxu0 0.0
    %485 = vmatpush1.xpose.msra.mxu0 0.0
    %486 = vmatprep.subr.mxu0 0.0
    %487 = vmatpush1.xpose.msra.mxu0 0.0
    %488 = vmatprep.subr.mxu0 0.0
    %489 = vmatpush1.xpose.msra.mxu0 0.0
    %490 = vmatprep.subr.mxu0 0.0
    %491 = vmatpush1.xpose.msra.mxu0 0.0
    %492 = vmatprep.subr.mxu0 0.0
    %493 = vmatpush1.xpose.msra.mxu0 0.0
    %494 = vmatprep.subr.mxu0 0.0
    %495 = vmatpush1.xpose.msra.mxu0 0.0
    %496 = vmatprep.subr.mxu0 0.0
    %497 = vmatpush1.xpose.msra.mxu0 %v474
    %498 = vmatprep.subr.mxu0 0.0
    %499 = vmatpush1.xpose.msra.mxu0 %v472
    %500 = vmatprep.subr.mxu0 0.0
    %501 = vmatpush1.xpose.msra.mxu0 %v470
    %502 = vmatprep.subr.mxu0 0.0
    %503 = vmatpush1.xpose.msra.mxu0 %v468
    %504 = vmatprep.subr.mxu0 0.0
    %505 = vmatpush1.xpose.msra.mxu0 %v466
    %506 = vmatprep.subr.mxu0 0.0
    %507 = vmatpush1.xpose.msra.mxu0 %v464
    %508 = vmatprep.subr.mxu0 0.0
    %509 = vmatpush2.xpose.msra.mxu0 0.0
    %510 = vmatprep.subr.mxu0 0.0
    %511 = vmatpush2.xpose.msra.mxu0 0.0
    %512 = vmatprep.subr.mxu0 0.0
    %513 = vmatpush2.xpose.msra.mxu0 0.0
    %514 = vmatprep.subr.mxu0 0.0
    %515 = vmatpush2.xpose.msra.mxu0 0.0
    %516 = vmatprep.subr.mxu0 0.0
    %517 = vmatpush2.xpose.msra.mxu0 0.0
    %518 = vmatprep.subr.mxu0 0.0
    %519 = vmatpush2.xpose.msra.mxu0 0.0
    %520 = vmatprep.subr.mxu0 0.0
    %521 = vmatpush2.xpose.msra.mxu0 0.0
    %522 = vmatprep.subr.mxu0 0.0
    %523 = vmatpush2.xpose.msra.mxu0 0.0
    %524 = vmatprep.subr.mxu0 0.0
    %525 = vmatpush2.xpose.msra.mxu0 0.0
    %526 = vmatprep.subr.mxu0 0.0
    %527 = vmatpush2.xpose.msra.mxu0 0.0
    %528 = vmatprep.subr.mxu0 0.0
    %529 = vmatpush2.xpose.msra.mxu0 0.0
    %530 = vmatprep.subr.mxu0 0.0
    %531 = vmatpush2.xpose.msra.mxu0 0.0
    %532 = vmatprep.subr.mxu0 0.0
    %533 = vmatpush2.xpose.msra.mxu0 0.0
    %534 = vmatprep.subr.mxu0 0.0
    %535 = vmatpush2.xpose.msra.mxu0 0.0
    %536 = vmatprep.subr.mxu0 0.0
    %537 = vmatpush2.xpose.msra.mxu0 0.0
    %538 = vmatprep.subr.mxu0 0.0
    %539 = vmatpush2.xpose.msra.mxu0 0.0
    %540 = vmatprep.mubr.f32.mxu0 0.0
    %541 = vmatmul.mubr.f32.gmra.mxu0 %v452
    %v542 = vpop.f32.mrf.mxu0
    %v543 = vadd.f32 %v193, %v542
    %v544 = vpop.f32.mrf.mxu0
    %545 = vmatprep.mubr.f32.mxu0 0.0
    %546 = vmatmul.mubr.f32.gmra.mxu0 %v454
    %v547 = vpop.f32.mrf.mxu0
    %v548 = vadd.f32 %v194, %v547
    %v549 = vpop.f32.mrf.mxu0
    %550 = vmatprep.mubr.f32.mxu0 0.0
    %551 = vmatmul.mubr.f32.gmra.mxu0 %v456
    %v552 = vpop.f32.mrf.mxu0
    %v553 = vadd.f32 %v195, %v552
    %v554 = vpop.f32.mrf.mxu0
    %555 = vmatprep.mubr.f32.mxu0 0.0
    %556 = vmatmul.mubr.f32.gmra.mxu0 %v458
    %v557 = vpop.f32.mrf.mxu0
    %v558 = vadd.f32 %v196, %v557
    %v559 = vpop.f32.mrf.mxu0
    %560 = vmatprep.mubr.f32.mxu0 0.0
    %561 = vmatmul.mubr.f32.gmra.mxu0 %v460
    %v562 = vpop.f32.mrf.mxu0
    %v563 = vadd.f32 %v197, %v562
    %v564 = vpop.f32.mrf.mxu0
    %565 = vmatprep.mubr.f32.mxu0 0.0
    %566 = vmatmul.mubr.f32.gmra.mxu0 %v462
    %v567 = vpop.f32.mrf.mxu0
    %v568 = vadd.f32 %v198, %v567
    %v569 = vpop.f32.mrf.mxu0
    %570 = vdwg.mxu0
    %v571 = vsel %vm79, %v543, -inf
    %572 = vmax.xlane.f32.xlu0 %v571
    %v573 = vpop.xlane.xlu0 %572
    %v574 = vsel %vm79, %v548, -inf
    %575 = vmax.xlane.f32.xlu0 %v574
    %v576 = vpop.xlane.xlu0 %575
    %v577 = vsel %vm79, %v553, -inf
    %578 = vmax.xlane.f32.xlu0 %v577
    %v579 = vpop.xlane.xlu0 %578
    %v580 = vsel %vm79, %v558, -inf
    %581 = vmax.xlane.f32.xlu0 %v580
    %v582 = vpop.xlane.xlu0 %581
    %v583 = vsel %vm79, %v563, -inf
    %584 = vmax.xlane.f32.xlu0 %v583
    %v585 = vpop.xlane.xlu0 %584
    %v586 = vsel %vm79, %v568, -inf
    %587 = vmax.xlane.f32.xlu0 %v586
    %v588 = vpop.xlane.xlu0 %587
    %v589 = vsub.f32 %v543, %v573
    %v590 = vsub.f32 %v548, %v576
    %v591 = vsub.f32 %v553, %v579
    %v592 = vsub.f32 %v558, %v582
    %v593 = vsub.f32 %v563, %v585
    %v594 = vsub.f32 %v568, %v588
    %v595 = vmul.f32 %v589, 1.442695
    %v596 = vpow.pop %v595
    %v597 = vmul.f32 %v590, 1.442695
    %v598 = vpow.pop %v597
    %v599 = vmul.f32 %v591, 1.442695
    %v600 = vpow.pop %v599
    %v601 = vmul.f32 %v592, 1.442695
    %v602 = vpow.pop %v601
    %v603 = vmul.f32 %v593, 1.442695
    %v604 = vpow.pop %v603
    %v605 = vmul.f32 %v594, 1.442695
    %v606 = vpow.pop %v605
    %v607 = vsel %vm79, %v596, 0.0
    %608 = vadd.xlane.f32.xlu0 %v607
    %v609 = vpop.xlane.xlu0 %608
    %v610 = vsel %vm79, %v598, 0.0
    %611 = vadd.xlane.f32.xlu0 %v610
    %v612 = vpop.xlane.xlu0 %611
    %v613 = vsel %vm79, %v600, 0.0
    %614 = vadd.xlane.f32.xlu0 %v613
    %v615 = vpop.xlane.xlu0 %614
    %v616 = vsel %vm79, %v602, 0.0
    %617 = vadd.xlane.f32.xlu0 %v616
    %v618 = vpop.xlane.xlu0 %617
    %v619 = vsel %vm79, %v604, 0.0
    %620 = vadd.xlane.f32.xlu0 %v619
    %v621 = vpop.xlane.xlu0 %620
    %v622 = vsel %vm79, %v606, 0.0
    %623 = vadd.xlane.f32.xlu0 %v622
    %v624 = vpop.xlane.xlu0 %623
    %625 = vrot.lane.b32.xlu0 %v401, 64
    %v626 = vpop.permute.xlu0 %625
    %627 = vrot.lane.b32.xlu0 %v406, 64
    %v628 = vpop.permute.xlu0 %627
    %629 = vrot.lane.b32.xlu0 %v411, 64
    %v630 = vpop.permute.xlu0 %629
    %631 = vrot.lane.b32.xlu0 %v416, 64
    %v632 = vpop.permute.xlu0 %631
    %633 = vrot.lane.b32.xlu0 %v421, 64
    %v634 = vpop.permute.xlu0 %633
    %635 = vrot.lane.b32.xlu0 %v426, 64
    %v636 = vpop.permute.xlu0 %635
    %v644 = vsel %vm79, %v596, 0
    %v647 = vsel %vm79, %v598, 0
    %v650 = vsel %vm79, %v600, 0
    %v653 = vsel %vm79, %v602, 0
    %v656 = vsel %vm79, %v604, 0
    %v659 = vsel %vm79, %v606, 0
    %661 = vmatprep.subr.mxu0 0.0
    %662 = vmatpush1.msra.mxu0 0.0
    %663 = vmatprep.subr.mxu0 0.0
    %664 = vmatpush1.msra.mxu0 0.0
    %665 = vmatprep.subr.mxu0 0.0
    %666 = vmatpush1.msra.mxu0 0.0
    %667 = vmatprep.subr.mxu0 0.0
    %668 = vmatpush1.msra.mxu0 0.0
    %669 = vmatprep.subr.mxu0 0.0
    %670 = vmatpush1.msra.mxu0 0.0
    %671 = vmatprep.subr.mxu0 0.0
    %672 = vmatpush1.msra.mxu0 0.0
    %673 = vmatprep.subr.mxu0 0.0
    %674 = vmatpush1.msra.mxu0 0.0
    %675 = vmatprep.subr.mxu0 0.0
    %676 = vmatpush1.msra.mxu0 0.0
    %677 = vmatprep.subr.mxu0 0.0
    %678 = vmatpush1.msra.mxu0 0.0
    %679 = vmatprep.subr.mxu0 0.0
    %680 = vmatpush1.msra.mxu0 0.0
    %681 = vmatprep.subr.mxu0 0.0
    %682 = vmatpush1.msra.mxu0 %v636
    %683 = vmatprep.subr.mxu0 0.0
    %684 = vmatpush1.msra.mxu0 %v634
    %685 = vmatprep.subr.mxu0 0.0
    %686 = vmatpush1.msra.mxu0 %v632
    %687 = vmatprep.subr.mxu0 0.0
    %688 = vmatpush1.msra.mxu0 %v630
    %689 = vmatprep.subr.mxu0 0.0
    %690 = vmatpush1.msra.mxu0 %v628
    %691 = vmatprep.subr.mxu0 0.0
    %692 = vmatpush1.msra.mxu0 %v626
    %693 = vmatprep.subr.mxu0 0.0
    %694 = vmatpush2.msra.mxu0 0.0
    %695 = vmatprep.subr.mxu0 0.0
    %696 = vmatpush2.msra.mxu0 0.0
    %697 = vmatprep.subr.mxu0 0.0
    %698 = vmatpush2.msra.mxu0 0.0
    %699 = vmatprep.subr.mxu0 0.0
    %700 = vmatpush2.msra.mxu0 0.0
    %701 = vmatprep.subr.mxu0 0.0
    %702 = vmatpush2.msra.mxu0 0.0
    %703 = vmatprep.subr.mxu0 0.0
    %704 = vmatpush2.msra.mxu0 0.0
    %705 = vmatprep.subr.mxu0 0.0
    %706 = vmatpush2.msra.mxu0 0.0
    %707 = vmatprep.subr.mxu0 0.0
    %708 = vmatpush2.msra.mxu0 0.0
    %709 = vmatprep.subr.mxu0 0.0
    %710 = vmatpush2.msra.mxu0 0.0
    %711 = vmatprep.subr.mxu0 0.0
    %712 = vmatpush2.msra.mxu0 0.0
    %713 = vmatprep.subr.mxu0 0.0
    %714 = vmatpush2.msra.mxu0 0.0
    %715 = vmatprep.subr.mxu0 0.0
    %716 = vmatpush2.msra.mxu0 0.0
    %717 = vmatprep.subr.mxu0 0.0
    %718 = vmatpush2.msra.mxu0 0.0
    %719 = vmatprep.subr.mxu0 0.0
    %720 = vmatpush2.msra.mxu0 0.0
    %721 = vmatprep.subr.mxu0 0.0
    %722 = vmatpush2.msra.mxu0 0.0
    %723 = vmatprep.subr.mxu0 0.0
    %724 = vmatpush2.msra.mxu0 0.0
    %725 = vmatprep.mubr.f32.mxu0 0.0
    %726 = vmatmul.mubr.f32.gmra.mxu0 %v644
    %v727 = vpop.f32.mrf.mxu0
    %v728 = vadd.f32 0.0, %v727
    %v729 = vpop.f32.mrf.mxu0
    %730 = vmatprep.mubr.f32.mxu0 0.0
    %731 = vmatmul.mubr.f32.gmra.mxu0 %v647
    %v732 = vpop.f32.mrf.mxu0
    %v733 = vadd.f32 0.0, %v732
    %v734 = vpop.f32.mrf.mxu0
    %735 = vmatprep.mubr.f32.mxu0 0.0
    %736 = vmatmul.mubr.f32.gmra.mxu0 %v650
    %v737 = vpop.f32.mrf.mxu0
    %v738 = vadd.f32 0.0, %v737
    %v739 = vpop.f32.mrf.mxu0
    %740 = vmatprep.mubr.f32.mxu0 0.0
    %741 = vmatmul.mubr.f32.gmra.mxu0 %v653
    %v742 = vpop.f32.mrf.mxu0
    %v743 = vadd.f32 0.0, %v742
    %v744 = vpop.f32.mrf.mxu0
    %745 = vmatprep.mubr.f32.mxu0 0.0
    %746 = vmatmul.mubr.f32.gmra.mxu0 %v656
    %v747 = vpop.f32.mrf.mxu0
    %v748 = vadd.f32 0.0, %v747
    %v749 = vpop.f32.mrf.mxu0
    %750 = vmatprep.mubr.f32.mxu0 0.0
    %751 = vmatmul.mubr.f32.gmra.mxu0 %v659
    %v752 = vpop.f32.mrf.mxu0
    %v753 = vadd.f32 0.0, %v752
    %v754 = vpop.f32.mrf.mxu0
    %755 = vdwg.mxu0
    %v756 = vrcp.pop %v609
    %v757 = vrcp.pop %v612
    %v758 = vrcp.pop %v615
    %v759 = vrcp.pop %v618
    %v760 = vrcp.pop %v621
    %v761 = vrcp.pop %v624
    %v762 = vmul.f32 %v728, %v756
    %v763 = vmul.f32 %v733, %v757
    %v764 = vmul.f32 %v738, %v758
    %v765 = vmul.f32 %v743, %v759
    %v766 = vmul.f32 %v748, %v760
    %v767 = vmul.f32 %v753, %v761
    %768 = vrot.lane.b32.xlu0 %v401, 120
    %v769 = vpop.permute.xlu0 %768
    %770 = vrot.lane.b32.xlu0 %v406, 120
    %v771 = vpop.permute.xlu0 %770
    %772 = vrot.lane.b32.xlu0 %v411, 120
    %v773 = vpop.permute.xlu0 %772
    %774 = vrot.lane.b32.xlu0 %v416, 120
    %v775 = vpop.permute.xlu0 %774
    %776 = vrot.lane.b32.xlu0 %v421, 120
    %v777 = vpop.permute.xlu0 %776
    %778 = vrot.lane.b32.xlu0 %v426, 120
    %v779 = vpop.permute.xlu0 %778
    %780 = vrot.lane.b32.xlu0 %v401, 88
    %v781 = vpop.permute.xlu0 %780
    %782 = vrot.lane.b32.xlu0 %v406, 88
    %v783 = vpop.permute.xlu0 %782
    %784 = vrot.lane.b32.xlu0 %v411, 88
    %v785 = vpop.permute.xlu0 %784
    %786 = vrot.lane.b32.xlu0 %v416, 88
    %v787 = vpop.permute.xlu0 %786
    %788 = vrot.lane.b32.xlu0 %v421, 88
    %v789 = vpop.permute.xlu0 %788
    %790 = vrot.lane.b32.xlu0 %v426, 88
    %v791 = vpop.permute.xlu0 %790
    %v792 = vsel %vm451, %v769, 0
    %v794 = vsel %vm451, %v771, 0
    %v796 = vsel %vm451, %v773, 0
    %v798 = vsel %vm451, %v775, 0
    %v800 = vsel %vm451, %v777, 0
    %v802 = vsel %vm451, %v779, 0
    %v804 = vsel %vm451, %v781, 0
    %v806 = vsel %vm451, %v783, 0
    %v808 = vsel %vm451, %v785, 0
    %v810 = vsel %vm451, %v787, 0
    %v812 = vsel %vm451, %v789, 0
    %v814 = vsel %vm451, %v791, 0
    %816 = vmatprep.subr.mxu0 0.0
    %817 = vmatpush1.xpose.msra.mxu0 0.0
    %818 = vmatprep.subr.mxu0 0.0
    %819 = vmatpush1.xpose.msra.mxu0 0.0
    %820 = vmatprep.subr.mxu0 0.0
    %821 = vmatpush1.xpose.msra.mxu0 0.0
    %822 = vmatprep.subr.mxu0 0.0
    %823 = vmatpush1.xpose.msra.mxu0 0.0
    %824 = vmatprep.subr.mxu0 0.0
    %825 = vmatpush1.xpose.msra.mxu0 0.0
    %826 = vmatprep.subr.mxu0 0.0
    %827 = vmatpush1.xpose.msra.mxu0 0.0
    %828 = vmatprep.subr.mxu0 0.0
    %829 = vmatpush1.xpose.msra.mxu0 0.0
    %830 = vmatprep.subr.mxu0 0.0
    %831 = vmatpush1.xpose.msra.mxu0 0.0
    %832 = vmatprep.subr.mxu0 0.0
    %833 = vmatpush1.xpose.msra.mxu0 0.0
    %834 = vmatprep.subr.mxu0 0.0
    %835 = vmatpush1.xpose.msra.mxu0 0.0
    %836 = vmatprep.subr.mxu0 0.0
    %837 = vmatpush1.xpose.msra.mxu0 %v814
    %838 = vmatprep.subr.mxu0 0.0
    %839 = vmatpush1.xpose.msra.mxu0 %v812
    %840 = vmatprep.subr.mxu0 0.0
    %841 = vmatpush1.xpose.msra.mxu0 %v810
    %842 = vmatprep.subr.mxu0 0.0
    %843 = vmatpush1.xpose.msra.mxu0 %v808
    %844 = vmatprep.subr.mxu0 0.0
    %845 = vmatpush1.xpose.msra.mxu0 %v806
    %846 = vmatprep.subr.mxu0 0.0
    %847 = vmatpush1.xpose.msra.mxu0 %v804
    %848 = vmatprep.subr.mxu0 0.0
    %849 = vmatpush2.xpose.msra.mxu0 0.0
    %850 = vmatprep.subr.mxu0 0.0
    %851 = vmatpush2.xpose.msra.mxu0 0.0
    %852 = vmatprep.subr.mxu0 0.0
    %853 = vmatpush2.xpose.msra.mxu0 0.0
    %854 = vmatprep.subr.mxu0 0.0
    %855 = vmatpush2.xpose.msra.mxu0 0.0
    %856 = vmatprep.subr.mxu0 0.0
    %857 = vmatpush2.xpose.msra.mxu0 0.0
    %858 = vmatprep.subr.mxu0 0.0
    %859 = vmatpush2.xpose.msra.mxu0 0.0
    %860 = vmatprep.subr.mxu0 0.0
    %861 = vmatpush2.xpose.msra.mxu0 0.0
    %862 = vmatprep.subr.mxu0 0.0
    %863 = vmatpush2.xpose.msra.mxu0 0.0
    %864 = vmatprep.subr.mxu0 0.0
    %865 = vmatpush2.xpose.msra.mxu0 0.0
    %866 = vmatprep.subr.mxu0 0.0
    %867 = vmatpush2.xpose.msra.mxu0 0.0
    %868 = vmatprep.subr.mxu0 0.0
    %869 = vmatpush2.xpose.msra.mxu0 0.0
    %870 = vmatprep.subr.mxu0 0.0
    %871 = vmatpush2.xpose.msra.mxu0 0.0
    %872 = vmatprep.subr.mxu0 0.0
    %873 = vmatpush2.xpose.msra.mxu0 0.0
    %874 = vmatprep.subr.mxu0 0.0
    %875 = vmatpush2.xpose.msra.mxu0 0.0
    %876 = vmatprep.subr.mxu0 0.0
    %877 = vmatpush2.xpose.msra.mxu0 0.0
    %878 = vmatprep.subr.mxu0 0.0
    %879 = vmatpush2.xpose.msra.mxu0 0.0
    %880 = vmatprep.mubr.f32.mxu0 0.0
    %881 = vmatmul.mubr.f32.gmra.mxu0 %v792
    %v882 = vpop.f32.mrf.mxu0
    %v883 = vadd.f32 %v193, %v882
    %v884 = vpop.f32.mrf.mxu0
    %885 = vmatprep.mubr.f32.mxu0 0.0
    %886 = vmatmul.mubr.f32.gmra.mxu0 %v794
    %v887 = vpop.f32.mrf.mxu0
    %v888 = vadd.f32 %v194, %v887
    %v889 = vpop.f32.mrf.mxu0
    %890 = vmatprep.mubr.f32.mxu0 0.0
    %891 = vmatmul.mubr.f32.gmra.mxu0 %v796
    %v892 = vpop.f32.mrf.mxu0
    %v893 = vadd.f32 %v195, %v892
    %v894 = vpop.f32.mrf.mxu0
    %895 = vmatprep.mubr.f32.mxu0 0.0
    %896 = vmatmul.mubr.f32.gmra.mxu0 %v798
    %v897 = vpop.f32.mrf.mxu0
    %v898 = vadd.f32 %v196, %v897
    %v899 = vpop.f32.mrf.mxu0
    %900 = vmatprep.mubr.f32.mxu0 0.0
    %901 = vmatmul.mubr.f32.gmra.mxu0 %v800
    %v902 = vpop.f32.mrf.mxu0
    %v903 = vadd.f32 %v197, %v902
    %v904 = vpop.f32.mrf.mxu0
    %905 = vmatprep.mubr.f32.mxu0 0.0
    %906 = vmatmul.mubr.f32.gmra.mxu0 %v802
    %v907 = vpop.f32.mrf.mxu0
    %v908 = vadd.f32 %v198, %v907
    %v909 = vpop.f32.mrf.mxu0
    %910 = vdwg.mxu0
    %v911 = vsel %vm79, %v883, -inf
    %912 = vmax.xlane.f32.xlu0 %v911
    %v913 = vpop.xlane.xlu0 %912
    %v914 = vsel %vm79, %v888, -inf
    %915 = vmax.xlane.f32.xlu0 %v914
    %v916 = vpop.xlane.xlu0 %915
    %v917 = vsel %vm79, %v893, -inf
    %918 = vmax.xlane.f32.xlu0 %v917
    %v919 = vpop.xlane.xlu0 %918
    %v920 = vsel %vm79, %v898, -inf
    %921 = vmax.xlane.f32.xlu0 %v920
    %v922 = vpop.xlane.xlu0 %921
    %v923 = vsel %vm79, %v903, -inf
    %924 = vmax.xlane.f32.xlu0 %v923
    %v925 = vpop.xlane.xlu0 %924
    %v926 = vsel %vm79, %v908, -inf
    %927 = vmax.xlane.f32.xlu0 %v926
    %v928 = vpop.xlane.xlu0 %927
    %v929 = vsub.f32 %v883, %v913
    %v930 = vsub.f32 %v888, %v916
    %v931 = vsub.f32 %v893, %v919
    %v932 = vsub.f32 %v898, %v922
    %v933 = vsub.f32 %v903, %v925
    %v934 = vsub.f32 %v908, %v928
    %v935 = vmul.f32 %v929, 1.442695
    %v936 = vpow.pop %v935
    %v937 = vmul.f32 %v930, 1.442695
    %v938 = vpow.pop %v937
    %v939 = vmul.f32 %v931, 1.442695
    %v940 = vpow.pop %v939
    %v941 = vmul.f32 %v932, 1.442695
    %v942 = vpow.pop %v941
    %v943 = vmul.f32 %v933, 1.442695
    %v944 = vpow.pop %v943
    %v945 = vmul.f32 %v934, 1.442695
    %v946 = vpow.pop %v945
    %v947 = vsel %vm79, %v936, 0.0
    %948 = vadd.xlane.f32.xlu0 %v947
    %v949 = vpop.xlane.xlu0 %948
    %v950 = vsel %vm79, %v938, 0.0
    %951 = vadd.xlane.f32.xlu0 %v950
    %v952 = vpop.xlane.xlu0 %951
    %v953 = vsel %vm79, %v940, 0.0
    %954 = vadd.xlane.f32.xlu0 %v953
    %v955 = vpop.xlane.xlu0 %954
    %v956 = vsel %vm79, %v942, 0.0
    %957 = vadd.xlane.f32.xlu0 %v956
    %v958 = vpop.xlane.xlu0 %957
    %v959 = vsel %vm79, %v944, 0.0
    %960 = vadd.xlane.f32.xlu0 %v959
    %v961 = vpop.xlane.xlu0 %960
    %v962 = vsel %vm79, %v946, 0.0
    %963 = vadd.xlane.f32.xlu0 %v962
    %v964 = vpop.xlane.xlu0 %963
    %965 = vrot.lane.b32.xlu0 %v401, 56
    %v966 = vpop.permute.xlu0 %965
    %967 = vrot.lane.b32.xlu0 %v406, 56
    %v968 = vpop.permute.xlu0 %967
    %969 = vrot.lane.b32.xlu0 %v411, 56
    %v970 = vpop.permute.xlu0 %969
    %971 = vrot.lane.b32.xlu0 %v416, 56
    %v972 = vpop.permute.xlu0 %971
    %973 = vrot.lane.b32.xlu0 %v421, 56
    %v974 = vpop.permute.xlu0 %973
    %975 = vrot.lane.b32.xlu0 %v426, 56
    %v976 = vpop.permute.xlu0 %975
    %v984 = vsel %vm79, %v936, 0
    %v987 = vsel %vm79, %v938, 0
    %v990 = vsel %vm79, %v940, 0
    %v993 = vsel %vm79, %v942, 0
    %v996 = vsel %vm79, %v944, 0
    %v999 = vsel %vm79, %v946, 0
    %1001 = vmatprep.subr.mxu0 0.0
    %1002 = vmatpush1.msra.mxu0 0.0
    %1003 = vmatprep.subr.mxu0 0.0
    %1004 = vmatpush1.msra.mxu0 0.0
    %1005 = vmatprep.subr.mxu0 0.0
    %1006 = vmatpush1.msra.mxu0 0.0
    %1007 = vmatprep.subr.mxu0 0.0
    %1008 = vmatpush1.msra.mxu0 0.0
    %1009 = vmatprep.subr.mxu0 0.0
    %1010 = vmatpush1.msra.mxu0 0.0
    %1011 = vmatprep.subr.mxu0 0.0
    %1012 = vmatpush1.msra.mxu0 0.0
    %1013 = vmatprep.subr.mxu0 0.0
    %1014 = vmatpush1.msra.mxu0 0.0
    %1015 = vmatprep.subr.mxu0 0.0
    %1016 = vmatpush1.msra.mxu0 0.0
    %1017 = vmatprep.subr.mxu0 0.0
    %1018 = vmatpush1.msra.mxu0 0.0
    %1019 = vmatprep.subr.mxu0 0.0
    %1020 = vmatpush1.msra.mxu0 0.0
    %1021 = vmatprep.subr.mxu0 0.0
    %1022 = vmatpush1.msra.mxu0 %v976
    %1023 = vmatprep.subr.mxu0 0.0
    %1024 = vmatpush1.msra.mxu0 %v974
    %1025 = vmatprep.subr.mxu0 0.0
    %1026 = vmatpush1.msra.mxu0 %v972
    %1027 = vmatprep.subr.mxu0 0.0
    %1028 = vmatpush1.msra.mxu0 %v970
    %1029 = vmatprep.subr.mxu0 0.0
    %1030 = vmatpush1.msra.mxu0 %v968
    %1031 = vmatprep.subr.mxu0 0.0
    %1032 = vmatpush1.msra.mxu0 %v966
    %1033 = vmatprep.subr.mxu0 0.0
    %1034 = vmatpush2.msra.mxu0 0.0
    %1035 = vmatprep.subr.mxu0 0.0
    %1036 = vmatpush2.msra.mxu0 0.0
    %1037 = vmatprep.subr.mxu0 0.0
    %1038 = vmatpush2.msra.mxu0 0.0
    %1039 = vmatprep.subr.mxu0 0.0
    %1040 = vmatpush2.msra.mxu0 0.0
    %1041 = vmatprep.subr.mxu0 0.0
    %1042 = vmatpush2.msra.mxu0 0.0
    %1043 = vmatprep.subr.mxu0 0.0
    %1044 = vmatpush2.msra.mxu0 0.0
    %1045 = vmatprep.subr.mxu0 0.0
    %1046 = vmatpush2.msra.mxu0 0.0
    %1047 = vmatprep.subr.mxu0 0.0
    %1048 = vmatpush2.msra.mxu0 0.0
    %1049 = vmatprep.subr.mxu0 0.0
    %1050 = vmatpush2.msra.mxu0 0.0
    %1051 = vmatprep.subr.mxu0 0.0
    %1052 = vmatpush2.msra.mxu0 0.0
    %1053 = vmatprep.subr.mxu0 0.0
    %1054 = vmatpush2.msra.mxu0 0.0
    %1055 = vmatprep.subr.mxu0 0.0
    %1056 = vmatpush2.msra.mxu0 0.0
    %1057 = vmatprep.subr.mxu0 0.0
    %1058 = vmatpush2.msra.mxu0 0.0
    %1059 = vmatprep.subr.mxu0 0.0
    %1060 = vmatpush2.msra.mxu0 0.0
    %1061 = vmatprep.subr.mxu0 0.0
    %1062 = vmatpush2.msra.mxu0 0.0
    %1063 = vmatprep.subr.mxu0 0.0
    %1064 = vmatpush2.msra.mxu0 0.0
    %1065 = vmatprep.mubr.f32.mxu0 0.0
    %1066 = vmatmul.mubr.f32.gmra.mxu0 %v984
    %v1067 = vpop.f32.mrf.mxu0
    %v1068 = vadd.f32 0.0, %v1067
    %v1069 = vpop.f32.mrf.mxu0
    %1070 = vmatprep.mubr.f32.mxu0 0.0
    %1071 = vmatmul.mubr.f32.gmra.mxu0 %v987
    %v1072 = vpop.f32.mrf.mxu0
    %v1073 = vadd.f32 0.0, %v1072
    %v1074 = vpop.f32.mrf.mxu0
    %1075 = vmatprep.mubr.f32.mxu0 0.0
    %1076 = vmatmul.mubr.f32.gmra.mxu0 %v990
    %v1077 = vpop.f32.mrf.mxu0
    %v1078 = vadd.f32 0.0, %v1077
    %v1079 = vpop.f32.mrf.mxu0
    %1080 = vmatprep.mubr.f32.mxu0 0.0
    %1081 = vmatmul.mubr.f32.gmra.mxu0 %v993
    %v1082 = vpop.f32.mrf.mxu0
    %v1083 = vadd.f32 0.0, %v1082
    %v1084 = vpop.f32.mrf.mxu0
    %1085 = vmatprep.mubr.f32.mxu0 0.0
    %1086 = vmatmul.mubr.f32.gmra.mxu0 %v996
    %v1087 = vpop.f32.mrf.mxu0
    %v1088 = vadd.f32 0.0, %v1087
    %v1089 = vpop.f32.mrf.mxu0
    %1090 = vmatprep.mubr.f32.mxu0 0.0
    %1091 = vmatmul.mubr.f32.gmra.mxu0 %v999
    %v1092 = vpop.f32.mrf.mxu0
    %v1093 = vadd.f32 0.0, %v1092
    %v1094 = vpop.f32.mrf.mxu0
    %1095 = vdwg.mxu0
    %v1096 = vrcp.pop %v949
    %v1097 = vrcp.pop %v952
    %v1098 = vrcp.pop %v955
    %v1099 = vrcp.pop %v958
    %v1100 = vrcp.pop %v961
    %v1101 = vrcp.pop %v964
    %v1102 = vmul.f32 %v1068, %v1096
    %v1103 = vmul.f32 %v1073, %v1097
    %v1104 = vmul.f32 %v1078, %v1098
    %v1105 = vmul.f32 %v1083, %v1099
    %v1106 = vmul.f32 %v1088, %v1100
    %v1107 = vmul.f32 %v1093, %v1101
    %v1109 = vsel %vm451, %v1102, 0
    %v1112 = vsel %vm451, %v1103, 0
    %v1115 = vsel %vm451, %v1104, 0
    %v1118 = vsel %vm451, %v1105, 0
    %v1121 = vsel %vm451, %v1106, 0
    %v1124 = vsel %vm451, %v1107, 0
    %1126 = vmatprep.subr.mxu0 0.0
    %1127 = vmatpush1.msra.mxu0 0.0
    %1128 = vmatprep.subr.mxu0 0.0
    %1129 = vmatpush1.msra.mxu0 0.0
    %1130 = vmatprep.subr.mxu0 0.0
    %1131 = vmatpush1.msra.mxu0 0.0
    %1132 = vmatprep.subr.mxu0 0.0
    %1133 = vmatpush1.msra.mxu0 0.0
    %1134 = vmatprep.subr.mxu0 0.0
    %1135 = vmatpush1.msra.mxu0 0.0
    %1136 = vmatprep.subr.mxu0 0.0
    %1137 = vmatpush1.msra.mxu0 0.0
    %1138 = vmatprep.subr.mxu0 0.0
    %1139 = vmatpush1.msra.mxu0 0.0
    %1140 = vmatprep.subr.mxu0 0.0
    %1141 = vmatpush1.msra.mxu0 0.0
    %1142 = vmatprep.subr.mxu0 0.0
    %1143 = vmatpush1.msra.mxu0 0.0
    %1144 = vmatprep.subr.mxu0 0.0
    %1145 = vmatpush1.msra.mxu0 0.0
    %1146 = vmatprep.subr.mxu0 0.0
    %1147 = vmatpush1.msra.mxu0 0.0
    %1148 = vmatprep.subr.mxu0 0.0
    %1149 = vmatpush1.msra.mxu0 0.0
    %1150 = vmatprep.subr.mxu0 0.0
    %1151 = vmatpush1.msra.mxu0 0.0
    %1152 = vmatprep.subr.mxu0 0.0
    %1153 = vmatpush1.msra.mxu0 0.0
    %1154 = vmatprep.subr.mxu0 0.0
    %1155 = vmatpush1.msra.mxu0 0.0
    %1156 = vmatprep.subr.mxu0 0.0
    %1157 = vmatpush1.msra.mxu0 %v430
    %1158 = vmatprep.subr.mxu0 0.0
    %1159 = vmatpush2.msra.mxu0 0.0
    %1160 = vmatprep.subr.mxu0 0.0
    %1161 = vmatpush2.msra.mxu0 0.0
    %1162 = vmatprep.subr.mxu0 0.0
    %1163 = vmatpush2.msra.mxu0 0.0
    %1164 = vmatprep.subr.mxu0 0.0
    %1165 = vmatpush2.msra.mxu0 0.0
    %1166 = vmatprep.subr.mxu0 0.0
    %1167 = vmatpush2.msra.mxu0 0.0
    %1168 = vmatprep.subr.mxu0 0.0
    %1169 = vmatpush2.msra.mxu0 0.0
    %1170 = vmatprep.subr.mxu0 0.0
    %1171 = vmatpush2.msra.mxu0 0.0
    %1172 = vmatprep.subr.mxu0 0.0
    %1173 = vmatpush2.msra.mxu0 0.0
    %1174 = vmatprep.subr.mxu0 0.0
    %1175 = vmatpush2.msra.mxu0 0.0
    %1176 = vmatprep.subr.mxu0 0.0
    %1177 = vmatpush2.msra.mxu0 0.0
    %1178 = vmatprep.subr.mxu0 0.0
    %1179 = vmatpush2.msra.mxu0 0.0
    %1180 = vmatprep.subr.mxu0 0.0
    %1181 = vmatpush2.msra.mxu0 0.0
    %1182 = vmatprep.subr.mxu0 0.0
    %1183 = vmatpush2.msra.mxu0 0.0
    %1184 = vmatprep.subr.mxu0 0.0
    %1185 = vmatpush2.msra.mxu0 0.0
    %1186 = vmatprep.subr.mxu0 0.0
    %1187 = vmatpush2.msra.mxu0 0.0
    %1188 = vmatprep.subr.mxu0 0.0
    %1189 = vmatpush2.msra.mxu0 0.0
    %1190 = vmatprep.mubr.f32.mxu0 0.0
    %1191 = vmatmul.mubr.f32.gmra.mxu0 %v1109
    %v1192 = vpop.f32.mrf.mxu0
    %v1193 = vadd.f32 0.0, %v1192
    %v1194 = vpop.f32.mrf.mxu0
    %1195 = vmatprep.mubr.f32.mxu0 0.0
    %1196 = vmatmul.mubr.f32.gmra.mxu0 %v1112
    %v1197 = vpop.f32.mrf.mxu0
    %v1198 = vadd.f32 0.0, %v1197
    %v1199 = vpop.f32.mrf.mxu0
    %1200 = vmatprep.mubr.f32.mxu0 0.0
    %1201 = vmatmul.mubr.f32.gmra.mxu0 %v1115
    %v1202 = vpop.f32.mrf.mxu0
    %v1203 = vadd.f32 0.0, %v1202
    %v1204 = vpop.f32.mrf.mxu0
    %1205 = vmatprep.mubr.f32.mxu0 0.0
    %1206 = vmatmul.mubr.f32.gmra.mxu0 %v1118
    %v1207 = vpop.f32.mrf.mxu0
    %v1208 = vadd.f32 0.0, %v1207
    %v1209 = vpop.f32.mrf.mxu0
    %1210 = vmatprep.mubr.f32.mxu0 0.0
    %1211 = vmatmul.mubr.f32.gmra.mxu0 %v1121
    %v1212 = vpop.f32.mrf.mxu0
    %v1213 = vadd.f32 0.0, %v1212
    %v1214 = vpop.f32.mrf.mxu0
    %1215 = vmatprep.mubr.f32.mxu0 0.0
    %1216 = vmatmul.mubr.f32.gmra.mxu0 %v1124
    %v1217 = vpop.f32.mrf.mxu0
    %v1218 = vadd.f32 0.0, %v1217
    %v1219 = vpop.f32.mrf.mxu0
    %1220 = vdwg.mxu0
    %v1222 = vsel %vm451, %v762, 0
    %v1225 = vsel %vm451, %v763, 0
    %v1228 = vsel %vm451, %v764, 0
    %v1231 = vsel %vm451, %v765, 0
    %v1234 = vsel %vm451, %v766, 0
    %v1237 = vsel %vm451, %v767, 0
    %1239 = vmatprep.subr.mxu0 0.0
    %1240 = vmatpush1.msra.mxu0 0.0
    %1241 = vmatprep.subr.mxu0 0.0
    %1242 = vmatpush1.msra.mxu0 0.0
    %1243 = vmatprep.subr.mxu0 0.0
    %1244 = vmatpush1.msra.mxu0 0.0
    %1245 = vmatprep.subr.mxu0 0.0
    %1246 = vmatpush1.msra.mxu0 0.0
    %1247 = vmatprep.subr.mxu0 0.0
    %1248 = vmatpush1.msra.mxu0 0.0
    %1249 = vmatprep.subr.mxu0 0.0
    %1250 = vmatpush1.msra.mxu0 0.0
    %1251 = vmatprep.subr.mxu0 0.0
    %1252 = vmatpush1.msra.mxu0 0.0
    %1253 = vmatprep.subr.mxu0 0.0
    %1254 = vmatpush1.msra.mxu0 0.0
    %1255 = vmatprep.subr.mxu0 0.0
    %1256 = vmatpush1.msra.mxu0 0.0
    %1257 = vmatprep.subr.mxu0 0.0
    %1258 = vmatpush1.msra.mxu0 0.0
    %1259 = vmatprep.subr.mxu0 0.0
    %1260 = vmatpush1.msra.mxu0 0.0
    %1261 = vmatprep.subr.mxu0 0.0
    %1262 = vmatpush1.msra.mxu0 0.0
    %1263 = vmatprep.subr.mxu0 0.0
    %1264 = vmatpush1.msra.mxu0 0.0
    %1265 = vmatprep.subr.mxu0 0.0
    %1266 = vmatpush1.msra.mxu0 0.0
    %1267 = vmatprep.subr.mxu0 0.0
    %1268 = vmatpush1.msra.mxu0 0.0
    %1269 = vmatprep.subr.mxu0 0.0
    %1270 = vmatpush1.msra.mxu0 %v429
    %1271 = vmatprep.subr.mxu0 0.0
    %1272 = vmatpush2.msra.mxu0 0.0
    %1273 = vmatprep.subr.mxu0 0.0
    %1274 = vmatpush2.msra.mxu0 0.0
    %1275 = vmatprep.subr.mxu0 0.0
    %1276 = vmatpush2.msra.mxu0 0.0
    %1277 = vmatprep.subr.mxu0 0.0
    %1278 = vmatpush2.msra.mxu0 0.0
    %1279 = vmatprep.subr.mxu0 0.0
    %1280 = vmatpush2.msra.mxu0 0.0
    %1281 = vmatprep.subr.mxu0 0.0
    %1282 = vmatpush2.msra.mxu0 0.0
    %1283 = vmatprep.subr.mxu0 0.0
    %1284 = vmatpush2.msra.mxu0 0.0
    %1285 = vmatprep.subr.mxu0 0.0
    %1286 = vmatpush2.msra.mxu0 0.0
    %1287 = vmatprep.subr.mxu0 0.0
    %1288 = vmatpush2.msra.mxu0 0.0
    %1289 = vmatprep.subr.mxu0 0.0
    %1290 = vmatpush2.msra.mxu0 0.0
    %1291 = vmatprep.subr.mxu0 0.0
    %1292 = vmatpush2.msra.mxu0 0.0
    %1293 = vmatprep.subr.mxu0 0.0
    %1294 = vmatpush2.msra.mxu0 0.0
    %1295 = vmatprep.subr.mxu0 0.0
    %1296 = vmatpush2.msra.mxu0 0.0
    %1297 = vmatprep.subr.mxu0 0.0
    %1298 = vmatpush2.msra.mxu0 0.0
    %1299 = vmatprep.subr.mxu0 0.0
    %1300 = vmatpush2.msra.mxu0 0.0
    %1301 = vmatprep.subr.mxu0 0.0
    %1302 = vmatpush2.msra.mxu0 0.0
    %1303 = vmatprep.mubr.f32.mxu0 0.0
    %1304 = vmatmul.mubr.f32.gmra.mxu0 %v1222
    %v1305 = vpop.f32.mrf.mxu0
    %v1306 = vadd.f32 %v1193, %v1305
    %v1307 = vpop.f32.mrf.mxu0
    %1308 = vmatprep.mubr.f32.mxu0 0.0
    %1309 = vmatmul.mubr.f32.gmra.mxu0 %v1225
    %v1310 = vpop.f32.mrf.mxu0
    %v1311 = vadd.f32 %v1198, %v1310
    %v1312 = vpop.f32.mrf.mxu0
    %1313 = vmatprep.mubr.f32.mxu0 0.0
    %1314 = vmatmul.mubr.f32.gmra.mxu0 %v1228
    %v1315 = vpop.f32.mrf.mxu0
    %v1316 = vadd.f32 %v1203, %v1315
    %v1317 = vpop.f32.mrf.mxu0
    %1318 = vmatprep.mubr.f32.mxu0 0.0
    %1319 = vmatmul.mubr.f32.gmra.mxu0 %v1231
    %v1320 = vpop.f32.mrf.mxu0
    %v1321 = vadd.f32 %v1208, %v1320
    %v1322 = vpop.f32.mrf.mxu0
    %1323 = vmatprep.mubr.f32.mxu0 0.0
    %1324 = vmatmul.mubr.f32.gmra.mxu0 %v1234
    %v1325 = vpop.f32.mrf.mxu0
    %v1326 = vadd.f32 %v1213, %v1325
    %v1327 = vpop.f32.mrf.mxu0
    %1328 = vmatprep.mubr.f32.mxu0 0.0
    %1329 = vmatmul.mubr.f32.gmra.mxu0 %v1237
    %v1330 = vpop.f32.mrf.mxu0
    %v1331 = vadd.f32 %v1218, %v1330
    %v1332 = vpop.f32.mrf.mxu0
    %1333 = vdwg.mxu0
    %1334 = vrot.lane.b32.xlu0 %v401, 112
    %v1335 = vpop.permute.xlu0 %1334
    %1336 = vrot.lane.b32.xlu0 %v406, 112
    %v1337 = vpop.permute.xlu0 %1336
    %1338 = vrot.lane.b32.xlu0 %v411, 112
    %v1339 = vpop.permute.xlu0 %1338
    %1340 = vrot.lane.b32.xlu0 %v416, 112
    %v1341 = vpop.permute.xlu0 %1340
    %1342 = vrot.lane.b32.xlu0 %v421, 112
    %v1343 = vpop.permute.xlu0 %1342
    %1344 = vrot.lane.b32.xlu0 %v426, 112
    %v1345 = vpop.permute.xlu0 %1344
    %1346 = vrot.lane.b32.xlu0 %v401, 80
    %v1347 = vpop.permute.xlu0 %1346
    %1348 = vrot.lane.b32.xlu0 %v406, 80
    %v1349 = vpop.permute.xlu0 %1348
    %1350 = vrot.lane.b32.xlu0 %v411, 80
    %v1351 = vpop.permute.xlu0 %1350
    %1352 = vrot.lane.b32.xlu0 %v416, 80
    %v1353 = vpop.permute.xlu0 %1352
    %1354 = vrot.lane.b32.xlu0 %v421, 80
    %v1355 = vpop.permute.xlu0 %1354
    %1356 = vrot.lane.b32.xlu0 %v426, 80
    %v1357 = vpop.permute.xlu0 %1356
    %v1358 = vsel %vm451, %v1335, 0
    %v1360 = vsel %vm451, %v1337, 0
    %v1362 = vsel %vm451, %v1339, 0
    %v1364 = vsel %vm451, %v1341, 0
    %v1366 = vsel %vm451, %v1343, 0
    %v1368 = vsel %vm451, %v1345, 0
    %v1370 = vsel %vm451, %v1347, 0
    %v1372 = vsel %vm451, %v1349, 0
    %v1374 = vsel %vm451, %v1351, 0
    %v1376 = vsel %vm451, %v1353, 0
    %v1378 = vsel %vm451, %v1355, 0
    %v1380 = vsel %vm451, %v1357, 0
    %1382 = vmatprep.subr.mxu0 0.0
    %1383 = vmatpush1.xpose.msra.mxu0 0.0
    %1384 = vmatprep.subr.mxu0 0.0
    %1385 = vmatpush1.xpose.msra.mxu0 0.0
    %1386 = vmatprep.subr.mxu0 0.0
    %1387 = vmatpush1.xpose.msra.mxu0 0.0
    %1388 = vmatprep.subr.mxu0 0.0
    %1389 = vmatpush1.xpose.msra.mxu0 0.0
    %1390 = vmatprep.subr.mxu0 0.0
    %1391 = vmatpush1.xpose.msra.mxu0 0.0
    %1392 = vmatprep.subr.mxu0 0.0
    %1393 = vmatpush1.xpose.msra.mxu0 0.0
    %1394 = vmatprep.subr.mxu0 0.0
    %1395 = vmatpush1.xpose.msra.mxu0 0.0
    %1396 = vmatprep.subr.mxu0 0.0
    %1397 = vmatpush1.xpose.msra.mxu0 0.0
    %1398 = vmatprep.subr.mxu0 0.0
    %1399 = vmatpush1.xpose.msra.mxu0 0.0
    %1400 = vmatprep.subr.mxu0 0.0
    %1401 = vmatpush1.xpose.msra.mxu0 0.0
    %1402 = vmatprep.subr.mxu0 0.0
    %1403 = vmatpush1.xpose.msra.mxu0 %v1380
    %1404 = vmatprep.subr.mxu0 0.0
    %1405 = vmatpush1.xpose.msra.mxu0 %v1378
    %1406 = vmatprep.subr.mxu0 0.0
    %1407 = vmatpush1.xpose.msra.mxu0 %v1376
    %1408 = vmatprep.subr.mxu0 0.0
    %1409 = vmatpush1.xpose.msra.mxu0 %v1374
    %1410 = vmatprep.subr.mxu0 0.0
    %1411 = vmatpush1.xpose.msra.mxu0 %v1372
    %1412 = vmatprep.subr.mxu0 0.0
    %1413 = vmatpush1.xpose.msra.mxu0 %v1370
    %1414 = vmatprep.subr.mxu0 0.0
    %1415 = vmatpush2.xpose.msra.mxu0 0.0
    %1416 = vmatprep.subr.mxu0 0.0
    %1417 = vmatpush2.xpose.msra.mxu0 0.0
    %1418 = vmatprep.subr.mxu0 0.0
    %1419 = vmatpush2.xpose.msra.mxu0 0.0
    %1420 = vmatprep.subr.mxu0 0.0
    %1421 = vmatpush2.xpose.msra.mxu0 0.0
    %1422 = vmatprep.subr.mxu0 0.0
    %1423 = vmatpush2.xpose.msra.mxu0 0.0
    %1424 = vmatprep.subr.mxu0 0.0
    %1425 = vmatpush2.xpose.msra.mxu0 0.0
    %1426 = vmatprep.subr.mxu0 0.0
    %1427 = vmatpush2.xpose.msra.mxu0 0.0
    %1428 = vmatprep.subr.mxu0 0.0
    %1429 = vmatpush2.xpose.msra.mxu0 0.0
    %1430 = vmatprep.subr.mxu0 0.0
    %1431 = vmatpush2.xpose.msra.mxu0 0.0
    %1432 = vmatprep.subr.mxu0 0.0
    %1433 = vmatpush2.xpose.msra.mxu0 0.0
    %1434 = vmatprep.subr.mxu0 0.0
    %1435 = vmatpush2.xpose.msra.mxu0 0.0
    %1436 = vmatprep.subr.mxu0 0.0
    %1437 = vmatpush2.xpose.msra.mxu0 0.0
    %1438 = vmatprep.subr.mxu0 0.0
    %1439 = vmatpush2.xpose.msra.mxu0 0.0
    %1440 = vmatprep.subr.mxu0 0.0
    %1441 = vmatpush2.xpose.msra.mxu0 0.0
    %1442 = vmatprep.subr.mxu0 0.0
    %1443 = vmatpush2.xpose.msra.mxu0 0.0
    %1444 = vmatprep.subr.mxu0 0.0
    %1445 = vmatpush2.xpose.msra.mxu0 0.0
    %1446 = vmatprep.mubr.f32.mxu0 0.0
    %1447 = vmatmul.mubr.f32.gmra.mxu0 %v1358
    %v1448 = vpop.f32.mrf.mxu0
    %v1449 = vadd.f32 %v193, %v1448
    %v1450 = vpop.f32.mrf.mxu0
    %1451 = vmatprep.mubr.f32.mxu0 0.0
    %1452 = vmatmul.mubr.f32.gmra.mxu0 %v1360
    %v1453 = vpop.f32.mrf.mxu0
    %v1454 = vadd.f32 %v194, %v1453
    %v1455 = vpop.f32.mrf.mxu0
    %1456 = vmatprep.mubr.f32.mxu0 0.0
    %1457 = vmatmul.mubr.f32.gmra.mxu0 %v1362
    %v1458 = vpop.f32.mrf.mxu0
    %v1459 = vadd.f32 %v195, %v1458
    %v1460 = vpop.f32.mrf.mxu0
    %1461 = vmatprep.mubr.f32.mxu0 0.0
    %1462 = vmatmul.mubr.f32.gmra.mxu0 %v1364
    %v1463 = vpop.f32.mrf.mxu0
    %v1464 = vadd.f32 %v196, %v1463
    %v1465 = vpop.f32.mrf.mxu0
    %1466 = vmatprep.mubr.f32.mxu0 0.0
    %1467 = vmatmul.mubr.f32.gmra.mxu0 %v1366
    %v1468 = vpop.f32.mrf.mxu0
    %v1469 = vadd.f32 %v197, %v1468
    %v1470 = vpop.f32.mrf.mxu0
    %1471 = vmatprep.mubr.f32.mxu0 0.0
    %1472 = vmatmul.mubr.f32.gmra.mxu0 %v1368
    %v1473 = vpop.f32.mrf.mxu0
    %v1474 = vadd.f32 %v198, %v1473
    %v1475 = vpop.f32.mrf.mxu0
    %1476 = vdwg.mxu0
    %v1477 = vsel %vm79, %v1449, -inf
    %1478 = vmax.xlane.f32.xlu0 %v1477
    %v1479 = vpop.xlane.xlu0 %1478
    %v1480 = vsel %vm79, %v1454, -inf
    %1481 = vmax.xlane.f32.xlu0 %v1480
    %v1482 = vpop.xlane.xlu0 %1481
    %v1483 = vsel %vm79, %v1459, -inf
    %1484 = vmax.xlane.f32.xlu0 %v1483
    %v1485 = vpop.xlane.xlu0 %1484
    %v1486 = vsel %vm79, %v1464, -inf
    %1487 = vmax.xlane.f32.xlu0 %v1486
    %v1488 = vpop.xlane.xlu0 %1487
    %v1489 = vsel %vm79, %v1469, -inf
    %1490 = vmax.xlane.f32.xlu0 %v1489
    %v1491 = vpop.xlane.xlu0 %1490
    %v1492 = vsel %vm79, %v1474, -inf
    %1493 = vmax.xlane.f32.xlu0 %v1492
    %v1494 = vpop.xlane.xlu0 %1493
    %v1495 = vsub.f32 %v1449, %v1479
    %v1496 = vsub.f32 %v1454, %v1482
    %v1497 = vsub.f32 %v1459, %v1485
    %v1498 = vsub.f32 %v1464, %v1488
    %v1499 = vsub.f32 %v1469, %v1491
    %v1500 = vsub.f32 %v1474, %v1494
    %v1501 = vmul.f32 %v1495, 1.442695
    %v1502 = vpow.pop %v1501
    %v1503 = vmul.f32 %v1496, 1.442695
    %v1504 = vpow.pop %v1503
    %v1505 = vmul.f32 %v1497, 1.442695
    %v1506 = vpow.pop %v1505
    %v1507 = vmul.f32 %v1498, 1.442695
    %v1508 = vpow.pop %v1507
    %v1509 = vmul.f32 %v1499, 1.442695
    %v1510 = vpow.pop %v1509
    %v1511 = vmul.f32 %v1500, 1.442695
    %v1512 = vpow.pop %v1511
    %v1513 = vsel %vm79, %v1502, 0.0
    %1514 = vadd.xlane.f32.xlu0 %v1513
    %v1515 = vpop.xlane.xlu0 %1514
    %v1516 = vsel %vm79, %v1504, 0.0
    %1517 = vadd.xlane.f32.xlu0 %v1516
    %v1518 = vpop.xlane.xlu0 %1517
    %v1519 = vsel %vm79, %v1506, 0.0
    %1520 = vadd.xlane.f32.xlu0 %v1519
    %v1521 = vpop.xlane.xlu0 %1520
    %v1522 = vsel %vm79, %v1508, 0.0
    %1523 = vadd.xlane.f32.xlu0 %v1522
    %v1524 = vpop.xlane.xlu0 %1523
    %v1525 = vsel %vm79, %v1510, 0.0
    %1526 = vadd.xlane.f32.xlu0 %v1525
    %v1527 = vpop.xlane.xlu0 %1526
    %v1528 = vsel %vm79, %v1512, 0.0
    %1529 = vadd.xlane.f32.xlu0 %v1528
    %v1530 = vpop.xlane.xlu0 %1529
    %1531 = vrot.lane.b32.xlu0 %v401, 48
    %v1532 = vpop.permute.xlu0 %1531
    %1533 = vrot.lane.b32.xlu0 %v406, 48
    %v1534 = vpop.permute.xlu0 %1533
    %1535 = vrot.lane.b32.xlu0 %v411, 48
    %v1536 = vpop.permute.xlu0 %1535
    %1537 = vrot.lane.b32.xlu0 %v416, 48
    %v1538 = vpop.permute.xlu0 %1537
    %1539 = vrot.lane.b32.xlu0 %v421, 48
    %v1540 = vpop.permute.xlu0 %1539
    %1541 = vrot.lane.b32.xlu0 %v426, 48
    %v1542 = vpop.permute.xlu0 %1541
    %v1550 = vsel %vm79, %v1502, 0
    %v1553 = vsel %vm79, %v1504, 0
    %v1556 = vsel %vm79, %v1506, 0
    %v1559 = vsel %vm79, %v1508, 0
    %v1562 = vsel %vm79, %v1510, 0
    %v1565 = vsel %vm79, %v1512, 0
    %1567 = vmatprep.subr.mxu0 0.0
    %1568 = vmatpush1.msra.mxu0 0.0
    %1569 = vmatprep.subr.mxu0 0.0
    %1570 = vmatpush1.msra.mxu0 0.0
    %1571 = vmatprep.subr.mxu0 0.0
    %1572 = vmatpush1.msra.mxu0 0.0
    %1573 = vmatprep.subr.mxu0 0.0
    %1574 = vmatpush1.msra.mxu0 0.0
    %1575 = vmatprep.subr.mxu0 0.0
    %1576 = vmatpush1.msra.mxu0 0.0
    %1577 = vmatprep.subr.mxu0 0.0
    %1578 = vmatpush1.msra.mxu0 0.0
    %1579 = vmatprep.subr.mxu0 0.0
    %1580 = vmatpush1.msra.mxu0 0.0
    %1581 = vmatprep.subr.mxu0 0.0
    %1582 = vmatpush1.msra.mxu0 0.0
    %1583 = vmatprep.subr.mxu0 0.0
    %1584 = vmatpush1.msra.mxu0 0.0
    %1585 = vmatprep.subr.mxu0 0.0
    %1586 = vmatpush1.msra.mxu0 0.0
    %1587 = vmatprep.subr.mxu0 0.0
    %1588 = vmatpush1.msra.mxu0 %v1542
    %1589 = vmatprep.subr.mxu0 0.0
    %1590 = vmatpush1.msra.mxu0 %v1540
    %1591 = vmatprep.subr.mxu0 0.0
    %1592 = vmatpush1.msra.mxu0 %v1538
    %1593 = vmatprep.subr.mxu0 0.0
    %1594 = vmatpush1.msra.mxu0 %v1536
    %1595 = vmatprep.subr.mxu0 0.0
    %1596 = vmatpush1.msra.mxu0 %v1534
    %1597 = vmatprep.subr.mxu0 0.0
    %1598 = vmatpush1.msra.mxu0 %v1532
    %1599 = vmatprep.subr.mxu0 0.0
    %1600 = vmatpush2.msra.mxu0 0.0
    %1601 = vmatprep.subr.mxu0 0.0
    %1602 = vmatpush2.msra.mxu0 0.0
    %1603 = vmatprep.subr.mxu0 0.0
    %1604 = vmatpush2.msra.mxu0 0.0
    %1605 = vmatprep.subr.mxu0 0.0
    %1606 = vmatpush2.msra.mxu0 0.0
    %1607 = vmatprep.subr.mxu0 0.0
    %1608 = vmatpush2.msra.mxu0 0.0
    %1609 = vmatprep.subr.mxu0 0.0
    %1610 = vmatpush2.msra.mxu0 0.0
    %1611 = vmatprep.subr.mxu0 0.0
    %1612 = vmatpush2.msra.mxu0 0.0
    %1613 = vmatprep.subr.mxu0 0.0
    %1614 = vmatpush2.msra.mxu0 0.0
    %1615 = vmatprep.subr.mxu0 0.0
    %1616 = vmatpush2.msra.mxu0 0.0
    %1617 = vmatprep.subr.mxu0 0.0
    %1618 = vmatpush2.msra.mxu0 0.0
    %1619 = vmatprep.subr.mxu0 0.0
    %1620 = vmatpush2.msra.mxu0 0.0
    %1621 = vmatprep.subr.mxu0 0.0
    %1622 = vmatpush2.msra.mxu0 0.0
    %1623 = vmatprep.subr.mxu0 0.0
    %1624 = vmatpush2.msra.mxu0 0.0
    %1625 = vmatprep.subr.mxu0 0.0
    %1626 = vmatpush2.msra.mxu0 0.0
    %1627 = vmatprep.subr.mxu0 0.0
    %1628 = vmatpush2.msra.mxu0 0.0
    %1629 = vmatprep.subr.mxu0 0.0
    %1630 = vmatpush2.msra.mxu0 0.0
    %1631 = vmatprep.mubr.f32.mxu0 0.0
    %1632 = vmatmul.mubr.f32.gmra.mxu0 %v1550
    %v1633 = vpop.f32.mrf.mxu0
    %v1634 = vadd.f32 0.0, %v1633
    %v1635 = vpop.f32.mrf.mxu0
    %1636 = vmatprep.mubr.f32.mxu0 0.0
    %1637 = vmatmul.mubr.f32.gmra.mxu0 %v1553
    %v1638 = vpop.f32.mrf.mxu0
    %v1639 = vadd.f32 0.0, %v1638
    %v1640 = vpop.f32.mrf.mxu0
    %1641 = vmatprep.mubr.f32.mxu0 0.0
    %1642 = vmatmul.mubr.f32.gmra.mxu0 %v1556
    %v1643 = vpop.f32.mrf.mxu0
    %v1644 = vadd.f32 0.0, %v1643
    %v1645 = vpop.f32.mrf.mxu0
    %1646 = vmatprep.mubr.f32.mxu0 0.0
    %1647 = vmatmul.mubr.f32.gmra.mxu0 %v1559
    %v1648 = vpop.f32.mrf.mxu0
    %v1649 = vadd.f32 0.0, %v1648
    %v1650 = vpop.f32.mrf.mxu0
    %1651 = vmatprep.mubr.f32.mxu0 0.0
    %1652 = vmatmul.mubr.f32.gmra.mxu0 %v1562
    %v1653 = vpop.f32.mrf.mxu0
    %v1654 = vadd.f32 0.0, %v1653
    %v1655 = vpop.f32.mrf.mxu0
    %1656 = vmatprep.mubr.f32.mxu0 0.0
    %1657 = vmatmul.mubr.f32.gmra.mxu0 %v1565
    %v1658 = vpop.f32.mrf.mxu0
    %v1659 = vadd.f32 0.0, %v1658
    %v1660 = vpop.f32.mrf.mxu0
    %1661 = vdwg.mxu0
    %v1662 = vrcp.pop %v1515
    %v1663 = vrcp.pop %v1518
    %v1664 = vrcp.pop %v1521
    %v1665 = vrcp.pop %v1524
    %v1666 = vrcp.pop %v1527
    %v1667 = vrcp.pop %v1530
    %v1668 = vmul.f32 %v1634, %v1662
    %v1669 = vmul.f32 %v1639, %v1663
    %v1670 = vmul.f32 %v1644, %v1664
    %v1671 = vmul.f32 %v1649, %v1665
    %v1672 = vmul.f32 %v1654, %v1666
    %v1673 = vmul.f32 %v1659, %v1667
    %v1675 = vsel %vm451, %v1668, 0
    %v1678 = vsel %vm451, %v1669, 0
    %v1681 = vsel %vm451, %v1670, 0
    %v1684 = vsel %vm451, %v1671, 0
    %v1687 = vsel %vm451, %v1672, 0
    %v1690 = vsel %vm451, %v1673, 0
    %1692 = vmatprep.subr.mxu0 0.0
    %1693 = vmatpush1.msra.mxu0 0.0
    %1694 = vmatprep.subr.mxu0 0.0
    %1695 = vmatpush1.msra.mxu0 0.0
    %1696 = vmatprep.subr.mxu0 0.0
    %1697 = vmatpush1.msra.mxu0 0.0
    %1698 = vmatprep.subr.mxu0 0.0
    %1699 = vmatpush1.msra.mxu0 0.0
    %1700 = vmatprep.subr.mxu0 0.0
    %1701 = vmatpush1.msra.mxu0 0.0
    %1702 = vmatprep.subr.mxu0 0.0
    %1703 = vmatpush1.msra.mxu0 0.0
    %1704 = vmatprep.subr.mxu0 0.0
    %1705 = vmatpush1.msra.mxu0 0.0
    %1706 = vmatprep.subr.mxu0 0.0
    %1707 = vmatpush1.msra.mxu0 0.0
    %1708 = vmatprep.subr.mxu0 0.0
    %1709 = vmatpush1.msra.mxu0 0.0
    %1710 = vmatprep.subr.mxu0 0.0
    %1711 = vmatpush1.msra.mxu0 0.0
    %1712 = vmatprep.subr.mxu0 0.0
    %1713 = vmatpush1.msra.mxu0 0.0
    %1714 = vmatprep.subr.mxu0 0.0
    %1715 = vmatpush1.msra.mxu0 0.0
    %1716 = vmatprep.subr.mxu0 0.0
    %1717 = vmatpush1.msra.mxu0 0.0
    %1718 = vmatprep.subr.mxu0 0.0
    %1719 = vmatpush1.msra.mxu0 0.0
    %1720 = vmatprep.subr.mxu0 0.0
    %1721 = vmatpush1.msra.mxu0 0.0
    %1722 = vmatprep.subr.mxu0 0.0
    %1723 = vmatpush1.msra.mxu0 %v431
    %1724 = vmatprep.subr.mxu0 0.0
    %1725 = vmatpush2.msra.mxu0 0.0
    %1726 = vmatprep.subr.mxu0 0.0
    %1727 = vmatpush2.msra.mxu0 0.0
    %1728 = vmatprep.subr.mxu0 0.0
    %1729 = vmatpush2.msra.mxu0 0.0
    %1730 = vmatprep.subr.mxu0 0.0
    %1731 = vmatpush2.msra.mxu0 0.0
    %1732 = vmatprep.subr.mxu0 0.0
    %1733 = vmatpush2.msra.mxu0 0.0
    %1734 = vmatprep.subr.mxu0 0.0
    %1735 = vmatpush2.msra.mxu0 0.0
    %1736 = vmatprep.subr.mxu0 0.0
    %1737 = vmatpush2.msra.mxu0 0.0
    %1738 = vmatprep.subr.mxu0 0.0
    %1739 = vmatpush2.msra.mxu0 0.0
    %1740 = vmatprep.subr.mxu0 0.0
    %1741 = vmatpush2.msra.mxu0 0.0
    %1742 = vmatprep.subr.mxu0 0.0
    %1743 = vmatpush2.msra.mxu0 0.0
    %1744 = vmatprep.subr.mxu0 0.0
    %1745 = vmatpush2.msra.mxu0 0.0
    %1746 = vmatprep.subr.mxu0 0.0
    %1747 = vmatpush2.msra.mxu0 0.0
    %1748 = vmatprep.subr.mxu0 0.0
    %1749 = vmatpush2.msra.mxu0 0.0
    %1750 = vmatprep.subr.mxu0 0.0
    %1751 = vmatpush2.msra.mxu0 0.0
    %1752 = vmatprep.subr.mxu0 0.0
    %1753 = vmatpush2.msra.mxu0 0.0
    %1754 = vmatprep.subr.mxu0 0.0
    %1755 = vmatpush2.msra.mxu0 0.0
    %1756 = vmatprep.mubr.f32.mxu0 0.0
    %1757 = vmatmul.mubr.f32.gmra.mxu0 %v1675
    %v1758 = vpop.f32.mrf.mxu0
    %v1759 = vadd.f32 0.0, %v1758
    %v1760 = vpop.f32.mrf.mxu0
    %1761 = vmatprep.mubr.f32.mxu0 0.0
    %1762 = vmatmul.mubr.f32.gmra.mxu0 %v1678
    %v1763 = vpop.f32.mrf.mxu0
    %v1764 = vadd.f32 0.0, %v1763
    %v1765 = vpop.f32.mrf.mxu0
    %1766 = vmatprep.mubr.f32.mxu0 0.0
    %1767 = vmatmul.mubr.f32.gmra.mxu0 %v1681
    %v1768 = vpop.f32.mrf.mxu0
    %v1769 = vadd.f32 0.0, %v1768
    %v1770 = vpop.f32.mrf.mxu0
    %1771 = vmatprep.mubr.f32.mxu0 0.0
    %1772 = vmatmul.mubr.f32.gmra.mxu0 %v1684
    %v1773 = vpop.f32.mrf.mxu0
    %v1774 = vadd.f32 0.0, %v1773
    %v1775 = vpop.f32.mrf.mxu0
    %1776 = vmatprep.mubr.f32.mxu0 0.0
    %1777 = vmatmul.mubr.f32.gmra.mxu0 %v1687
    %v1778 = vpop.f32.mrf.mxu0
    %v1779 = vadd.f32 0.0, %v1778
    %v1780 = vpop.f32.mrf.mxu0
    %1781 = vmatprep.mubr.f32.mxu0 0.0
    %1782 = vmatmul.mubr.f32.gmra.mxu0 %v1690
    %v1783 = vpop.f32.mrf.mxu0
    %v1784 = vadd.f32 0.0, %v1783
    %v1785 = vpop.f32.mrf.mxu0
    %1786 = vdwg.mxu0
    %v1787 = vadd.f32 %v1306, %v1759
    %v1788 = vadd.f32 %v1311, %v1764
    %v1789 = vadd.f32 %v1316, %v1769
    %v1790 = vadd.f32 %v1321, %v1774
    %v1791 = vadd.f32 %v1326, %v1779
    %v1792 = vadd.f32 %v1331, %v1784
    %1793 = vrot.lane.b32.xlu0 %v401, 104
    %v1794 = vpop.permute.xlu0 %1793
    %1795 = vrot.lane.b32.xlu0 %v406, 104
    %v1796 = vpop.permute.xlu0 %1795
    %1797 = vrot.lane.b32.xlu0 %v411, 104
    %v1798 = vpop.permute.xlu0 %1797
    %1799 = vrot.lane.b32.xlu0 %v416, 104
    %v1800 = vpop.permute.xlu0 %1799
    %1801 = vrot.lane.b32.xlu0 %v421, 104
    %v1802 = vpop.permute.xlu0 %1801
    %1803 = vrot.lane.b32.xlu0 %v426, 104
    %v1804 = vpop.permute.xlu0 %1803
    %1805 = vrot.lane.b32.xlu0 %v401, 72
    %v1806 = vpop.permute.xlu0 %1805
    %1807 = vrot.lane.b32.xlu0 %v406, 72
    %v1808 = vpop.permute.xlu0 %1807
    %1809 = vrot.lane.b32.xlu0 %v411, 72
    %v1810 = vpop.permute.xlu0 %1809
    %1811 = vrot.lane.b32.xlu0 %v416, 72
    %v1812 = vpop.permute.xlu0 %1811
    %1813 = vrot.lane.b32.xlu0 %v421, 72
    %v1814 = vpop.permute.xlu0 %1813
    %1815 = vrot.lane.b32.xlu0 %v426, 72
    %v1816 = vpop.permute.xlu0 %1815
    %v1817 = vsel %vm451, %v1794, 0
    %v1819 = vsel %vm451, %v1796, 0
    %v1821 = vsel %vm451, %v1798, 0
    %v1823 = vsel %vm451, %v1800, 0
    %v1825 = vsel %vm451, %v1802, 0
    %v1827 = vsel %vm451, %v1804, 0
    %v1829 = vsel %vm451, %v1806, 0
    %v1831 = vsel %vm451, %v1808, 0
    %v1833 = vsel %vm451, %v1810, 0
    %v1835 = vsel %vm451, %v1812, 0
    %v1837 = vsel %vm451, %v1814, 0
    %v1839 = vsel %vm451, %v1816, 0
    %1841 = vmatprep.subr.mxu0 0.0
    %1842 = vmatpush1.xpose.msra.mxu0 0.0
    %1843 = vmatprep.subr.mxu0 0.0
    %1844 = vmatpush1.xpose.msra.mxu0 0.0
    %1845 = vmatprep.subr.mxu0 0.0
    %1846 = vmatpush1.xpose.msra.mxu0 0.0
    %1847 = vmatprep.subr.mxu0 0.0
    %1848 = vmatpush1.xpose.msra.mxu0 0.0
    %1849 = vmatprep.subr.mxu0 0.0
    %1850 = vmatpush1.xpose.msra.mxu0 0.0
    %1851 = vmatprep.subr.mxu0 0.0
    %1852 = vmatpush1.xpose.msra.mxu0 0.0
    %1853 = vmatprep.subr.mxu0 0.0
    %1854 = vmatpush1.xpose.msra.mxu0 0.0
    %1855 = vmatprep.subr.mxu0 0.0
    %1856 = vmatpush1.xpose.msra.mxu0 0.0
    %1857 = vmatprep.subr.mxu0 0.0
    %1858 = vmatpush1.xpose.msra.mxu0 0.0
    %1859 = vmatprep.subr.mxu0 0.0
    %1860 = vmatpush1.xpose.msra.mxu0 0.0
    %1861 = vmatprep.subr.mxu0 0.0
    %1862 = vmatpush1.xpose.msra.mxu0 %v1839
    %1863 = vmatprep.subr.mxu0 0.0
    %1864 = vmatpush1.xpose.msra.mxu0 %v1837
    %1865 = vmatprep.subr.mxu0 0.0
    %1866 = vmatpush1.xpose.msra.mxu0 %v1835
    %1867 = vmatprep.subr.mxu0 0.0
    %1868 = vmatpush1.xpose.msra.mxu0 %v1833
    %1869 = vmatprep.subr.mxu0 0.0
    %1870 = vmatpush1.xpose.msra.mxu0 %v1831
    %1871 = vmatprep.subr.mxu0 0.0
    %1872 = vmatpush1.xpose.msra.mxu0 %v1829
    %1873 = vmatprep.subr.mxu0 0.0
    %1874 = vmatpush2.xpose.msra.mxu0 0.0
    %1875 = vmatprep.subr.mxu0 0.0
    %1876 = vmatpush2.xpose.msra.mxu0 0.0
    %1877 = vmatprep.subr.mxu0 0.0
    %1878 = vmatpush2.xpose.msra.mxu0 0.0
    %1879 = vmatprep.subr.mxu0 0.0
    %1880 = vmatpush2.xpose.msra.mxu0 0.0
    %1881 = vmatprep.subr.mxu0 0.0
    %1882 = vmatpush2.xpose.msra.mxu0 0.0
    %1883 = vmatprep.subr.mxu0 0.0
    %1884 = vmatpush2.xpose.msra.mxu0 0.0
    %1885 = vmatprep.subr.mxu0 0.0
    %1886 = vmatpush2.xpose.msra.mxu0 0.0
    %1887 = vmatprep.subr.mxu0 0.0
    %1888 = vmatpush2.xpose.msra.mxu0 0.0
    %1889 = vmatprep.subr.mxu0 0.0
    %1890 = vmatpush2.xpose.msra.mxu0 0.0
    %1891 = vmatprep.subr.mxu0 0.0
    %1892 = vmatpush2.xpose.msra.mxu0 0.0
    %1893 = vmatprep.subr.mxu0 0.0
    %1894 = vmatpush2.xpose.msra.mxu0 0.0
    %1895 = vmatprep.subr.mxu0 0.0
    %1896 = vmatpush2.xpose.msra.mxu0 0.0
    %1897 = vmatprep.subr.mxu0 0.0
    %1898 = vmatpush2.xpose.msra.mxu0 0.0
    %1899 = vmatprep.subr.mxu0 0.0
    %1900 = vmatpush2.xpose.msra.mxu0 0.0
    %1901 = vmatprep.subr.mxu0 0.0
    %1902 = vmatpush2.xpose.msra.mxu0 0.0
    %1903 = vmatprep.subr.mxu0 0.0
    %1904 = vmatpush2.xpose.msra.mxu0 0.0
    %1905 = vmatprep.mubr.f32.mxu0 0.0
    %1906 = vmatmul.mubr.f32.gmra.mxu0 %v1817
    %v1907 = vpop.f32.mrf.mxu0
    %v1908 = vadd.f32 %v193, %v1907
    %v1909 = vpop.f32.mrf.mxu0
    %1910 = vmatprep.mubr.f32.mxu0 0.0
    %1911 = vmatmul.mubr.f32.gmra.mxu0 %v1819
    %v1912 = vpop.f32.mrf.mxu0
    %v1913 = vadd.f32 %v194, %v1912
    %v1914 = vpop.f32.mrf.mxu0
    %1915 = vmatprep.mubr.f32.mxu0 0.0
    %1916 = vmatmul.mubr.f32.gmra.mxu0 %v1821
    %v1917 = vpop.f32.mrf.mxu0
    %v1918 = vadd.f32 %v195, %v1917
    %v1919 = vpop.f32.mrf.mxu0
    %1920 = vmatprep.mubr.f32.mxu0 0.0
    %1921 = vmatmul.mubr.f32.gmra.mxu0 %v1823
    %v1922 = vpop.f32.mrf.mxu0
    %v1923 = vadd.f32 %v196, %v1922
    %v1924 = vpop.f32.mrf.mxu0
    %1925 = vmatprep.mubr.f32.mxu0 0.0
    %1926 = vmatmul.mubr.f32.gmra.mxu0 %v1825
    %v1927 = vpop.f32.mrf.mxu0
    %v1928 = vadd.f32 %v197, %v1927
    %v1929 = vpop.f32.mrf.mxu0
    %1930 = vmatprep.mubr.f32.mxu0 0.0
    %1931 = vmatmul.mubr.f32.gmra.mxu0 %v1827
    %v1932 = vpop.f32.mrf.mxu0
    %v1933 = vadd.f32 %v198, %v1932
    %v1934 = vpop.f32.mrf.mxu0
    %1935 = vdwg.mxu0
    %v1936 = vsel %vm79, %v1908, -inf
    %1937 = vmax.xlane.f32.xlu0 %v1936
    %v1938 = vpop.xlane.xlu0 %1937
    %v1939 = vsel %vm79, %v1913, -inf
    %1940 = vmax.xlane.f32.xlu0 %v1939
    %v1941 = vpop.xlane.xlu0 %1940
    %v1942 = vsel %vm79, %v1918, -inf
    %1943 = vmax.xlane.f32.xlu0 %v1942
    %v1944 = vpop.xlane.xlu0 %1943
    %v1945 = vsel %vm79, %v1923, -inf
    %1946 = vmax.xlane.f32.xlu0 %v1945
    %v1947 = vpop.xlane.xlu0 %1946
    %v1948 = vsel %vm79, %v1928, -inf
    %1949 = vmax.xlane.f32.xlu0 %v1948
    %v1950 = vpop.xlane.xlu0 %1949
    %v1951 = vsel %vm79, %v1933, -inf
    %1952 = vmax.xlane.f32.xlu0 %v1951
    %v1953 = vpop.xlane.xlu0 %1952
    %v1954 = vsub.f32 %v1908, %v1938
    %v1955 = vsub.f32 %v1913, %v1941
    %v1956 = vsub.f32 %v1918, %v1944
    %v1957 = vsub.f32 %v1923, %v1947
    %v1958 = vsub.f32 %v1928, %v1950
    %v1959 = vsub.f32 %v1933, %v1953
    %v1960 = vmul.f32 %v1954, 1.442695
    %v1961 = vpow.pop %v1960
    %v1962 = vmul.f32 %v1955, 1.442695
    %v1963 = vpow.pop %v1962
    %v1964 = vmul.f32 %v1956, 1.442695
    %v1965 = vpow.pop %v1964
    %v1966 = vmul.f32 %v1957, 1.442695
    %v1967 = vpow.pop %v1966
    %v1968 = vmul.f32 %v1958, 1.442695
    %v1969 = vpow.pop %v1968
    %v1970 = vmul.f32 %v1959, 1.442695
    %v1971 = vpow.pop %v1970
    %v1972 = vsel %vm79, %v1961, 0.0
    %1973 = vadd.xlane.f32.xlu0 %v1972
    %v1974 = vpop.xlane.xlu0 %1973
    %v1975 = vsel %vm79, %v1963, 0.0
    %1976 = vadd.xlane.f32.xlu0 %v1975
    %v1977 = vpop.xlane.xlu0 %1976
    %v1978 = vsel %vm79, %v1965, 0.0
    %1979 = vadd.xlane.f32.xlu0 %v1978
    %v1980 = vpop.xlane.xlu0 %1979
    %v1981 = vsel %vm79, %v1967, 0.0
    %1982 = vadd.xlane.f32.xlu0 %v1981
    %v1983 = vpop.xlane.xlu0 %1982
    %v1984 = vsel %vm79, %v1969, 0.0
    %1985 = vadd.xlane.f32.xlu0 %v1984
    %v1986 = vpop.xlane.xlu0 %1985
    %v1987 = vsel %vm79, %v1971, 0.0
    %1988 = vadd.xlane.f32.xlu0 %v1987
    %v1989 = vpop.xlane.xlu0 %1988
    %1990 = vrot.lane.b32.xlu0 %v401, 40
    %v1991 = vpop.permute.xlu0 %1990
    %1992 = vrot.lane.b32.xlu0 %v406, 40
    %v1993 = vpop.permute.xlu0 %1992
    %1994 = vrot.lane.b32.xlu0 %v411, 40
    %v1995 = vpop.permute.xlu0 %1994
    %1996 = vrot.lane.b32.xlu0 %v416, 40
    %v1997 = vpop.permute.xlu0 %1996
    %1998 = vrot.lane.b32.xlu0 %v421, 40
    %v1999 = vpop.permute.xlu0 %1998
    %2000 = vrot.lane.b32.xlu0 %v426, 40
    %v2001 = vpop.permute.xlu0 %2000
    %v2009 = vsel %vm79, %v1961, 0
    %v2012 = vsel %vm79, %v1963, 0
    %v2015 = vsel %vm79, %v1965, 0
    %v2018 = vsel %vm79, %v1967, 0
    %v2021 = vsel %vm79, %v1969, 0
    %v2024 = vsel %vm79, %v1971, 0
    %2026 = vmatprep.subr.mxu0 0.0
    %2027 = vmatpush1.msra.mxu0 0.0
    %2028 = vmatprep.subr.mxu0 0.0
    %2029 = vmatpush1.msra.mxu0 0.0
    %2030 = vmatprep.subr.mxu0 0.0
    %2031 = vmatpush1.msra.mxu0 0.0
    %2032 = vmatprep.subr.mxu0 0.0
    %2033 = vmatpush1.msra.mxu0 0.0
    %2034 = vmatprep.subr.mxu0 0.0
    %2035 = vmatpush1.msra.mxu0 0.0
    %2036 = vmatprep.subr.mxu0 0.0
    %2037 = vmatpush1.msra.mxu0 0.0
    %2038 = vmatprep.subr.mxu0 0.0
    %2039 = vmatpush1.msra.mxu0 0.0
    %2040 = vmatprep.subr.mxu0 0.0
    %2041 = vmatpush1.msra.mxu0 0.0
    %2042 = vmatprep.subr.mxu0 0.0
    %2043 = vmatpush1.msra.mxu0 0.0
    %2044 = vmatprep.subr.mxu0 0.0
    %2045 = vmatpush1.msra.mxu0 0.0
    %2046 = vmatprep.subr.mxu0 0.0
    %2047 = vmatpush1.msra.mxu0 %v2001
    %2048 = vmatprep.subr.mxu0 0.0
    %2049 = vmatpush1.msra.mxu0 %v1999
    %2050 = vmatprep.subr.mxu0 0.0
    %2051 = vmatpush1.msra.mxu0 %v1997
    %2052 = vmatprep.subr.mxu0 0.0
    %2053 = vmatpush1.msra.mxu0 %v1995
    %2054 = vmatprep.subr.mxu0 0.0
    %2055 = vmatpush1.msra.mxu0 %v1993
    %2056 = vmatprep.subr.mxu0 0.0
    %2057 = vmatpush1.msra.mxu0 %v1991
    %2058 = vmatprep.subr.mxu0 0.0
    %2059 = vmatpush2.msra.mxu0 0.0
    %2060 = vmatprep.subr.mxu0 0.0
    %2061 = vmatpush2.msra.mxu0 0.0
    %2062 = vmatprep.subr.mxu0 0.0
    %2063 = vmatpush2.msra.mxu0 0.0
    %2064 = vmatprep.subr.mxu0 0.0
    %2065 = vmatpush2.msra.mxu0 0.0
    %2066 = vmatprep.subr.mxu0 0.0
    %2067 = vmatpush2.msra.mxu0 0.0
    %2068 = vmatprep.subr.mxu0 0.0
    %2069 = vmatpush2.msra.mxu0 0.0
    %2070 = vmatprep.subr.mxu0 0.0
    %2071 = vmatpush2.msra.mxu0 0.0
    %2072 = vmatprep.subr.mxu0 0.0
    %2073 = vmatpush2.msra.mxu0 0.0
    %2074 = vmatprep.subr.mxu0 0.0
    %2075 = vmatpush2.msra.mxu0 0.0
    %2076 = vmatprep.subr.mxu0 0.0
    %2077 = vmatpush2.msra.mxu0 0.0
    %2078 = vmatprep.subr.mxu0 0.0
    %2079 = vmatpush2.msra.mxu0 0.0
    %2080 = vmatprep.subr.mxu0 0.0
    %2081 = vmatpush2.msra.mxu0 0.0
    %2082 = vmatprep.subr.mxu0 0.0
    %2083 = vmatpush2.msra.mxu0 0.0
    %2084 = vmatprep.subr.mxu0 0.0
    %2085 = vmatpush2.msra.mxu0 0.0
    %2086 = vmatprep.subr.mxu0 0.0
    %2087 = vmatpush2.msra.mxu0 0.0
    %2088 = vmatprep.subr.mxu0 0.0
    %2089 = vmatpush2.msra.mxu0 0.0
    %2090 = vmatprep.mubr.f32.mxu0 0.0
    %2091 = vmatmul.mubr.f32.gmra.mxu0 %v2009
    %v2092 = vpop.f32.mrf.mxu0
    %v2093 = vadd.f32 0.0, %v2092
    %v2094 = vpop.f32.mrf.mxu0
    %2095 = vmatprep.mubr.f32.mxu0 0.0
    %2096 = vmatmul.mubr.f32.gmra.mxu0 %v2012
    %v2097 = vpop.f32.mrf.mxu0
    %v2098 = vadd.f32 0.0, %v2097
    %v2099 = vpop.f32.mrf.mxu0
    %2100 = vmatprep.mubr.f32.mxu0 0.0
    %2101 = vmatmul.mubr.f32.gmra.mxu0 %v2015
    %v2102 = vpop.f32.mrf.mxu0
    %v2103 = vadd.f32 0.0, %v2102
    %v2104 = vpop.f32.mrf.mxu0
    %2105 = vmatprep.mubr.f32.mxu0 0.0
    %2106 = vmatmul.mubr.f32.gmra.mxu0 %v2018
    %v2107 = vpop.f32.mrf.mxu0
    %v2108 = vadd.f32 0.0, %v2107
    %v2109 = vpop.f32.mrf.mxu0
    %2110 = vmatprep.mubr.f32.mxu0 0.0
    %2111 = vmatmul.mubr.f32.gmra.mxu0 %v2021
    %v2112 = vpop.f32.mrf.mxu0
    %v2113 = vadd.f32 0.0, %v2112
    %v2114 = vpop.f32.mrf.mxu0
    %2115 = vmatprep.mubr.f32.mxu0 0.0
    %2116 = vmatmul.mubr.f32.gmra.mxu0 %v2024
    %v2117 = vpop.f32.mrf.mxu0
    %v2118 = vadd.f32 0.0, %v2117
    %v2119 = vpop.f32.mrf.mxu0
    %2120 = vdwg.mxu0
    %v2121 = vrcp.pop %v1974
    %v2122 = vrcp.pop %v1977
    %v2123 = vrcp.pop %v1980
    %v2124 = vrcp.pop %v1983
    %v2125 = vrcp.pop %v1986
    %v2126 = vrcp.pop %v1989
    %v2127 = vmul.f32 %v2093, %v2121
    %v2128 = vmul.f32 %v2098, %v2122
    %v2129 = vmul.f32 %v2103, %v2123
    %v2130 = vmul.f32 %v2108, %v2124
    %v2131 = vmul.f32 %v2113, %v2125
    %v2132 = vmul.f32 %v2118, %v2126
    %v2134 = vsel %vm451, %v2127, 0
    %v2137 = vsel %vm451, %v2128, 0
    %v2140 = vsel %vm451, %v2129, 0
    %v2143 = vsel %vm451, %v2130, 0
    %v2146 = vsel %vm451, %v2131, 0
    %v2149 = vsel %vm451, %v2132, 0
    %2151 = vmatprep.subr.mxu0 0.0
    %2152 = vmatpush1.msra.mxu0 0.0
    %2153 = vmatprep.subr.mxu0 0.0
    %2154 = vmatpush1.msra.mxu0 0.0
    %2155 = vmatprep.subr.mxu0 0.0
    %2156 = vmatpush1.msra.mxu0 0.0
    %2157 = vmatprep.subr.mxu0 0.0
    %2158 = vmatpush1.msra.mxu0 0.0
    %2159 = vmatprep.subr.mxu0 0.0
    %2160 = vmatpush1.msra.mxu0 0.0
    %2161 = vmatprep.subr.mxu0 0.0
    %2162 = vmatpush1.msra.mxu0 0.0
    %2163 = vmatprep.subr.mxu0 0.0
    %2164 = vmatpush1.msra.mxu0 0.0
    %2165 = vmatprep.subr.mxu0 0.0
    %2166 = vmatpush1.msra.mxu0 0.0
    %2167 = vmatprep.subr.mxu0 0.0
    %2168 = vmatpush1.msra.mxu0 0.0
    %2169 = vmatprep.subr.mxu0 0.0
    %2170 = vmatpush1.msra.mxu0 0.0
    %2171 = vmatprep.subr.mxu0 0.0
    %2172 = vmatpush1.msra.mxu0 0.0
    %2173 = vmatprep.subr.mxu0 0.0
    %2174 = vmatpush1.msra.mxu0 0.0
    %2175 = vmatprep.subr.mxu0 0.0
    %2176 = vmatpush1.msra.mxu0 0.0
    %2177 = vmatprep.subr.mxu0 0.0
    %2178 = vmatpush1.msra.mxu0 0.0
    %2179 = vmatprep.subr.mxu0 0.0
    %2180 = vmatpush1.msra.mxu0 0.0
    %2181 = vmatprep.subr.mxu0 0.0
    %2182 = vmatpush1.msra.mxu0 %v432
    %2183 = vmatprep.subr.mxu0 0.0
    %2184 = vmatpush2.msra.mxu0 0.0
    %2185 = vmatprep.subr.mxu0 0.0
    %2186 = vmatpush2.msra.mxu0 0.0
    %2187 = vmatprep.subr.mxu0 0.0
    %2188 = vmatpush2.msra.mxu0 0.0
    %2189 = vmatprep.subr.mxu0 0.0
    %2190 = vmatpush2.msra.mxu0 0.0
    %2191 = vmatprep.subr.mxu0 0.0
    %2192 = vmatpush2.msra.mxu0 0.0
    %2193 = vmatprep.subr.mxu0 0.0
    %2194 = vmatpush2.msra.mxu0 0.0
    %2195 = vmatprep.subr.mxu0 0.0
    %2196 = vmatpush2.msra.mxu0 0.0
    %2197 = vmatprep.subr.mxu0 0.0
    %2198 = vmatpush2.msra.mxu0 0.0
    %2199 = vmatprep.subr.mxu0 0.0
    %2200 = vmatpush2.msra.mxu0 0.0
    %2201 = vmatprep.subr.mxu0 0.0
    %2202 = vmatpush2.msra.mxu0 0.0
    %2203 = vmatprep.subr.mxu0 0.0
    %2204 = vmatpush2.msra.mxu0 0.0
    %2205 = vmatprep.subr.mxu0 0.0
    %2206 = vmatpush2.msra.mxu0 0.0
    %2207 = vmatprep.subr.mxu0 0.0
    %2208 = vmatpush2.msra.mxu0 0.0
    %2209 = vmatprep.subr.mxu0 0.0
    %2210 = vmatpush2.msra.mxu0 0.0
    %2211 = vmatprep.subr.mxu0 0.0
    %2212 = vmatpush2.msra.mxu0 0.0
    %2213 = vmatprep.subr.mxu0 0.0
    %2214 = vmatpush2.msra.mxu0 0.0
    %2215 = vmatprep.mubr.f32.mxu0 0.0
    %2216 = vmatmul.mubr.f32.gmra.mxu0 %v2134
    %v2217 = vpop.f32.mrf.mxu0
    %v2218 = vadd.f32 0.0, %v2217
    %v2219 = vpop.f32.mrf.mxu0
    %2220 = vmatprep.mubr.f32.mxu0 0.0
    %2221 = vmatmul.mubr.f32.gmra.mxu0 %v2137
    %v2222 = vpop.f32.mrf.mxu0
    %v2223 = vadd.f32 0.0, %v2222
    %v2224 = vpop.f32.mrf.mxu0
    %2225 = vmatprep.mubr.f32.mxu0 0.0
    %2226 = vmatmul.mubr.f32.gmra.mxu0 %v2140
    %v2227 = vpop.f32.mrf.mxu0
    %v2228 = vadd.f32 0.0, %v2227
    %v2229 = vpop.f32.mrf.mxu0
    %2230 = vmatprep.mubr.f32.mxu0 0.0
    %2231 = vmatmul.mubr.f32.gmra.mxu0 %v2143
    %v2232 = vpop.f32.mrf.mxu0
    %v2233 = vadd.f32 0.0, %v2232
    %v2234 = vpop.f32.mrf.mxu0
    %2235 = vmatprep.mubr.f32.mxu0 0.0
    %2236 = vmatmul.mubr.f32.gmra.mxu0 %v2146
    %v2237 = vpop.f32.mrf.mxu0
    %v2238 = vadd.f32 0.0, %v2237
    %v2239 = vpop.f32.mrf.mxu0
    %2240 = vmatprep.mubr.f32.mxu0 0.0
    %2241 = vmatmul.mubr.f32.gmra.mxu0 %v2149
    %v2242 = vpop.f32.mrf.mxu0
    %v2243 = vadd.f32 0.0, %v2242
    %v2244 = vpop.f32.mrf.mxu0
    %2245 = vdwg.mxu0
    %v2246 = vadd.f32 %v1787, %v2218
    %v2247 = vadd.f32 %v1788, %v2223
    %v2248 = vadd.f32 %v1789, %v2228
    %v2249 = vadd.f32 %v1790, %v2233
    %v2250 = vadd.f32 %v1791, %v2238
    %v2251 = vadd.f32 %v1792, %v2243
    %v2252 = vadd.f32 %v165, %v2246
    %v2253 = vadd.f32 %v170, %v2247
    %v2254 = vadd.f32 %v175, %v2248
    %v2255 = vadd.f32 %v180, %v2249
    %v2256 = vadd.f32 %v185, %v2250
    %v2257 = vadd.f32 %v190, %v2251
    %v2258 = vld [vmem:[%s9] sm:$0x1]
    %v2260 = vlaneseq
    %v2261 = vshrl.u32 %v2260, 7
    %v2262 = vsub.s32 0, %v2261
    %v2263 = vrot.slane %v2258, %v2262
    %v2265 = vadd.f32 %v2252, %v2263
    %v2266 = vadd.f32 %v2253, %v2263
    %v2267 = vadd.f32 %v2254, %v2263
    %v2268 = vadd.f32 %v2255, %v2263
    %v2269 = vadd.f32 %v2256, %v2263
    %v2270 = vadd.f32 %v2257, %v2263
    %v2271 = vld [vmem:[%s10] sm:$0x1]
    %v2272 = vld [vmem:[%s11] sm:$0x1]
    %v2273 = vsel %vm201, %v2265, 0.0
    %2274 = vadd.xlane.f32.xlu0 %v2273
    %v2275 = vpop.xlane.xlu0 %2274
    %v2276 = vsel %vm201, %v2266, 0.0
    %2277 = vadd.xlane.f32.xlu0 %v2276
    %v2278 = vpop.xlane.xlu0 %2277
    %v2279 = vsel %vm201, %v2267, 0.0
    %2280 = vadd.xlane.f32.xlu0 %v2279
    %v2281 = vpop.xlane.xlu0 %2280
    %v2282 = vsel %vm201, %v2268, 0.0
    %2283 = vadd.xlane.f32.xlu0 %v2282
    %v2284 = vpop.xlane.xlu0 %2283
    %v2285 = vsel %vm201, %v2269, 0.0
    %2286 = vadd.xlane.f32.xlu0 %v2285
    %v2287 = vpop.xlane.xlu0 %2286
    %v2288 = vsel %vm201, %v2270, 0.0
    %2289 = vadd.xlane.f32.xlu0 %v2288
    %v2290 = vpop.xlane.xlu0 %2289
    %v2291 = vmul.f32 %v2275, %v220
    %v2292 = vmul.f32 %v2278, %v220
    %v2293 = vmul.f32 %v2281, %v220
    %v2294 = vmul.f32 %v2284, %v220
    %v2295 = vmul.f32 %v2287, %v220
    %v2296 = vmul.f32 %v2290, %v220
    %v2297 = vsub.f32 %v2265, %v2291
    %v2298 = vsub.f32 %v2266, %v2292
    %v2299 = vsub.f32 %v2267, %v2293
    %v2300 = vsub.f32 %v2268, %v2294
    %v2301 = vsub.f32 %v2269, %v2295
    %v2302 = vsub.f32 %v2270, %v2296
    %v2303 = vmul.f32 %v2297, %v2297
    %v2304 = vmul.f32 %v2298, %v2298
    %v2305 = vmul.f32 %v2299, %v2299
    %v2306 = vmul.f32 %v2300, %v2300
    %v2307 = vmul.f32 %v2301, %v2301
    %v2308 = vmul.f32 %v2302, %v2302
    %v2309 = vsel %vm201, %v2303, 0.0
    %2310 = vadd.xlane.f32.xlu0 %v2309
    %v2311 = vpop.xlane.xlu0 %2310
    %v2312 = vsel %vm201, %v2304, 0.0
    %2313 = vadd.xlane.f32.xlu0 %v2312
    %v2314 = vpop.xlane.xlu0 %2313
    %v2315 = vsel %vm201, %v2305, 0.0
    %2316 = vadd.xlane.f32.xlu0 %v2315
    %v2317 = vpop.xlane.xlu0 %2316
    %v2318 = vsel %vm201, %v2306, 0.0
    %2319 = vadd.xlane.f32.xlu0 %v2318
    %v2320 = vpop.xlane.xlu0 %2319
    %v2321 = vsel %vm201, %v2307, 0.0
    %2322 = vadd.xlane.f32.xlu0 %v2321
    %v2323 = vpop.xlane.xlu0 %2322
    %v2324 = vsel %vm201, %v2308, 0.0
    %2325 = vadd.xlane.f32.xlu0 %v2324
    %v2326 = vpop.xlane.xlu0 %2325
    %v2327 = vmul.f32 %v2311, %v220
    %v2328 = vmul.f32 %v2314, %v220
    %v2329 = vmul.f32 %v2317, %v220
    %v2330 = vmul.f32 %v2320, %v220
    %v2331 = vmul.f32 %v2323, %v220
    %v2332 = vmul.f32 %v2326, %v220
    %v2333 = vadd.f32 %v2327, 1e-12
    %v2334 = vadd.f32 %v2328, 1e-12
    %v2335 = vadd.f32 %v2329, 1e-12
    %v2336 = vadd.f32 %v2330, 1e-12
    %v2337 = vadd.f32 %v2331, 1e-12
    %v2338 = vadd.f32 %v2332, 1e-12
    %v2339 = vrsqrt.pop %v2333
    %v2340 = vrsqrt.pop %v2334
    %v2341 = vrsqrt.pop %v2335
    %v2342 = vrsqrt.pop %v2336
    %v2343 = vrsqrt.pop %v2337
    %v2344 = vrsqrt.pop %v2338
    %v2345 = vmul.f32 %v2297, %v2339
    %v2346 = vmul.f32 %v2298, %v2340
    %v2347 = vmul.f32 %v2299, %v2341
    %v2348 = vmul.f32 %v2300, %v2342
    %v2349 = vmul.f32 %v2301, %v2343
    %v2350 = vmul.f32 %v2302, %v2344
    %v2352 = vlaneseq
    %v2353 = vshrl.u32 %v2352, 7
    %v2354 = vsub.s32 0, %v2353
    %v2355 = vrot.slane %v2271, %v2354
    %v2357 = vmul.f32 %v2345, %v2355
    %v2358 = vmul.f32 %v2346, %v2355
    %v2359 = vmul.f32 %v2347, %v2355
    %v2360 = vmul.f32 %v2348, %v2355
    %v2361 = vmul.f32 %v2349, %v2355
    %v2362 = vmul.f32 %v2350, %v2355
    %v2364 = vlaneseq
    %v2365 = vshrl.u32 %v2364, 7
    %v2366 = vsub.s32 0, %v2365
    %v2367 = vrot.slane %v2272, %v2366
    %v2369 = vadd.f32 %v2357, %v2367
    %v2370 = vadd.f32 %v2358, %v2367
    %v2371 = vadd.f32 %v2359, %v2367
    %v2372 = vadd.f32 %v2360, %v2367
    %v2373 = vadd.f32 %v2361, %v2367
    %v2374 = vadd.f32 %v2362, %v2367
    %v2375 = vld [vmem:[%s12] sm:$0xff]
    %v2376 = vld [vmem:[%s12 + $0x8] sm:$0xff]
    %v2377 = vld [vmem:[%s12 + $0x10] sm:$0xff]
    %v2378 = vld [vmem:[%s12 + $0x18] sm:$0xff]
    %v2379 = vld [vmem:[%s13] sm:$0x1]
    %v2381 = vlaneseq
    %v2382 = vshrl.u32 %v2381, 7
    %v2383 = vsub.s32 0, %v2382
    %v2384 = vrot.slane %v2379, %v2383
    %v2387 = vsel %vm201, %v2369, 0
    %v2390 = vsel %vm201, %v2370, 0
    %v2393 = vsel %vm201, %v2371, 0
    %v2396 = vsel %vm201, %v2372, 0
    %v2399 = vsel %vm201, %v2373, 0
    %v2402 = vsel %vm201, %v2374, 0
    %2404 = vmatprep.subr.mxu0 0.0
    %2405 = vmatpush1.msra.mxu0 0.0
    %2406 = vmatprep.subr.mxu0 0.0
    %2407 = vmatpush1.msra.mxu0 0.0
    %2408 = vmatprep.subr.mxu0 0.0
    %2409 = vmatpush1.msra.mxu0 0.0
    %2410 = vmatprep.subr.mxu0 0.0
    %2411 = vmatpush1.msra.mxu0 0.0
    %2412 = vmatprep.subr.mxu0 0.0
    %2413 = vmatpush1.msra.mxu0 0.0
    %2414 = vmatprep.subr.mxu0 0.0
    %2415 = vmatpush1.msra.mxu0 0.0
    %2416 = vmatprep.subr.mxu0 0.0
    %2417 = vmatpush1.msra.mxu0 0.0
    %2418 = vmatprep.subr.mxu0 0.0
    %2419 = vmatpush1.msra.mxu0 0.0
    %2420 = vmatprep.subr.mxu0 0.0
    %2421 = vmatpush1.msra.mxu0 0.0
    %2422 = vmatprep.subr.mxu0 0.0
    %2423 = vmatpush1.msra.mxu0 0.0
    %2424 = vmatprep.subr.mxu0 0.0
    %2425 = vmatpush1.msra.mxu0 0.0
    %2426 = vmatprep.subr.mxu0 0.0
    %2427 = vmatpush1.msra.mxu0 0.0
    %2428 = vmatprep.subr.mxu0 0.0
    %2429 = vmatpush1.msra.mxu0 %v2378
    %2430 = vmatprep.subr.mxu0 0.0
    %2431 = vmatpush1.msra.mxu0 %v2377
    %2432 = vmatprep.subr.mxu0 0.0
    %2433 = vmatpush1.msra.mxu0 %v2376
    %2434 = vmatprep.subr.mxu0 0.0
    %2435 = vmatpush1.msra.mxu0 %v2375
    %2436 = vmatprep.subr.mxu0 0.0
    %2437 = vmatpush2.msra.mxu0 0.0
    %2438 = vmatprep.subr.mxu0 0.0
    %2439 = vmatpush2.msra.mxu0 0.0
    %2440 = vmatprep.subr.mxu0 0.0
    %2441 = vmatpush2.msra.mxu0 0.0
    %2442 = vmatprep.subr.mxu0 0.0
    %2443 = vmatpush2.msra.mxu0 0.0
    %2444 = vmatprep.subr.mxu0 0.0
    %2445 = vmatpush2.msra.mxu0 0.0
    %2446 = vmatprep.subr.mxu0 0.0
    %2447 = vmatpush2.msra.mxu0 0.0
    %2448 = vmatprep.subr.mxu0 0.0
    %2449 = vmatpush2.msra.mxu0 0.0
    %2450 = vmatprep.subr.mxu0 0.0
    %2451 = vmatpush2.msra.mxu0 0.0
    %2452 = vmatprep.subr.mxu0 0.0
    %2453 = vmatpush2.msra.mxu0 0.0
    %2454 = vmatprep.subr.mxu0 0.0
    %2455 = vmatpush2.msra.mxu0 0.0
    %2456 = vmatprep.subr.mxu0 0.0
    %2457 = vmatpush2.msra.mxu0 0.0
    %2458 = vmatprep.subr.mxu0 0.0
    %2459 = vmatpush2.msra.mxu0 0.0
    %2460 = vmatprep.subr.mxu0 0.0
    %2461 = vmatpush2.msra.mxu0 0.0
    %2462 = vmatprep.subr.mxu0 0.0
    %2463 = vmatpush2.msra.mxu0 0.0
    %2464 = vmatprep.subr.mxu0 0.0
    %2465 = vmatpush2.msra.mxu0 0.0
    %2466 = vmatprep.subr.mxu0 0.0
    %2467 = vmatpush2.msra.mxu0 0.0
    %2468 = vmatprep.mubr.f32.mxu0 0.0
    %2469 = vmatmul.mubr.f32.gmra.mxu0 %v2387
    %v2470 = vpop.f32.mrf.mxu0
    %v2471 = vadd.f32 %v2384, %v2470
    %v2472 = vpop.f32.mrf.mxu0
    %2473 = vmatprep.mubr.f32.mxu0 0.0
    %2474 = vmatmul.mubr.f32.gmra.mxu0 %v2390
    %v2475 = vpop.f32.mrf.mxu0
    %v2476 = vadd.f32 %v2384, %v2475
    %v2477 = vpop.f32.mrf.mxu0
    %2478 = vmatprep.mubr.f32.mxu0 0.0
    %2479 = vmatmul.mubr.f32.gmra.mxu0 %v2393
    %v2480 = vpop.f32.mrf.mxu0
    %v2481 = vadd.f32 %v2384, %v2480
    %v2482 = vpop.f32.mrf.mxu0
    %2483 = vmatprep.mubr.f32.mxu0 0.0
    %2484 = vmatmul.mubr.f32.gmra.mxu0 %v2396
    %v2485 = vpop.f32.mrf.mxu0
    %v2486 = vadd.f32 %v2384, %v2485
    %v2487 = vpop.f32.mrf.mxu0
    %2488 = vmatprep.mubr.f32.mxu0 0.0
    %2489 = vmatmul.mubr.f32.gmra.mxu0 %v2399
    %v2490 = vpop.f32.mrf.mxu0
    %v2491 = vadd.f32 %v2384, %v2490
    %v2492 = vpop.f32.mrf.mxu0
    %2493 = vmatprep.mubr.f32.mxu0 0.0
    %2494 = vmatmul.mubr.f32.gmra.mxu0 %v2402
    %v2495 = vpop.f32.mrf.mxu0
    %v2496 = vadd.f32 %v2384, %v2495
    %v2497 = vpop.f32.mrf.mxu0
    %2498 = vdwg.mxu0
    %v2499 = vmul.f32 %v2471, 0.5
    %v2500 = vmul.f32 %v2476, 0.5
    %v2501 = vmul.f32 %v2481, 0.5
    %v2502 = vmul.f32 %v2486, 0.5
    %v2503 = vmul.f32 %v2491, 0.5
    %v2504 = vmul.f32 %v2496, 0.5
    %v2505 = vmul.f32 %v2471, %v2471
    %v2506 = vmul.f32 %v2476, %v2476
    %v2507 = vmul.f32 %v2481, %v2481
    %v2508 = vmul.f32 %v2486, %v2486
    %v2509 = vmul.f32 %v2491, %v2491
    %v2510 = vmul.f32 %v2496, %v2496
    %v2511 = vmul.f32 %v2505, %v2471
    %v2512 = vmul.f32 %v2506, %v2476
    %v2513 = vmul.f32 %v2507, %v2481
    %v2514 = vmul.f32 %v2508, %v2486
    %v2515 = vmul.f32 %v2509, %v2491
    %v2516 = vmul.f32 %v2510, %v2496
    %v2517 = vmul.f32 %v2511, 0.044715
    %v2518 = vmul.f32 %v2512, 0.044715
    %v2519 = vmul.f32 %v2513, 0.044715
    %v2520 = vmul.f32 %v2514, 0.044715
    %v2521 = vmul.f32 %v2515, 0.044715
    %v2522 = vmul.f32 %v2516, 0.044715
    %v2523 = vadd.f32 %v2471, %v2517
    %v2524 = vadd.f32 %v2476, %v2518
    %v2525 = vadd.f32 %v2481, %v2519
    %v2526 = vadd.f32 %v2486, %v2520
    %v2527 = vadd.f32 %v2491, %v2521
    %v2528 = vadd.f32 %v2496, %v2522
    %v2529 = vmul.f32 %v2523, 0.7978846
    %v2530 = vmul.f32 %v2524, 0.7978846
    %v2531 = vmul.f32 %v2525, 0.7978846
    %v2532 = vmul.f32 %v2526, 0.7978846
    %v2533 = vmul.f32 %v2527, 0.7978846
    %v2534 = vmul.f32 %v2528, 0.7978846
    %v2535 = vtanh.pop %v2529
    %v2536 = vtanh.pop %v2530
    %v2537 = vtanh.pop %v2531
    %v2538 = vtanh.pop %v2532
    %v2539 = vtanh.pop %v2533
    %v2540 = vtanh.pop %v2534
    %v2541 = vadd.f32 %v2535, 1.0
    %v2542 = vadd.f32 %v2536, 1.0
    %v2543 = vadd.f32 %v2537, 1.0
    %v2544 = vadd.f32 %v2538, 1.0
    %v2545 = vadd.f32 %v2539, 1.0
    %v2546 = vadd.f32 %v2540, 1.0
    %v2547 = vmul.f32 %v2499, %v2541
    %v2548 = vmul.f32 %v2500, %v2542
    %v2549 = vmul.f32 %v2501, %v2543
    %v2550 = vmul.f32 %v2502, %v2544
    %v2551 = vmul.f32 %v2503, %v2545
    %v2552 = vmul.f32 %v2504, %v2546
    %v2553 = vld [vmem:[%s14] sm:$0xff]
    %v2554 = vld [vmem:[%s14 + $0x8] sm:$0xff]
    %v2555 = vld [vmem:[%s14 + $0x10] sm:$0xff]
    %v2556 = vld [vmem:[%s14 + $0x18] sm:$0xff]
    %v2557 = vld [vmem:[%s14 + $0x20] sm:$0xff]
    %v2558 = vld [vmem:[%s14 + $0x28] sm:$0xff]
    %v2559 = vld [vmem:[%s14 + $0x30] sm:$0xff]
    %v2560 = vld [vmem:[%s14 + $0x38] sm:$0xff]
    %v2561 = vld [vmem:[%s15] sm:$0x1]
    %v2563 = vlaneseq
    %v2564 = vshrl.u32 %v2563, 7
    %v2565 = vsub.s32 0, %v2564
    %v2566 = vrot.slane %v2561, %v2565
    %vm2568 = vcmask 523264
    %v2570 = vsel %vm2568, %v2547, 0
    %v2573 = vsel %vm2568, %v2548, 0
    %v2576 = vsel %vm2568, %v2549, 0
    %v2579 = vsel %vm2568, %v2550, 0
    %v2582 = vsel %vm2568, %v2551, 0
    %v2585 = vsel %vm2568, %v2552, 0
    %2587 = vmatprep.subr.mxu0 0.0
    %2588 = vmatpush1.msra.mxu0 0.0
    %2589 = vmatprep.subr.mxu0 0.0
    %2590 = vmatpush1.msra.mxu0 0.0
    %2591 = vmatprep.subr.mxu0 0.0
    %2592 = vmatpush1.msra.mxu0 0.0
    %2593 = vmatprep.subr.mxu0 0.0
    %2594 = vmatpush1.msra.mxu0 0.0
    %2595 = vmatprep.subr.mxu0 0.0
    %2596 = vmatpush1.msra.mxu0 0.0
    %2597 = vmatprep.subr.mxu0 0.0
    %2598 = vmatpush1.msra.mxu0 0.0
    %2599 = vmatprep.subr.mxu0 0.0
    %2600 = vmatpush1.msra.mxu0 0.0
    %2601 = vmatprep.subr.mxu0 0.0
    %2602 = vmatpush1.msra.mxu0 0.0
    %2603 = vmatprep.subr.mxu0 0.0
    %2604 = vmatpush1.msra.mxu0 %v2560
    %2605 = vmatprep.subr.mxu0 0.0
    %2606 = vmatpush1.msra.mxu0 %v2559
    %2607 = vmatprep.subr.mxu0 0.0
    %2608 = vmatpush1.msra.mxu0 %v2558
    %2609 = vmatprep.subr.mxu0 0.0
    %2610 = vmatpush1.msra.mxu0 %v2557
    %2611 = vmatprep.subr.mxu0 0.0
    %2612 = vmatpush1.msra.mxu0 %v2556
    %2613 = vmatprep.subr.mxu0 0.0
    %2614 = vmatpush1.msra.mxu0 %v2555
    %2615 = vmatprep.subr.mxu0 0.0
    %2616 = vmatpush1.msra.mxu0 %v2554
    %2617 = vmatprep.subr.mxu0 0.0
    %2618 = vmatpush1.msra.mxu0 %v2553
    %2619 = vmatprep.subr.mxu0 0.0
    %2620 = vmatpush2.msra.mxu0 0.0
    %2621 = vmatprep.subr.mxu0 0.0
    %2622 = vmatpush2.msra.mxu0 0.0
    %2623 = vmatprep.subr.mxu0 0.0
    %2624 = vmatpush2.msra.mxu0 0.0
    %2625 = vmatprep.subr.mxu0 0.0
    %2626 = vmatpush2.msra.mxu0 0.0
    %2627 = vmatprep.subr.mxu0 0.0
    %2628 = vmatpush2.msra.mxu0 0.0
    %2629 = vmatprep.subr.mxu0 0.0
    %2630 = vmatpush2.msra.mxu0 0.0
    %2631 = vmatprep.subr.mxu0 0.0
    %2632 = vmatpush2.msra.mxu0 0.0
    %2633 = vmatprep.subr.mxu0 0.0
    %2634 = vmatpush2.msra.mxu0 0.0
    %2635 = vmatprep.subr.mxu0 0.0
    %2636 = vmatpush2.msra.mxu0 0.0
    %2637 = vmatprep.subr.mxu0 0.0
    %2638 = vmatpush2.msra.mxu0 0.0
    %2639 = vmatprep.subr.mxu0 0.0
    %2640 = vmatpush2.msra.mxu0 0.0
    %2641 = vmatprep.subr.mxu0 0.0
    %2642 = vmatpush2.msra.mxu0 0.0
    %2643 = vmatprep.subr.mxu0 0.0
    %2644 = vmatpush2.msra.mxu0 0.0
    %2645 = vmatprep.subr.mxu0 0.0
    %2646 = vmatpush2.msra.mxu0 0.0
    %2647 = vmatprep.subr.mxu0 0.0
    %2648 = vmatpush2.msra.mxu0 0.0
    %2649 = vmatprep.subr.mxu0 0.0
    %2650 = vmatpush2.msra.mxu0 0.0
    %2651 = vmatprep.mubr.f32.mxu0 0.0
    %2652 = vmatmul.mubr.f32.gmra.mxu0 %v2570
    %v2653 = vpop.f32.mrf.mxu0
    %v2654 = vadd.f32 %v2566, %v2653
    %v2655 = vpop.f32.mrf.mxu0
    %2656 = vmatprep.mubr.f32.mxu0 0.0
    %2657 = vmatmul.mubr.f32.gmra.mxu0 %v2573
    %v2658 = vpop.f32.mrf.mxu0
    %v2659 = vadd.f32 %v2566, %v2658
    %v2660 = vpop.f32.mrf.mxu0
    %2661 = vmatprep.mubr.f32.mxu0 0.0
    %2662 = vmatmul.mubr.f32.gmra.mxu0 %v2576
    %v2663 = vpop.f32.mrf.mxu0
    %v2664 = vadd.f32 %v2566, %v2663
    %v2665 = vpop.f32.mrf.mxu0
    %2666 = vmatprep.mubr.f32.mxu0 0.0
    %2667 = vmatmul.mubr.f32.gmra.mxu0 %v2579
    %v2668 = vpop.f32.mrf.mxu0
    %v2669 = vadd.f32 %v2566, %v2668
    %v2670 = vpop.f32.mrf.mxu0
    %2671 = vmatprep.mubr.f32.mxu0 0.0
    %2672 = vmatmul.mubr.f32.gmra.mxu0 %v2582
    %v2673 = vpop.f32.mrf.mxu0
    %v2674 = vadd.f32 %v2566, %v2673
    %v2675 = vpop.f32.mrf.mxu0
    %2676 = vmatprep.mubr.f32.mxu0 0.0
    %2677 = vmatmul.mubr.f32.gmra.mxu0 %v2585
    %v2678 = vpop.f32.mrf.mxu0
    %v2679 = vadd.f32 %v2566, %v2678
    %v2680 = vpop.f32.mrf.mxu0
    %2681 = vdwg.mxu0
    %v2682 = vadd.f32 %v2265, %v2654
    %v2683 = vadd.f32 %v2266, %v2659
    %v2684 = vadd.f32 %v2267, %v2664
    %v2685 = vadd.f32 %v2268, %v2669
    %v2686 = vadd.f32 %v2269, %v2674
    %v2687 = vadd.f32 %v2270, %v2679
    %s2688 = scalar_lea.vmem %s4, 1
    %v2689 = vld [vmem:[%s2688] sm:$0x1]
    %s2690 = scalar_lea.vmem %s5, 1
    %v2691 = vld [vmem:[%s2690] sm:$0x1]
    %v2692 = vsel %vm201, %v2682, 0.0
    %2693 = vadd.xlane.f32.xlu0 %v2692
    %v2694 = vpop.xlane.xlu0 %2693
    %v2695 = vsel %vm201, %v2683, 0.0
    %2696 = vadd.xlane.f32.xlu0 %v2695
    %v2697 = vpop.xlane.xlu0 %2696
    %v2698 = vsel %vm201, %v2684, 0.0
    %2699 = vadd.xlane.f32.xlu0 %v2698
    %v2700 = vpop.xlane.xlu0 %2699
    %v2701 = vsel %vm201, %v2685, 0.0
    %2702 = vadd.xlane.f32.xlu0 %v2701
    %v2703 = vpop.xlane.xlu0 %2702
    %v2704 = vsel %vm201, %v2686, 0.0
    %2705 = vadd.xlane.f32.xlu0 %v2704
    %v2706 = vpop.xlane.xlu0 %2705
    %v2707 = vsel %vm201, %v2687, 0.0
    %2708 = vadd.xlane.f32.xlu0 %v2707
    %v2709 = vpop.xlane.xlu0 %2708
    %v2710 = vmul.f32 %v2694, %v220
    %v2711 = vmul.f32 %v2697, %v220
    %v2712 = vmul.f32 %v2700, %v220
    %v2713 = vmul.f32 %v2703, %v220
    %v2714 = vmul.f32 %v2706, %v220
    %v2715 = vmul.f32 %v2709, %v220
    %v2716 = vsub.f32 %v2682, %v2710
    %v2717 = vsub.f32 %v2683, %v2711
    %v2718 = vsub.f32 %v2684, %v2712
    %v2719 = vsub.f32 %v2685, %v2713
    %v2720 = vsub.f32 %v2686, %v2714
    %v2721 = vsub.f32 %v2687, %v2715
    %v2722 = vmul.f32 %v2716, %v2716
    %v2723 = vmul.f32 %v2717, %v2717
    %v2724 = vmul.f32 %v2718, %v2718
    %v2725 = vmul.f32 %v2719, %v2719
    %v2726 = vmul.f32 %v2720, %v2720
    %v2727 = vmul.f32 %v2721, %v2721
    %v2728 = vsel %vm201, %v2722, 0.0
    %2729 = vadd.xlane.f32.xlu0 %v2728
    %v2730 = vpop.xlane.xlu0 %2729
    %v2731 = vsel %vm201, %v2723, 0.0
    %2732 = vadd.xlane.f32.xlu0 %v2731
    %v2733 = vpop.xlane.xlu0 %2732
    %v2734 = vsel %vm201, %v2724, 0.0
    %2735 = vadd.xlane.f32.xlu0 %v2734
    %v2736 = vpop.xlane.xlu0 %2735
    %v2737 = vsel %vm201, %v2725, 0.0
    %2738 = vadd.xlane.f32.xlu0 %v2737
    %v2739 = vpop.xlane.xlu0 %2738
    %v2740 = vsel %vm201, %v2726, 0.0
    %2741 = vadd.xlane.f32.xlu0 %v2740
    %v2742 = vpop.xlane.xlu0 %2741
    %v2743 = vsel %vm201, %v2727, 0.0
    %2744 = vadd.xlane.f32.xlu0 %v2743
    %v2745 = vpop.xlane.xlu0 %2744
    %v2746 = vmul.f32 %v2730, %v220
    %v2747 = vmul.f32 %v2733, %v220
    %v2748 = vmul.f32 %v2736, %v220
    %v2749 = vmul.f32 %v2739, %v220
    %v2750 = vmul.f32 %v2742, %v220
    %v2751 = vmul.f32 %v2745, %v220
    %v2752 = vadd.f32 %v2746, 1e-12
    %v2753 = vadd.f32 %v2747, 1e-12
    %v2754 = vadd.f32 %v2748, 1e-12
    %v2755 = vadd.f32 %v2749, 1e-12
    %v2756 = vadd.f32 %v2750, 1e-12
    %v2757 = vadd.f32 %v2751, 1e-12
    %v2758 = vrsqrt.pop %v2752
    %v2759 = vrsqrt.pop %v2753
    %v2760 = vrsqrt.pop %v2754
    %v2761 = vrsqrt.pop %v2755
    %v2762 = vrsqrt.pop %v2756
    %v2763 = vrsqrt.pop %v2757
    %v2764 = vmul.f32 %v2716, %v2758
    %v2765 = vmul.f32 %v2717, %v2759
    %v2766 = vmul.f32 %v2718, %v2760
    %v2767 = vmul.f32 %v2719, %v2761
    %v2768 = vmul.f32 %v2720, %v2762
    %v2769 = vmul.f32 %v2721, %v2763
    %v2771 = vlaneseq
    %v2772 = vshrl.u32 %v2771, 7
    %v2773 = vsub.s32 0, %v2772
    %v2774 = vrot.slane %v2689, %v2773
    %v2776 = vmul.f32 %v2764, %v2774
    %v2777 = vmul.f32 %v2765, %v2774
    %v2778 = vmul.f32 %v2766, %v2774
    %v2779 = vmul.f32 %v2767, %v2774
    %v2780 = vmul.f32 %v2768, %v2774
    %v2781 = vmul.f32 %v2769, %v2774
    %v2783 = vlaneseq
    %v2784 = vshrl.u32 %v2783, 7
    %v2785 = vsub.s32 0, %v2784
    %v2786 = vrot.slane %v2691, %v2785
    %v2788 = vadd.f32 %v2776, %v2786
    %v2789 = vadd.f32 %v2777, %v2786
    %v2790 = vadd.f32 %v2778, %v2786
    %v2791 = vadd.f32 %v2779, %v2786
    %v2792 = vadd.f32 %v2780, %v2786
    %v2793 = vadd.f32 %v2781, %v2786
    %s2794 = scalar_lea.vmem %s6, 32
    %v2795 = vld [vmem:[%s2794] sm:$0xff]
    %v2796 = vld [vmem:[%s2794 + $0x8] sm:$0xff]
    %v2797 = vld [vmem:[%s2794 + $0x10] sm:$0xff]
    %v2798 = vld [vmem:[%s2794 + $0x18] sm:$0xff]
    %s2799 = scalar_lea.vmem %s7, 1
    %v2800 = vld [vmem:[%s2799] sm:$0x1]
    %v2802 = vlaneseq
    %v2803 = vshrl.u32 %v2802, 7
    %v2804 = vsub.s32 0, %v2803
    %v2805 = vrot.slane %v2800, %v2804
    %v2808 = vsel %vm201, %v2788, 0
    %v2811 = vsel %vm201, %v2789, 0
    %v2814 = vsel %vm201, %v2790, 0
    %v2817 = vsel %vm201, %v2791, 0
    %v2820 = vsel %vm201, %v2792, 0
    %v2823 = vsel %vm201, %v2793, 0
    %2825 = vmatprep.subr.mxu0 0.0
    %2826 = vmatpush1.msra.mxu0 0.0
    %2827 = vmatprep.subr.mxu0 0.0
    %2828 = vmatpush1.msra.mxu0 0.0
    %2829 = vmatprep.subr.mxu0 0.0
    %2830 = vmatpush1.msra.mxu0 0.0
    %2831 = vmatprep.subr.mxu0 0.0
    %2832 = vmatpush1.msra.mxu0 0.0
    %2833 = vmatprep.subr.mxu0 0.0
    %2834 = vmatpush1.msra.mxu0 0.0
    %2835 = vmatprep.subr.mxu0 0.0
    %2836 = vmatpush1.msra.mxu0 0.0
    %2837 = vmatprep.subr.mxu0 0.0
    %2838 = vmatpush1.msra.mxu0 0.0
    %2839 = vmatprep.subr.mxu0 0.0
    %2840 = vmatpush1.msra.mxu0 0.0
    %2841 = vmatprep.subr.mxu0 0.0
    %2842 = vmatpush1.msra.mxu0 0.0
    %2843 = vmatprep.subr.mxu0 0.0
    %2844 = vmatpush1.msra.mxu0 0.0
    %2845 = vmatprep.subr.mxu0 0.0
    %2846 = vmatpush1.msra.mxu0 0.0
    %2847 = vmatprep.subr.mxu0 0.0
    %2848 = vmatpush1.msra.mxu0 0.0
    %2849 = vmatprep.subr.mxu0 0.0
    %2850 = vmatpush1.msra.mxu0 %v2798
    %2851 = vmatprep.subr.mxu0 0.0
    %2852 = vmatpush1.msra.mxu0 %v2797
    %2853 = vmatprep.subr.mxu0 0.0
    %2854 = vmatpush1.msra.mxu0 %v2796
    %2855 = vmatprep.subr.mxu0 0.0
    %2856 = vmatpush1.msra.mxu0 %v2795
    %2857 = vmatprep.subr.mxu0 0.0
    %2858 = vmatpush2.msra.mxu0 0.0
    %2859 = vmatprep.subr.mxu0 0.0
    %2860 = vmatpush2.msra.mxu0 0.0
    %2861 = vmatprep.subr.mxu0 0.0
    %2862 = vmatpush2.msra.mxu0 0.0
    %2863 = vmatprep.subr.mxu0 0.0
    %2864 = vmatpush2.msra.mxu0 0.0
    %2865 = vmatprep.subr.mxu0 0.0
    %2866 = vmatpush2.msra.mxu0 0.0
    %2867 = vmatprep.subr.mxu0 0.0
    %2868 = vmatpush2.msra.mxu0 0.0
    %2869 = vmatprep.subr.mxu0 0.0
    %2870 = vmatpush2.msra.mxu0 0.0
    %2871 = vmatprep.subr.mxu0 0.0
    %2872 = vmatpush2.msra.mxu0 0.0
    %2873 = vmatprep.subr.mxu0 0.0
    %2874 = vmatpush2.msra.mxu0 0.0
    %2875 = vmatprep.subr.mxu0 0.0
    %2876 = vmatpush2.msra.mxu0 0.0
    %2877 = vmatprep.subr.mxu0 0.0
    %2878 = vmatpush2.msra.mxu0 0.0
    %2879 = vmatprep.subr.mxu0 0.0
    %2880 = vmatpush2.msra.mxu0 0.0
    %2881 = vmatprep.subr.mxu0 0.0
    %2882 = vmatpush2.msra.mxu0 0.0
    %2883 = vmatprep.subr.mxu0 0.0
    %2884 = vmatpush2.msra.mxu0 0.0
    %2885 = vmatprep.subr.mxu0 0.0
    %2886 = vmatpush2.msra.mxu0 0.0
    %2887 = vmatprep.subr.mxu0 0.0
    %2888 = vmatpush2.msra.mxu0 0.0
    %2889 = vmatprep.mubr.f32.mxu0 0.0
    %2890 = vmatmul.mubr.f32.gmra.mxu0 %v2808
    %v2891 = vpop.f32.mrf.mxu0
    %v2892 = vadd.f32 %v2805, %v2891
    %v2893 = vpop.f32.mrf.mxu0
    %2894 = vmatprep.mubr.f32.mxu0 0.0
    %2895 = vmatmul.mubr.f32.gmra.mxu0 %v2811
    %v2896 = vpop.f32.mrf.mxu0
    %v2897 = vadd.f32 %v2805, %v2896
    %v2898 = vpop.f32.mrf.mxu0
    %2899 = vmatprep.mubr.f32.mxu0 0.0
    %2900 = vmatmul.mubr.f32.gmra.mxu0 %v2814
    %v2901 = vpop.f32.mrf.mxu0
    %v2902 = vadd.f32 %v2805, %v2901
    %v2903 = vpop.f32.mrf.mxu0
    %2904 = vmatprep.mubr.f32.mxu0 0.0
    %2905 = vmatmul.mubr.f32.gmra.mxu0 %v2817
    %v2906 = vpop.f32.mrf.mxu0
    %v2907 = vadd.f32 %v2805, %v2906
    %v2908 = vpop.f32.mrf.mxu0
    %2909 = vmatprep.mubr.f32.mxu0 0.0
    %2910 = vmatmul.mubr.f32.gmra.mxu0 %v2820
    %v2911 = vpop.f32.mrf.mxu0
    %v2912 = vadd.f32 %v2805, %v2911
    %v2913 = vpop.f32.mrf.mxu0
    %2914 = vmatprep.mubr.f32.mxu0 0.0
    %2915 = vmatmul.mubr.f32.gmra.mxu0 %v2823
    %v2916 = vpop.f32.mrf.mxu0
    %v2917 = vadd.f32 %v2805, %v2916
    %v2918 = vpop.f32.mrf.mxu0
    %2919 = vdwg.mxu0
    %s2920 = scalar_lea.vmem %s8, 32
    %v2921 = vld [vmem:[%s2920] sm:$0xff]
    %v2922 = vld [vmem:[%s2920 + $0x8] sm:$0xff]
    %v2923 = vld [vmem:[%s2920 + $0x10] sm:$0xff]
    %v2924 = vld [vmem:[%s2920 + $0x18] sm:$0xff]
    %2931 = vrot.lane.b32.xlu0 %v2892, 96
    %v2932 = vpop.permute.xlu0 %2931
    %2933 = vrot.lane.b32.xlu0 %v2897, 96
    %v2934 = vpop.permute.xlu0 %2933
    %2935 = vrot.lane.b32.xlu0 %v2902, 96
    %v2936 = vpop.permute.xlu0 %2935
    %2937 = vrot.lane.b32.xlu0 %v2907, 96
    %v2938 = vpop.permute.xlu0 %2937
    %2939 = vrot.lane.b32.xlu0 %v2912, 96
    %v2940 = vpop.permute.xlu0 %2939
    %2941 = vrot.lane.b32.xlu0 %v2917, 96
    %v2942 = vpop.permute.xlu0 %2941
    %v2943 = vsel %vm451, %v2892, 0
    %v2945 = vsel %vm451, %v2897, 0
    %v2947 = vsel %vm451, %v2902, 0
    %v2949 = vsel %vm451, %v2907, 0
    %v2951 = vsel %vm451, %v2912, 0
    %v2953 = vsel %vm451, %v2917, 0
    %v2955 = vsel %vm451, %v2932, 0
    %v2957 = vsel %vm451, %v2934, 0
    %v2959 = vsel %vm451, %v2936, 0
    %v2961 = vsel %vm451, %v2938, 0
    %v2963 = vsel %vm451, %v2940, 0
    %v2965 = vsel %vm451, %v2942, 0
    %2967 = vmatprep.subr.mxu0 0.0
    %2968 = vmatpush1.xpose.msra.mxu0 0.0
    %2969 = vmatprep.subr.mxu0 0.0
    %2970 = vmatpush1.xpose.msra.mxu0 0.0
    %2971 = vmatprep.subr.mxu0 0.0
    %2972 = vmatpush1.xpose.msra.mxu0 0.0
    %2973 = vmatprep.subr.mxu0 0.0
    %2974 = vmatpush1.xpose.msra.mxu0 0.0
    %2975 = vmatprep.subr.mxu0 0.0
    %2976 = vmatpush1.xpose.msra.mxu0 0.0
    %2977 = vmatprep.subr.mxu0 0.0
    %2978 = vmatpush1.xpose.msra.mxu0 0.0
    %2979 = vmatprep.subr.mxu0 0.0
    %2980 = vmatpush1.xpose.msra.mxu0 0.0
    %2981 = vmatprep.subr.mxu0 0.0
    %2982 = vmatpush1.xpose.msra.mxu0 0.0
    %2983 = vmatprep.subr.mxu0 0.0
    %2984 = vmatpush1.xpose.msra.mxu0 0.0
    %2985 = vmatprep.subr.mxu0 0.0
    %2986 = vmatpush1.xpose.msra.mxu0 0.0
    %2987 = vmatprep.subr.mxu0 0.0
    %2988 = vmatpush1.xpose.msra.mxu0 %v2965
    %2989 = vmatprep.subr.mxu0 0.0
    %2990 = vmatpush1.xpose.msra.mxu0 %v2963
    %2991 = vmatprep.subr.mxu0 0.0
    %2992 = vmatpush1.xpose.msra.mxu0 %v2961
    %2993 = vmatprep.subr.mxu0 0.0
    %2994 = vmatpush1.xpose.msra.mxu0 %v2959
    %2995 = vmatprep.subr.mxu0 0.0
    %2996 = vmatpush1.xpose.msra.mxu0 %v2957
    %2997 = vmatprep.subr.mxu0 0.0
    %2998 = vmatpush1.xpose.msra.mxu0 %v2955
    %2999 = vmatprep.subr.mxu0 0.0
    %3000 = vmatpush2.xpose.msra.mxu0 0.0
    %3001 = vmatprep.subr.mxu0 0.0
    %3002 = vmatpush2.xpose.msra.mxu0 0.0
    %3003 = vmatprep.subr.mxu0 0.0
    %3004 = vmatpush2.xpose.msra.mxu0 0.0
    %3005 = vmatprep.subr.mxu0 0.0
    %3006 = vmatpush2.xpose.msra.mxu0 0.0
    %3007 = vmatprep.subr.mxu0 0.0
    %3008 = vmatpush2.xpose.msra.mxu0 0.0
    %3009 = vmatprep.subr.mxu0 0.0
    %3010 = vmatpush2.xpose.msra.mxu0 0.0
    %3011 = vmatprep.subr.mxu0 0.0
    %3012 = vmatpush2.xpose.msra.mxu0 0.0
    %3013 = vmatprep.subr.mxu0 0.0
    %3014 = vmatpush2.xpose.msra.mxu0 0.0
    %3015 = vmatprep.subr.mxu0 0.0
    %3016 = vmatpush2.xpose.msra.mxu0 0.0
    %3017 = vmatprep.subr.mxu0 0.0
    %3018 = vmatpush2.xpose.msra.mxu0 0.0
    %3019 = vmatprep.subr.mxu0 0.0
    %3020 = vmatpush2.xpose.msra.mxu0 0.0
    %3021 = vmatprep.subr.mxu0 0.0
    %3022 = vmatpush2.xpose.msra.mxu0 0.0
    %3023 = vmatprep.subr.mxu0 0.0
    %3024 = vmatpush2.xpose.msra.mxu0 0.0
    %3025 = vmatprep.subr.mxu0 0.0
    %3026 = vmatpush2.xpose.msra.mxu0 0.0
    %3027 = vmatprep.subr.mxu0 0.0
    %3028 = vmatpush2.xpose.msra.mxu0 0.0
    %3029 = vmatprep.subr.mxu0 0.0
    %3030 = vmatpush2.xpose.msra.mxu0 0.0
    %3031 = vmatprep.mubr.f32.mxu0 0.0
    %3032 = vmatmul.mubr.f32.gmra.mxu0 %v2943
    %v3033 = vpop.f32.mrf.mxu0
    %v3034 = vadd.f32 %v193, %v3033
    %v3035 = vpop.f32.mrf.mxu0
    %3036 = vmatprep.mubr.f32.mxu0 0.0
    %3037 = vmatmul.mubr.f32.gmra.mxu0 %v2945
    %v3038 = vpop.f32.mrf.mxu0
    %v3039 = vadd.f32 %v194, %v3038
    %v3040 = vpop.f32.mrf.mxu0
    %3041 = vmatprep.mubr.f32.mxu0 0.0
    %3042 = vmatmul.mubr.f32.gmra.mxu0 %v2947
    %v3043 = vpop.f32.mrf.mxu0
    %v3044 = vadd.f32 %v195, %v3043
    %v3045 = vpop.f32.mrf.mxu0
    %3046 = vmatprep.mubr.f32.mxu0 0.0
    %3047 = vmatmul.mubr.f32.gmra.mxu0 %v2949
    %v3048 = vpop.f32.mrf.mxu0
    %v3049 = vadd.f32 %v196, %v3048
    %v3050 = vpop.f32.mrf.mxu0
    %3051 = vmatprep.mubr.f32.mxu0 0.0
    %3052 = vmatmul.mubr.f32.gmra.mxu0 %v2951
    %v3053 = vpop.f32.mrf.mxu0
    %v3054 = vadd.f32 %v197, %v3053
    %v3055 = vpop.f32.mrf.mxu0
    %3056 = vmatprep.mubr.f32.mxu0 0.0
    %3057 = vmatmul.mubr.f32.gmra.mxu0 %v2953
    %v3058 = vpop.f32.mrf.mxu0
    %v3059 = vadd.f32 %v198, %v3058
    %v3060 = vpop.f32.mrf.mxu0
    %3061 = vdwg.mxu0
    %v3062 = vsel %vm79, %v3034, -inf
    %3063 = vmax.xlane.f32.xlu0 %v3062
    %v3064 = vpop.xlane.xlu0 %3063
    %v3065 = vsel %vm79, %v3039, -inf
    %3066 = vmax.xlane.f32.xlu0 %v3065
    %v3067 = vpop.xlane.xlu0 %3066
    %v3068 = vsel %vm79, %v3044, -inf
    %3069 = vmax.xlane.f32.xlu0 %v3068
    %v3070 = vpop.xlane.xlu0 %3069
    %v3071 = vsel %vm79, %v3049, -inf
    %3072 = vmax.xlane.f32.xlu0 %v3071
    %v3073 = vpop.xlane.xlu0 %3072
    %v3074 = vsel %vm79, %v3054, -inf
    %3075 = vmax.xlane.f32.xlu0 %v3074
    %v3076 = vpop.xlane.xlu0 %3075
    %v3077 = vsel %vm79, %v3059, -inf
    %3078 = vmax.xlane.f32.xlu0 %v3077
    %v3079 = vpop.xlane.xlu0 %3078
    %v3080 = vsub.f32 %v3034, %v3064
    %v3081 = vsub.f32 %v3039, %v3067
    %v3082 = vsub.f32 %v3044, %v3070
    %v3083 = vsub.f32 %v3049, %v3073
    %v3084 = vsub.f32 %v3054, %v3076
    %v3085 = vsub.f32 %v3059, %v3079
    %v3086 = vmul.f32 %v3080, 1.442695
    %v3087 = vpow.pop %v3086
    %v3088 = vmul.f32 %v3081, 1.442695
    %v3089 = vpow.pop %v3088
    %v3090 = vmul.f32 %v3082, 1.442695
    %v3091 = vpow.pop %v3090
    %v3092 = vmul.f32 %v3083, 1.442695
    %v3093 = vpow.pop %v3092
    %v3094 = vmul.f32 %v3084, 1.442695
    %v3095 = vpow.pop %v3094
    %v3096 = vmul.f32 %v3085, 1.442695
    %v3097 = vpow.pop %v3096
    %v3098 = vsel %vm79, %v3087, 0.0
    %3099 = vadd.xlane.f32.xlu0 %v3098
    %v3100 = vpop.xlane.xlu0 %3099
    %v3101 = vsel %vm79, %v3089, 0.0
    %3102 = vadd.xlane.f32.xlu0 %v3101
    %v3103 = vpop.xlane.xlu0 %3102
    %v3104 = vsel %vm79, %v3091, 0.0
    %3105 = vadd.xlane.f32.xlu0 %v3104
    %v3106 = vpop.xlane.xlu0 %3105
    %v3107 = vsel %vm79, %v3093, 0.0
    %3108 = vadd.xlane.f32.xlu0 %v3107
    %v3109 = vpop.xlane.xlu0 %3108
    %v3110 = vsel %vm79, %v3095, 0.0
    %3111 = vadd.xlane.f32.xlu0 %v3110
    %v3112 = vpop.xlane.xlu0 %3111
    %v3113 = vsel %vm79, %v3097, 0.0
    %3114 = vadd.xlane.f32.xlu0 %v3113
    %v3115 = vpop.xlane.xlu0 %3114
    %3116 = vrot.lane.b32.xlu0 %v2892, 64
    %v3117 = vpop.permute.xlu0 %3116
    %3118 = vrot.lane.b32.xlu0 %v2897, 64
    %v3119 = vpop.permute.xlu0 %3118
    %3120 = vrot.lane.b32.xlu0 %v2902, 64
    %v3121 = vpop.permute.xlu0 %3120
    %3122 = vrot.lane.b32.xlu0 %v2907, 64
    %v3123 = vpop.permute.xlu0 %3122
    %3124 = vrot.lane.b32.xlu0 %v2912, 64
    %v3125 = vpop.permute.xlu0 %3124
    %3126 = vrot.lane.b32.xlu0 %v2917, 64
    %v3127 = vpop.permute.xlu0 %3126
    %v3135 = vsel %vm79, %v3087, 0
    %v3138 = vsel %vm79, %v3089, 0
    %v3141 = vsel %vm79, %v3091, 0
    %v3144 = vsel %vm79, %v3093, 0
    %v3147 = vsel %vm79, %v3095, 0
    %v3150 = vsel %vm79, %v3097, 0
    %3152 = vmatprep.subr.mxu0 0.0
    %3153 = vmatpush1.msra.mxu0 0.0
    %3154 = vmatprep.subr.mxu0 0.0
    %3155 = vmatpush1.msra.mxu0 0.0
    %3156 = vmatprep.subr.mxu0 0.0
    %3157 = vmatpush1.msra.mxu0 0.0
    %3158 = vmatprep.subr.mxu0 0.0
    %3159 = vmatpush1.msra.mxu0 0.0
    %3160 = vmatprep.subr.mxu0 0.0
    %3161 = vmatpush1.msra.mxu0 0.0
    %3162 = vmatprep.subr.mxu0 0.0
    %3163 = vmatpush1.msra.mxu0 0.0
    %3164 = vmatprep.subr.mxu0 0.0
    %3165 = vmatpush1.msra.mxu0 0.0
    %3166 = vmatprep.subr.mxu0 0.0
    %3167 = vmatpush1.msra.mxu0 0.0
    %3168 = vmatprep.subr.mxu0 0.0
    %3169 = vmatpush1.msra.mxu0 0.0
    %3170 = vmatprep.subr.mxu0 0.0
    %3171 = vmatpush1.msra.mxu0 0.0
    %3172 = vmatprep.subr.mxu0 0.0
    %3173 = vmatpush1.msra.mxu0 %v3127
    %3174 = vmatprep.subr.mxu0 0.0
    %3175 = vmatpush1.msra.mxu0 %v3125
    %3176 = vmatprep.subr.mxu0 0.0
    %3177 = vmatpush1.msra.mxu0 %v3123
    %3178 = vmatprep.subr.mxu0 0.0
    %3179 = vmatpush1.msra.mxu0 %v3121
    %3180 = vmatprep.subr.mxu0 0.0
    %3181 = vmatpush1.msra.mxu0 %v3119
    %3182 = vmatprep.subr.mxu0 0.0
    %3183 = vmatpush1.msra.mxu0 %v3117
    %3184 = vmatprep.subr.mxu0 0.0
    %3185 = vmatpush2.msra.mxu0 0.0
    %3186 = vmatprep.subr.mxu0 0.0
    %3187 = vmatpush2.msra.mxu0 0.0
    %3188 = vmatprep.subr.mxu0 0.0
    %3189 = vmatpush2.msra.mxu0 0.0
    %3190 = vmatprep.subr.mxu0 0.0
    %3191 = vmatpush2.msra.mxu0 0.0
    %3192 = vmatprep.subr.mxu0 0.0
    %3193 = vmatpush2.msra.mxu0 0.0
    %3194 = vmatprep.subr.mxu0 0.0
    %3195 = vmatpush2.msra.mxu0 0.0
    %3196 = vmatprep.subr.mxu0 0.0
    %3197 = vmatpush2.msra.mxu0 0.0
    %3198 = vmatprep.subr.mxu0 0.0
    %3199 = vmatpush2.msra.mxu0 0.0
    %3200 = vmatprep.subr.mxu0 0.0
    %3201 = vmatpush2.msra.mxu0 0.0
    %3202 = vmatprep.subr.mxu0 0.0
    %3203 = vmatpush2.msra.mxu0 0.0
    %3204 = vmatprep.subr.mxu0 0.0
    %3205 = vmatpush2.msra.mxu0 0.0
    %3206 = vmatprep.subr.mxu0 0.0
    %3207 = vmatpush2.msra.mxu0 0.0
    %3208 = vmatprep.subr.mxu0 0.0
    %3209 = vmatpush2.msra.mxu0 0.0
    %3210 = vmatprep.subr.mxu0 0.0
    %3211 = vmatpush2.msra.mxu0 0.0
    %3212 = vmatprep.subr.mxu0 0.0
    %3213 = vmatpush2.msra.mxu0 0.0
    %3214 = vmatprep.subr.mxu0 0.0
    %3215 = vmatpush2.msra.mxu0 0.0
    %3216 = vmatprep.mubr.f32.mxu0 0.0
    %3217 = vmatmul.mubr.f32.gmra.mxu0 %v3135
    %v3218 = vpop.f32.mrf.mxu0
    %v3219 = vadd.f32 0.0, %v3218
    %v3220 = vpop.f32.mrf.mxu0
    %3221 = vmatprep.mubr.f32.mxu0 0.0
    %3222 = vmatmul.mubr.f32.gmra.mxu0 %v3138
    %v3223 = vpop.f32.mrf.mxu0
    %v3224 = vadd.f32 0.0, %v3223
    %v3225 = vpop.f32.mrf.mxu0
    %3226 = vmatprep.mubr.f32.mxu0 0.0
    %3227 = vmatmul.mubr.f32.gmra.mxu0 %v3141
    %v3228 = vpop.f32.mrf.mxu0
    %v3229 = vadd.f32 0.0, %v3228
    %v3230 = vpop.f32.mrf.mxu0
    %3231 = vmatprep.mubr.f32.mxu0 0.0
    %3232 = vmatmul.mubr.f32.gmra.mxu0 %v3144
    %v3233 = vpop.f32.mrf.mxu0
    %v3234 = vadd.f32 0.0, %v3233
    %v3235 = vpop.f32.mrf.mxu0
    %3236 = vmatprep.mubr.f32.mxu0 0.0
    %3237 = vmatmul.mubr.f32.gmra.mxu0 %v3147
    %v3238 = vpop.f32.mrf.mxu0
    %v3239 = vadd.f32 0.0, %v3238
    %v3240 = vpop.f32.mrf.mxu0
    %3241 = vmatprep.mubr.f32.mxu0 0.0
    %3242 = vmatmul.mubr.f32.gmra.mxu0 %v3150
    %v3243 = vpop.f32.mrf.mxu0
    %v3244 = vadd.f32 0.0, %v3243
    %v3245 = vpop.f32.mrf.mxu0
    %3246 = vdwg.mxu0
    %v3247 = vrcp.pop %v3100
    %v3248 = vrcp.pop %v3103
    %v3249 = vrcp.pop %v3106
    %v3250 = vrcp.pop %v3109
    %v3251 = vrcp.pop %v3112
    %v3252 = vrcp.pop %v3115
    %v3253 = vmul.f32 %v3219, %v3247
    %v3254 = vmul.f32 %v3224, %v3248
    %v3255 = vmul.f32 %v3229, %v3249
    %v3256 = vmul.f32 %v3234, %v3250
    %v3257 = vmul.f32 %v3239, %v3251
    %v3258 = vmul.f32 %v3244, %v3252
    %3259 = vrot.lane.b32.xlu0 %v2892, 120
    %v3260 = vpop.permute.xlu0 %3259
    %3261 = vrot.lane.b32.xlu0 %v2897, 120
    %v3262 = vpop.permute.xlu0 %3261
    %3263 = vrot.lane.b32.xlu0 %v2902, 120
    %v3264 = vpop.permute.xlu0 %3263
    %3265 = vrot.lane.b32.xlu0 %v2907, 120
    %v3266 = vpop.permute.xlu0 %3265
    %3267 = vrot.lane.b32.xlu0 %v2912, 120
    %v3268 = vpop.permute.xlu0 %3267
    %3269 = vrot.lane.b32.xlu0 %v2917, 120
    %v3270 = vpop.permute.xlu0 %3269
    %3271 = vrot.lane.b32.xlu0 %v2892, 88
    %v3272 = vpop.permute.xlu0 %3271
    %3273 = vrot.lane.b32.xlu0 %v2897, 88
    %v3274 = vpop.permute.xlu0 %3273
    %3275 = vrot.lane.b32.xlu0 %v2902, 88
    %v3276 = vpop.permute.xlu0 %3275
    %3277 = vrot.lane.b32.xlu0 %v2907, 88
    %v3278 = vpop.permute.xlu0 %3277
    %3279 = vrot.lane.b32.xlu0 %v2912, 88
    %v3280 = vpop.permute.xlu0 %3279
    %3281 = vrot.lane.b32.xlu0 %v2917, 88
    %v3282 = vpop.permute.xlu0 %3281
    %v3283 = vsel %vm451, %v3260, 0
    %v3285 = vsel %vm451, %v3262, 0
    %v3287 = vsel %vm451, %v3264, 0
    %v3289 = vsel %vm451, %v3266, 0
    %v3291 = vsel %vm451, %v3268, 0
    %v3293 = vsel %vm451, %v3270, 0
    %v3295 = vsel %vm451, %v3272, 0
    %v3297 = vsel %vm451, %v3274, 0
    %v3299 = vsel %vm451, %v3276, 0
    %v3301 = vsel %vm451, %v3278, 0
    %v3303 = vsel %vm451, %v3280, 0
    %v3305 = vsel %vm451, %v3282, 0
    %3307 = vmatprep.subr.mxu0 0.0
    %3308 = vmatpush1.xpose.msra.mxu0 0.0
    %3309 = vmatprep.subr.mxu0 0.0
    %3310 = vmatpush1.xpose.msra.mxu0 0.0
    %3311 = vmatprep.subr.mxu0 0.0
    %3312 = vmatpush1.xpose.msra.mxu0 0.0
    %3313 = vmatprep.subr.mxu0 0.0
    %3314 = vmatpush1.xpose.msra.mxu0 0.0
    %3315 = vmatprep.subr.mxu0 0.0
    %3316 = vmatpush1.xpose.msra.mxu0 0.0
    %3317 = vmatprep.subr.mxu0 0.0
    %3318 = vmatpush1.xpose.msra.mxu0 0.0
    %3319 = vmatprep.subr.mxu0 0.0
    %3320 = vmatpush1.xpose.msra.mxu0 0.0
    %3321 = vmatprep.subr.mxu0 0.0
    %3322 = vmatpush1.xpose.msra.mxu0 0.0
    %3323 = vmatprep.subr.mxu0 0.0
    %3324 = vmatpush1.xpose.msra.mxu0 0.0
    %3325 = vmatprep.subr.mxu0 0.0
    %3326 = vmatpush1.xpose.msra.mxu0 0.0
    %3327 = vmatprep.subr.mxu0 0.0
    %3328 = vmatpush1.xpose.msra.mxu0 %v3305
    %3329 = vmatprep.subr.mxu0 0.0
    %3330 = vmatpush1.xpose.msra.mxu0 %v3303
    %3331 = vmatprep.subr.mxu0 0.0
    %3332 = vmatpush1.xpose.msra.mxu0 %v3301
    %3333 = vmatprep.subr.mxu0 0.0
    %3334 = vmatpush1.xpose.msra.mxu0 %v3299
    %3335 = vmatprep.subr.mxu0 0.0
    %3336 = vmatpush1.xpose.msra.mxu0 %v3297
    %3337 = vmatprep.subr.mxu0 0.0
    %3338 = vmatpush1.xpose.msra.mxu0 %v3295
    %3339 = vmatprep.subr.mxu0 0.0
    %3340 = vmatpush2.xpose.msra.mxu0 0.0
    %3341 = vmatprep.subr.mxu0 0.0
    %3342 = vmatpush2.xpose.msra.mxu0 0.0
    %3343 = vmatprep.subr.mxu0 0.0
    %3344 = vmatpush2.xpose.msra.mxu0 0.0
    %3345 = vmatprep.subr.mxu0 0.0
    %3346 = vmatpush2.xpose.msra.mxu0 0.0
    %3347 = vmatprep.subr.mxu0 0.0
    %3348 = vmatpush2.xpose.msra.mxu0 0.0
    %3349 = vmatprep.subr.mxu0 0.0
    %3350 = vmatpush2.xpose.msra.mxu0 0.0
    %3351 = vmatprep.subr.mxu0 0.0
    %3352 = vmatpush2.xpose.msra.mxu0 0.0
    %3353 = vmatprep.subr.mxu0 0.0
    %3354 = vmatpush2.xpose.msra.mxu0 0.0
    %3355 = vmatprep.subr.mxu0 0.0
    %3356 = vmatpush2.xpose.msra.mxu0 0.0
    %3357 = vmatprep.subr.mxu0 0.0
    %3358 = vmatpush2.xpose.msra.mxu0 0.0
    %3359 = vmatprep.subr.mxu0 0.0
    %3360 = vmatpush2.xpose.msra.mxu0 0.0
    %3361 = vmatprep.subr.mxu0 0.0
    %3362 = vmatpush2.xpose.msra.mxu0 0.0
    %3363 = vmatprep.subr.mxu0 0.0
    %3364 = vmatpush2.xpose.msra.mxu0 0.0
    %3365 = vmatprep.subr.mxu0 0.0
    %3366 = vmatpush2.xpose.msra.mxu0 0.0
    %3367 = vmatprep.subr.mxu0 0.0
    %3368 = vmatpush2.xpose.msra.mxu0 0.0
    %3369 = vmatprep.subr.mxu0 0.0
    %3370 = vmatpush2.xpose.msra.mxu0 0.0
    %3371 = vmatprep.mubr.f32.mxu0 0.0
    %3372 = vmatmul.mubr.f32.gmra.mxu0 %v3283
    %v3373 = vpop.f32.mrf.mxu0
    %v3374 = vadd.f32 %v193, %v3373
    %v3375 = vpop.f32.mrf.mxu0
    %3376 = vmatprep.mubr.f32.mxu0 0.0
    %3377 = vmatmul.mubr.f32.gmra.mxu0 %v3285
    %v3378 = vpop.f32.mrf.mxu0
    %v3379 = vadd.f32 %v194, %v3378
    %v3380 = vpop.f32.mrf.mxu0
    %3381 = vmatprep.mubr.f32.mxu0 0.0
    %3382 = vmatmul.mubr.f32.gmra.mxu0 %v3287
    %v3383 = vpop.f32.mrf.mxu0
    %v3384 = vadd.f32 %v195, %v3383
    %v3385 = vpop.f32.mrf.mxu0
    %3386 = vmatprep.mubr.f32.mxu0 0.0
    %3387 = vmatmul.mubr.f32.gmra.mxu0 %v3289
    %v3388 = vpop.f32.mrf.mxu0
    %v3389 = vadd.f32 %v196, %v3388
    %v3390 = vpop.f32.mrf.mxu0
    %3391 = vmatprep.mubr.f32.mxu0 0.0
    %3392 = vmatmul.mubr.f32.gmra.mxu0 %v3291
    %v3393 = vpop.f32.mrf.mxu0
    %v3394 = vadd.f32 %v197, %v3393
    %v3395 = vpop.f32.mrf.mxu0
    %3396 = vmatprep.mubr.f32.mxu0 0.0
    %3397 = vmatmul.mubr.f32.gmra.mxu0 %v3293
    %v3398 = vpop.f32.mrf.mxu0
    %v3399 = vadd.f32 %v198, %v3398
    %v3400 = vpop.f32.mrf.mxu0
    %3401 = vdwg.mxu0
    %v3402 = vsel %vm79, %v3374, -inf
    %3403 = vmax.xlane.f32.xlu0 %v3402
    %v3404 = vpop.xlane.xlu0 %3403
    %v3405 = vsel %vm79, %v3379, -inf
    %3406 = vmax.xlane.f32.xlu0 %v3405
    %v3407 = vpop.xlane.xlu0 %3406
    %v3408 = vsel %vm79, %v3384, -inf
    %3409 = vmax.xlane.f32.xlu0 %v3408
    %v3410 = vpop.xlane.xlu0 %3409
    %v3411 = vsel %vm79, %v3389, -inf
    %3412 = vmax.xlane.f32.xlu0 %v3411
    %v3413 = vpop.xlane.xlu0 %3412
    %v3414 = vsel %vm79, %v3394, -inf
    %3415 = vmax.xlane.f32.xlu0 %v3414
    %v3416 = vpop.xlane.xlu0 %3415
    %v3417 = vsel %vm79, %v3399, -inf
    %3418 = vmax.xlane.f32.xlu0 %v3417
    %v3419 = vpop.xlane.xlu0 %3418
    %v3420 = vsub.f32 %v3374, %v3404
    %v3421 = vsub.f32 %v3379, %v3407
    %v3422 = vsub.f32 %v3384, %v3410
    %v3423 = vsub.f32 %v3389, %v3413
    %v3424 = vsub.f32 %v3394, %v3416
    %v3425 = vsub.f32 %v3399, %v3419
    %v3426 = vmul.f32 %v3420, 1.442695
    %v3427 = vpow.pop %v3426
    %v3428 = vmul.f32 %v3421, 1.442695
    %v3429 = vpow.pop %v3428
    %v3430 = vmul.f32 %v3422, 1.442695
    %v3431 = vpow.pop %v3430
    %v3432 = vmul.f32 %v3423, 1.442695
    %v3433 = vpow.pop %v3432
    %v3434 = vmul.f32 %v3424, 1.442695
    %v3435 = vpow.pop %v3434
    %v3436 = vmul.f32 %v3425, 1.442695
    %v3437 = vpow.pop %v3436
    %v3438 = vsel %vm79, %v3427, 0.0
    %3439 = vadd.xlane.f32.xlu0 %v3438
    %v3440 = vpop.xlane.xlu0 %3439
    %v3441 = vsel %vm79, %v3429, 0.0
    %3442 = vadd.xlane.f32.xlu0 %v3441
    %v3443 = vpop.xlane.xlu0 %3442
    %v3444 = vsel %vm79, %v3431, 0.0
    %3445 = vadd.xlane.f32.xlu0 %v3444
    %v3446 = vpop.xlane.xlu0 %3445
    %v3447 = vsel %vm79, %v3433, 0.0
    %3448 = vadd.xlane.f32.xlu0 %v3447
    %v3449 = vpop.xlane.xlu0 %3448
    %v3450 = vsel %vm79, %v3435, 0.0
    %3451 = vadd.xlane.f32.xlu0 %v3450
    %v3452 = vpop.xlane.xlu0 %3451
    %v3453 = vsel %vm79, %v3437, 0.0
    %3454 = vadd.xlane.f32.xlu0 %v3453
    %v3455 = vpop.xlane.xlu0 %3454
    %3456 = vrot.lane.b32.xlu0 %v2892, 56
    %v3457 = vpop.permute.xlu0 %3456
    %3458 = vrot.lane.b32.xlu0 %v2897, 56
    %v3459 = vpop.permute.xlu0 %3458
    %3460 = vrot.lane.b32.xlu0 %v2902, 56
    %v3461 = vpop.permute.xlu0 %3460
    %3462 = vrot.lane.b32.xlu0 %v2907, 56
    %v3463 = vpop.permute.xlu0 %3462
    %3464 = vrot.lane.b32.xlu0 %v2912, 56
    %v3465 = vpop.permute.xlu0 %3464
    %3466 = vrot.lane.b32.xlu0 %v2917, 56
    %v3467 = vpop.permute.xlu0 %3466
    %v3475 = vsel %vm79, %v3427, 0
    %v3478 = vsel %vm79, %v3429, 0
    %v3481 = vsel %vm79, %v3431, 0
    %v3484 = vsel %vm79, %v3433, 0
    %v3487 = vsel %vm79, %v3435, 0
    %v3490 = vsel %vm79, %v3437, 0
    %3492 = vmatprep.subr.mxu0 0.0
    %3493 = vmatpush1.msra.mxu0 0.0
    %3494 = vmatprep.subr.mxu0 0.0
    %3495 = vmatpush1.msra.mxu0 0.0
    %3496 = vmatprep.subr.mxu0 0.0
    %3497 = vmatpush1.msra.mxu0 0.0
    %3498 = vmatprep.subr.mxu0 0.0
    %3499 = vmatpush1.msra.mxu0 0.0
    %3500 = vmatprep.subr.mxu0 0.0
    %3501 = vmatpush1.msra.mxu0 0.0
    %3502 = vmatprep.subr.mxu0 0.0
    %3503 = vmatpush1.msra.mxu0 0.0
    %3504 = vmatprep.subr.mxu0 0.0
    %3505 = vmatpush1.msra.mxu0 0.0
    %3506 = vmatprep.subr.mxu0 0.0
    %3507 = vmatpush1.msra.mxu0 0.0
    %3508 = vmatprep.subr.mxu0 0.0
    %3509 = vmatpush1.msra.mxu0 0.0
    %3510 = vmatprep.subr.mxu0 0.0
    %3511 = vmatpush1.msra.mxu0 0.0
    %3512 = vmatprep.subr.mxu0 0.0
    %3513 = vmatpush1.msra.mxu0 %v3467
    %3514 = vmatprep.subr.mxu0 0.0
    %3515 = vmatpush1.msra.mxu0 %v3465
    %3516 = vmatprep.subr.mxu0 0.0
    %3517 = vmatpush1.msra.mxu0 %v3463
    %3518 = vmatprep.subr.mxu0 0.0
    %3519 = vmatpush1.msra.mxu0 %v3461
    %3520 = vmatprep.subr.mxu0 0.0
    %3521 = vmatpush1.msra.mxu0 %v3459
    %3522 = vmatprep.subr.mxu0 0.0
    %3523 = vmatpush1.msra.mxu0 %v3457
    %3524 = vmatprep.subr.mxu0 0.0
    %3525 = vmatpush2.msra.mxu0 0.0
    %3526 = vmatprep.subr.mxu0 0.0
    %3527 = vmatpush2.msra.mxu0 0.0
    %3528 = vmatprep.subr.mxu0 0.0
    %3529 = vmatpush2.msra.mxu0 0.0
    %3530 = vmatprep.subr.mxu0 0.0
    %3531 = vmatpush2.msra.mxu0 0.0
    %3532 = vmatprep.subr.mxu0 0.0
    %3533 = vmatpush2.msra.mxu0 0.0
    %3534 = vmatprep.subr.mxu0 0.0
    %3535 = vmatpush2.msra.mxu0 0.0
    %3536 = vmatprep.subr.mxu0 0.0
    %3537 = vmatpush2.msra.mxu0 0.0
    %3538 = vmatprep.subr.mxu0 0.0
    %3539 = vmatpush2.msra.mxu0 0.0
    %3540 = vmatprep.subr.mxu0 0.0
    %3541 = vmatpush2.msra.mxu0 0.0
    %3542 = vmatprep.subr.mxu0 0.0
    %3543 = vmatpush2.msra.mxu0 0.0
    %3544 = vmatprep.subr.mxu0 0.0
    %3545 = vmatpush2.msra.mxu0 0.0
    %3546 = vmatprep.subr.mxu0 0.0
    %3547 = vmatpush2.msra.mxu0 0.0
    %3548 = vmatprep.subr.mxu0 0.0
    %3549 = vmatpush2.msra.mxu0 0.0
    %3550 = vmatprep.subr.mxu0 0.0
    %3551 = vmatpush2.msra.mxu0 0.0
    %3552 = vmatprep.subr.mxu0 0.0
    %3553 = vmatpush2.msra.mxu0 0.0
    %3554 = vmatprep.subr.mxu0 0.0
    %3555 = vmatpush2.msra.mxu0 0.0
    %3556 = vmatprep.mubr.f32.mxu0 0.0
    %3557 = vmatmul.mubr.f32.gmra.mxu0 %v3475
    %v3558 = vpop.f32.mrf.mxu0
    %v3559 = vadd.f32 0.0, %v3558
    %v3560 = vpop.f32.mrf.mxu0
    %3561 = vmatprep.mubr.f32.mxu0 0.0
    %3562 = vmatmul.mubr.f32.gmra.mxu0 %v3478
    %v3563 = vpop.f32.mrf.mxu0
    %v3564 = vadd.f32 0.0, %v3563
    %v3565 = vpop.f32.mrf.mxu0
    %3566 = vmatprep.mubr.f32.mxu0 0.0
    %3567 = vmatmul.mubr.f32.gmra.mxu0 %v3481
    %v3568 = vpop.f32.mrf.mxu0
    %v3569 = vadd.f32 0.0, %v3568
    %v3570 = vpop.f32.mrf.mxu0
    %3571 = vmatprep.mubr.f32.mxu0 0.0
    %3572 = vmatmul.mubr.f32.gmra.mxu0 %v3484
    %v3573 = vpop.f32.mrf.mxu0
    %v3574 = vadd.f32 0.0, %v3573
    %v3575 = vpop.f32.mrf.mxu0
    %3576 = vmatprep.mubr.f32.mxu0 0.0
    %3577 = vmatmul.mubr.f32.gmra.mxu0 %v3487
    %v3578 = vpop.f32.mrf.mxu0
    %v3579 = vadd.f32 0.0, %v3578
    %v3580 = vpop.f32.mrf.mxu0
    %3581 = vmatprep.mubr.f32.mxu0 0.0
    %3582 = vmatmul.mubr.f32.gmra.mxu0 %v3490
    %v3583 = vpop.f32.mrf.mxu0
    %v3584 = vadd.f32 0.0, %v3583
    %v3585 = vpop.f32.mrf.mxu0
    %3586 = vdwg.mxu0
    %v3587 = vrcp.pop %v3440
    %v3588 = vrcp.pop %v3443
    %v3589 = vrcp.pop %v3446
    %v3590 = vrcp.pop %v3449
    %v3591 = vrcp.pop %v3452
    %v3592 = vrcp.pop %v3455
    %v3593 = vmul.f32 %v3559, %v3587
    %v3594 = vmul.f32 %v3564, %v3588
    %v3595 = vmul.f32 %v3569, %v3589
    %v3596 = vmul.f32 %v3574, %v3590
    %v3597 = vmul.f32 %v3579, %v3591
    %v3598 = vmul.f32 %v3584, %v3592
    %v3600 = vsel %vm451, %v3593, 0
    %v3603 = vsel %vm451, %v3594, 0
    %v3606 = vsel %vm451, %v3595, 0
    %v3609 = vsel %vm451, %v3596, 0
    %v3612 = vsel %vm451, %v3597, 0
    %v3615 = vsel %vm451, %v3598, 0
    %3617 = vmatprep.subr.mxu0 0.0
    %3618 = vmatpush1.msra.mxu0 0.0
    %3619 = vmatprep.subr.mxu0 0.0
    %3620 = vmatpush1.msra.mxu0 0.0
    %3621 = vmatprep.subr.mxu0 0.0
    %3622 = vmatpush1.msra.mxu0 0.0
    %3623 = vmatprep.subr.mxu0 0.0
    %3624 = vmatpush1.msra.mxu0 0.0
    %3625 = vmatprep.subr.mxu0 0.0
    %3626 = vmatpush1.msra.mxu0 0.0
    %3627 = vmatprep.subr.mxu0 0.0
    %3628 = vmatpush1.msra.mxu0 0.0
    %3629 = vmatprep.subr.mxu0 0.0
    %3630 = vmatpush1.msra.mxu0 0.0
    %3631 = vmatprep.subr.mxu0 0.0
    %3632 = vmatpush1.msra.mxu0 0.0
    %3633 = vmatprep.subr.mxu0 0.0
    %3634 = vmatpush1.msra.mxu0 0.0
    %3635 = vmatprep.subr.mxu0 0.0
    %3636 = vmatpush1.msra.mxu0 0.0
    %3637 = vmatprep.subr.mxu0 0.0
    %3638 = vmatpush1.msra.mxu0 0.0
    %3639 = vmatprep.subr.mxu0 0.0
    %3640 = vmatpush1.msra.mxu0 0.0
    %3641 = vmatprep.subr.mxu0 0.0
    %3642 = vmatpush1.msra.mxu0 0.0
    %3643 = vmatprep.subr.mxu0 0.0
    %3644 = vmatpush1.msra.mxu0 0.0
    %3645 = vmatprep.subr.mxu0 0.0
    %3646 = vmatpush1.msra.mxu0 0.0
    %3647 = vmatprep.subr.mxu0 0.0
    %3648 = vmatpush1.msra.mxu0 %v2922
    %3649 = vmatprep.subr.mxu0 0.0
    %3650 = vmatpush2.msra.mxu0 0.0
    %3651 = vmatprep.subr.mxu0 0.0
    %3652 = vmatpush2.msra.mxu0 0.0
    %3653 = vmatprep.subr.mxu0 0.0
    %3654 = vmatpush2.msra.mxu0 0.0
    %3655 = vmatprep.subr.mxu0 0.0
    %3656 = vmatpush2.msra.mxu0 0.0
    %3657 = vmatprep.subr.mxu0 0.0
    %3658 = vmatpush2.msra.mxu0 0.0
    %3659 = vmatprep.subr.mxu0 0.0
    %3660 = vmatpush2.msra.mxu0 0.0
    %3661 = vmatprep.subr.mxu0 0.0
    %3662 = vmatpush2.msra.mxu0 0.0
    %3663 = vmatprep.subr.mxu0 0.0
    %3664 = vmatpush2.msra.mxu0 0.0
    %3665 = vmatprep.subr.mxu0 0.0
    %3666 = vmatpush2.msra.mxu0 0.0
    %3667 = vmatprep.subr.mxu0 0.0
    %3668 = vmatpush2.msra.mxu0 0.0
    %3669 = vmatprep.subr.mxu0 0.0
    %3670 = vmatpush2.msra.mxu0 0.0
    %3671 = vmatprep.subr.mxu0 0.0
    %3672 = vmatpush2.msra.mxu0 0.0
    %3673 = vmatprep.subr.mxu0 0.0
    %3674 = vmatpush2.msra.mxu0 0.0
    %3675 = vmatprep.subr.mxu0 0.0
    %3676 = vmatpush2.msra.mxu0 0.0
    %3677 = vmatprep.subr.mxu0 0.0
    %3678 = vmatpush2.msra.mxu0 0.0
    %3679 = vmatprep.subr.mxu0 0.0
    %3680 = vmatpush2.msra.mxu0 0.0
    %3681 = vmatprep.mubr.f32.mxu0 0.0
    %3682 = vmatmul.mubr.f32.gmra.mxu0 %v3600
    %v3683 = vpop.f32.mrf.mxu0
    %v3684 = vadd.f32 0.0, %v3683
    %v3685 = vpop.f32.mrf.mxu0
    %3686 = vmatprep.mubr.f32.mxu0 0.0
    %3687 = vmatmul.mubr.f32.gmra.mxu0 %v3603
    %v3688 = vpop.f32.mrf.mxu0
    %v3689 = vadd.f32 0.0, %v3688
    %v3690 = vpop.f32.mrf.mxu0
    %3691 = vmatprep.mubr.f32.mxu0 0.0
    %3692 = vmatmul.mubr.f32.gmra.mxu0 %v3606
    %v3693 = vpop.f32.mrf.mxu0
    %v3694 = vadd.f32 0.0, %v3693
    %v3695 = vpop.f32.mrf.mxu0
    %3696 = vmatprep.mubr.f32.mxu0 0.0
    %3697 = vmatmul.mubr.f32.gmra.mxu0 %v3609
    %v3698 = vpop.f32.mrf.mxu0
    %v3699 = vadd.f32 0.0, %v3698
    %v3700 = vpop.f32.mrf.mxu0
    %3701 = vmatprep.mubr.f32.mxu0 0.0
    %3702 = vmatmul.mubr.f32.gmra.mxu0 %v3612
    %v3703 = vpop.f32.mrf.mxu0
    %v3704 = vadd.f32 0.0, %v3703
    %v3705 = vpop.f32.mrf.mxu0
    %3706 = vmatprep.mubr.f32.mxu0 0.0
    %3707 = vmatmul.mubr.f32.gmra.mxu0 %v3615
    %v3708 = vpop.f32.mrf.mxu0
    %v3709 = vadd.f32 0.0, %v3708
    %v3710 = vpop.f32.mrf.mxu0
    %3711 = vdwg.mxu0
    %v3713 = vsel %vm451, %v3253, 0
    %v3716 = vsel %vm451, %v3254, 0
    %v3719 = vsel %vm451, %v3255, 0
    %v3722 = vsel %vm451, %v3256, 0
    %v3725 = vsel %vm451, %v3257, 0
    %v3728 = vsel %vm451, %v3258, 0
    %3730 = vmatprep.subr.mxu0 0.0
    %3731 = vmatpush1.msra.mxu0 0.0
    %3732 = vmatprep.subr.mxu0 0.0
    %3733 = vmatpush1.msra.mxu0 0.0
    %3734 = vmatprep.subr.mxu0 0.0
    %3735 = vmatpush1.msra.mxu0 0.0
    %3736 = vmatprep.subr.mxu0 0.0
    %3737 = vmatpush1.msra.mxu0 0.0
    %3738 = vmatprep.subr.mxu0 0.0
    %3739 = vmatpush1.msra.mxu0 0.0
    %3740 = vmatprep.subr.mxu0 0.0
    %3741 = vmatpush1.msra.mxu0 0.0
    %3742 = vmatprep.subr.mxu0 0.0
    %3743 = vmatpush1.msra.mxu0 0.0
    %3744 = vmatprep.subr.mxu0 0.0
    %3745 = vmatpush1.msra.mxu0 0.0
    %3746 = vmatprep.subr.mxu0 0.0
    %3747 = vmatpush1.msra.mxu0 0.0
    %3748 = vmatprep.subr.mxu0 0.0
    %3749 = vmatpush1.msra.mxu0 0.0
    %3750 = vmatprep.subr.mxu0 0.0
    %3751 = vmatpush1.msra.mxu0 0.0
    %3752 = vmatprep.subr.mxu0 0.0
    %3753 = vmatpush1.msra.mxu0 0.0
    %3754 = vmatprep.subr.mxu0 0.0
    %3755 = vmatpush1.msra.mxu0 0.0
    %3756 = vmatprep.subr.mxu0 0.0
    %3757 = vmatpush1.msra.mxu0 0.0
    %3758 = vmatprep.subr.mxu0 0.0
    %3759 = vmatpush1.msra.mxu0 0.0
    %3760 = vmatprep.subr.mxu0 0.0
    %3761 = vmatpush1.msra.mxu0 %v2921
    %3762 = vmatprep.subr.mxu0 0.0
    %3763 = vmatpush2.msra.mxu0 0.0
    %3764 = vmatprep.subr.mxu0 0.0
    %3765 = vmatpush2.msra.mxu0 0.0
    %3766 = vmatprep.subr.mxu0 0.0
    %3767 = vmatpush2.msra.mxu0 0.0
    %3768 = vmatprep.subr.mxu0 0.0
    %3769 = vmatpush2.msra.mxu0 0.0
    %3770 = vmatprep.subr.mxu0 0.0
    %3771 = vmatpush2.msra.mxu0 0.0
    %3772 = vmatprep.subr.mxu0 0.0
    %3773 = vmatpush2.msra.mxu0 0.0
    %3774 = vmatprep.subr.mxu0 0.0
    %3775 = vmatpush2.msra.mxu0 0.0
    %3776 = vmatprep.subr.mxu0 0.0
    %3777 = vmatpush2.msra.mxu0 0.0
    %3778 = vmatprep.subr.mxu0 0.0
    %3779 = vmatpush2.msra.mxu0 0.0
    %3780 = vmatprep.subr.mxu0 0.0
    %3781 = vmatpush2.msra.mxu0 0.0
    %3782 = vmatprep.subr.mxu0 0.0
    %3783 = vmatpush2.msra.mxu0 0.0
    %3784 = vmatprep.subr.mxu0 0.0
    %3785 = vmatpush2.msra.mxu0 0.0
    %3786 = vmatprep.subr.mxu0 0.0
    %3787 = vmatpush2.msra.mxu0 0.0
    %3788 = vmatprep.subr.mxu0 0.0
    %3789 = vmatpush2.msra.mxu0 0.0
    %3790 = vmatprep.subr.mxu0 0.0
    %3791 = vmatpush2.msra.mxu0 0.0
    %3792 = vmatprep.subr.mxu0 0.0
    %3793 = vmatpush2.msra.mxu0 0.0
    %3794 = vmatprep.mubr.f32.mxu0 0.0
    %3795 = vmatmul.mubr.f32.gmra.mxu0 %v3713
    %v3796 = vpop.f32.mrf.mxu0
    %v3797 = vadd.f32 %v3684, %v3796
    %v3798 = vpop.f32.mrf.mxu0
    %3799 = vmatprep.mubr.f32.mxu0 0.0
    %3800 = vmatmul.mubr.f32.gmra.mxu0 %v3716
    %v3801 = vpop.f32.mrf.mxu0
    %v3802 = vadd.f32 %v3689, %v3801
    %v3803 = vpop.f32.mrf.mxu0
    %3804 = vmatprep.mubr.f32.mxu0 0.0
    %3805 = vmatmul.mubr.f32.gmra.mxu0 %v3719
    %v3806 = vpop.f32.mrf.mxu0
    %v3807 = vadd.f32 %v3694, %v3806
    %v3808 = vpop.f32.mrf.mxu0
    %3809 = vmatprep.mubr.f32.mxu0 0.0
    %3810 = vmatmul.mubr.f32.gmra.mxu0 %v3722
    %v3811 = vpop.f32.mrf.mxu0
    %v3812 = vadd.f32 %v3699, %v3811
    %v3813 = vpop.f32.mrf.mxu0
    %3814 = vmatprep.mubr.f32.mxu0 0.0
    %3815 = vmatmul.mubr.f32.gmra.mxu0 %v3725
    %v3816 = vpop.f32.mrf.mxu0
    %v3817 = vadd.f32 %v3704, %v3816
    %v3818 = vpop.f32.mrf.mxu0
    %3819 = vmatprep.mubr.f32.mxu0 0.0
    %3820 = vmatmul.mubr.f32.gmra.mxu0 %v3728
    %v3821 = vpop.f32.mrf.mxu0
    %v3822 = vadd.f32 %v3709, %v3821
    %v3823 = vpop.f32.mrf.mxu0
    %3824 = vdwg.mxu0
    %3825 = vrot.lane.b32.xlu0 %v2892, 112
    %v3826 = vpop.permute.xlu0 %3825
    %3827 = vrot.lane.b32.xlu0 %v2897, 112
    %v3828 = vpop.permute.xlu0 %3827
    %3829 = vrot.lane.b32.xlu0 %v2902, 112
    %v3830 = vpop.permute.xlu0 %3829
    %3831 = vrot.lane.b32.xlu0 %v2907, 112
    %v3832 = vpop.permute.xlu0 %3831
    %3833 = vrot.lane.b32.xlu0 %v2912, 112
    %v3834 = vpop.permute.xlu0 %3833
    %3835 = vrot.lane.b32.xlu0 %v2917, 112
    %v3836 = vpop.permute.xlu0 %3835
    %3837 = vrot.lane.b32.xlu0 %v2892, 80
    %v3838 = vpop.permute.xlu0 %3837
    %3839 = vrot.lane.b32.xlu0 %v2897, 80
    %v3840 = vpop.permute.xlu0 %3839
    %3841 = vrot.lane.b32.xlu0 %v2902, 80
    %v3842 = vpop.permute.xlu0 %3841
    %3843 = vrot.lane.b32.xlu0 %v2907, 80
    %v3844 = vpop.permute.xlu0 %3843
    %3845 = vrot.lane.b32.xlu0 %v2912, 80
    %v3846 = vpop.permute.xlu0 %3845
    %3847 = vrot.lane.b32.xlu0 %v2917, 80
    %v3848 = vpop.permute.xlu0 %3847
    %v3849 = vsel %vm451, %v3826, 0
    %v3851 = vsel %vm451, %v3828, 0
    %v3853 = vsel %vm451, %v3830, 0
    %v3855 = vsel %vm451, %v3832, 0
    %v3857 = vsel %vm451, %v3834, 0
    %v3859 = vsel %vm451, %v3836, 0
    %v3861 = vsel %vm451, %v3838, 0
    %v3863 = vsel %vm451, %v3840, 0
    %v3865 = vsel %vm451, %v3842, 0
    %v3867 = vsel %vm451, %v3844, 0
    %v3869 = vsel %vm451, %v3846, 0
    %v3871 = vsel %vm451, %v3848, 0
    %3873 = vmatprep.subr.mxu0 0.0
    %3874 = vmatpush1.xpose.msra.mxu0 0.0
    %3875 = vmatprep.subr.mxu0 0.0
    %3876 = vmatpush1.xpose.msra.mxu0 0.0
    %3877 = vmatprep.subr.mxu0 0.0
    %3878 = vmatpush1.xpose.msra.mxu0 0.0
    %3879 = vmatprep.subr.mxu0 0.0
    %3880 = vmatpush1.xpose.msra.mxu0 0.0
    %3881 = vmatprep.subr.mxu0 0.0
    %3882 = vmatpush1.xpose.msra.mxu0 0.0
    %3883 = vmatprep.subr.mxu0 0.0
    %3884 = vmatpush1.xpose.msra.mxu0 0.0
    %3885 = vmatprep.subr.mxu0 0.0
    %3886 = vmatpush1.xpose.msra.mxu0 0.0
    %3887 = vmatprep.subr.mxu0 0.0
    %3888 = vmatpush1.xpose.msra.mxu0 0.0
    %3889 = vmatprep.subr.mxu0 0.0
    %3890 = vmatpush1.xpose.msra.mxu0 0.0
    %3891 = vmatprep.subr.mxu0 0.0
    %3892 = vmatpush1.xpose.msra.mxu0 0.0
    %3893 = vmatprep.subr.mxu0 0.0
    %3894 = vmatpush1.xpose.msra.mxu0 %v3871
    %3895 = vmatprep.subr.mxu0 0.0
    %3896 = vmatpush1.xpose.msra.mxu0 %v3869
    %3897 = vmatprep.subr.mxu0 0.0
    %3898 = vmatpush1.xpose.msra.mxu0 %v3867
    %3899 = vmatprep.subr.mxu0 0.0
    %3900 = vmatpush1.xpose.msra.mxu0 %v3865
    %3901 = vmatprep.subr.mxu0 0.0
    %3902 = vmatpush1.xpose.msra.mxu0 %v3863
    %3903 = vmatprep.subr.mxu0 0.0
    %3904 = vmatpush1.xpose.msra.mxu0 %v3861
    %3905 = vmatprep.subr.mxu0 0.0
    %3906 = vmatpush2.xpose.msra.mxu0 0.0
    %3907 = vmatprep.subr.mxu0 0.0
    %3908 = vmatpush2.xpose.msra.mxu0 0.0
    %3909 = vmatprep.subr.mxu0 0.0
    %3910 = vmatpush2.xpose.msra.mxu0 0.0
    %3911 = vmatprep.subr.mxu0 0.0
    %3912 = vmatpush2.xpose.msra.mxu0 0.0
    %3913 = vmatprep.subr.mxu0 0.0
    %3914 = vmatpush2.xpose.msra.mxu0 0.0
    %3915 = vmatprep.subr.mxu0 0.0
    %3916 = vmatpush2.xpose.msra.mxu0 0.0
    %3917 = vmatprep.subr.mxu0 0.0
    %3918 = vmatpush2.xpose.msra.mxu0 0.0
    %3919 = vmatprep.subr.mxu0 0.0
    %3920 = vmatpush2.xpose.msra.mxu0 0.0
    %3921 = vmatprep.subr.mxu0 0.0
    %3922 = vmatpush2.xpose.msra.mxu0 0.0
    %3923 = vmatprep.subr.mxu0 0.0
    %3924 = vmatpush2.xpose.msra.mxu0 0.0
    %3925 = vmatprep.subr.mxu0 0.0
    %3926 = vmatpush2.xpose.msra.mxu0 0.0
    %3927 = vmatprep.subr.mxu0 0.0
    %3928 = vmatpush2.xpose.msra.mxu0 0.0
    %3929 = vmatprep.subr.mxu0 0.0
    %3930 = vmatpush2.xpose.msra.mxu0 0.0
    %3931 = vmatprep.subr.mxu0 0.0
    %3932 = vmatpush2.xpose.msra.mxu0 0.0
    %3933 = vmatprep.subr.mxu0 0.0
    %3934 = vmatpush2.xpose.msra.mxu0 0.0
    %3935 = vmatprep.subr.mxu0 0.0
    %3936 = vmatpush2.xpose.msra.mxu0 0.0
    %3937 = vmatprep.mubr.f32.mxu0 0.0
    %3938 = vmatmul.mubr.f32.gmra.mxu0 %v3849
    %v3939 = vpop.f32.mrf.mxu0
    %v3940 = vadd.f32 %v193, %v3939
    %v3941 = vpop.f32.mrf.mxu0
    %3942 = vmatprep.mubr.f32.mxu0 0.0
    %3943 = vmatmul.mubr.f32.gmra.mxu0 %v3851
    %v3944 = vpop.f32.mrf.mxu0
    %v3945 = vadd.f32 %v194, %v3944
    %v3946 = vpop.f32.mrf.mxu0
    %3947 = vmatprep.mubr.f32.mxu0 0.0
    %3948 = vmatmul.mubr.f32.gmra.mxu0 %v3853
    %v3949 = vpop.f32.mrf.mxu0
    %v3950 = vadd.f32 %v195, %v3949
    %v3951 = vpop.f32.mrf.mxu0
    %3952 = vmatprep.mubr.f32.mxu0 0.0
    %3953 = vmatmul.mubr.f32.gmra.mxu0 %v3855
    %v3954 = vpop.f32.mrf.mxu0
    %v3955 = vadd.f32 %v196, %v3954
    %v3956 = vpop.f32.mrf.mxu0
    %3957 = vmatprep.mubr.f32.mxu0 0.0
    %3958 = vmatmul.mubr.f32.gmra.mxu0 %v3857
    %v3959 = vpop.f32.mrf.mxu0
    %v3960 = vadd.f32 %v197, %v3959
    %v3961 = vpop.f32.mrf.mxu0
    %3962 = vmatprep.mubr.f32.mxu0 0.0
    %3963 = vmatmul.mubr.f32.gmra.mxu0 %v3859
    %v3964 = vpop.f32.mrf.mxu0
    %v3965 = vadd.f32 %v198, %v3964
    %v3966 = vpop.f32.mrf.mxu0
    %3967 = vdwg.mxu0
    %v3968 = vsel %vm79, %v3940, -inf
    %3969 = vmax.xlane.f32.xlu0 %v3968
    %v3970 = vpop.xlane.xlu0 %3969
    %v3971 = vsel %vm79, %v3945, -inf
    %3972 = vmax.xlane.f32.xlu0 %v3971
    %v3973 = vpop.xlane.xlu0 %3972
    %v3974 = vsel %vm79, %v3950, -inf
    %3975 = vmax.xlane.f32.xlu0 %v3974
    %v3976 = vpop.xlane.xlu0 %3975
    %v3977 = vsel %vm79, %v3955, -inf
    %3978 = vmax.xlane.f32.xlu0 %v3977
    %v3979 = vpop.xlane.xlu0 %3978
    %v3980 = vsel %vm79, %v3960, -inf
    %3981 = vmax.xlane.f32.xlu0 %v3980
    %v3982 = vpop.xlane.xlu0 %3981
    %v3983 = vsel %vm79, %v3965, -inf
    %3984 = vmax.xlane.f32.xlu0 %v3983
    %v3985 = vpop.xlane.xlu0 %3984
    %v3986 = vsub.f32 %v3940, %v3970
    %v3987 = vsub.f32 %v3945, %v3973
    %v3988 = vsub.f32 %v3950, %v3976
    %v3989 = vsub.f32 %v3955, %v3979
    %v3990 = vsub.f32 %v3960, %v3982
    %v3991 = vsub.f32 %v3965, %v3985
    %v3992 = vmul.f32 %v3986, 1.442695
    %v3993 = vpow.pop %v3992
    %v3994 = vmul.f32 %v3987, 1.442695
    %v3995 = vpow.pop %v3994
    %v3996 = vmul.f32 %v3988, 1.442695
    %v3997 = vpow.pop %v3996
    %v3998 = vmul.f32 %v3989, 1.442695
    %v3999 = vpow.pop %v3998
    %v4000 = vmul.f32 %v3990, 1.442695
    %v4001 = vpow.pop %v4000
    %v4002 = vmul.f32 %v3991, 1.442695
    %v4003 = vpow.pop %v4002
    %v4004 = vsel %vm79, %v3993, 0.0
    %4005 = vadd.xlane.f32.xlu0 %v4004
    %v4006 = vpop.xlane.xlu0 %4005
    %v4007 = vsel %vm79, %v3995, 0.0
    %4008 = vadd.xlane.f32.xlu0 %v4007
    %v4009 = vpop.xlane.xlu0 %4008
    %v4010 = vsel %vm79, %v3997, 0.0
    %4011 = vadd.xlane.f32.xlu0 %v4010
    %v4012 = vpop.xlane.xlu0 %4011
    %v4013 = vsel %vm79, %v3999, 0.0
    %4014 = vadd.xlane.f32.xlu0 %v4013
    %v4015 = vpop.xlane.xlu0 %4014
    %v4016 = vsel %vm79, %v4001, 0.0
    %4017 = vadd.xlane.f32.xlu0 %v4016
    %v4018 = vpop.xlane.xlu0 %4017
    %v4019 = vsel %vm79, %v4003, 0.0
    %4020 = vadd.xlane.f32.xlu0 %v4019
    %v4021 = vpop.xlane.xlu0 %4020
    %4022 = vrot.lane.b32.xlu0 %v2892, 48
    %v4023 = vpop.permute.xlu0 %4022
    %4024 = vrot.lane.b32.xlu0 %v2897, 48
    %v4025 = vpop.permute.xlu0 %4024
    %4026 = vrot.lane.b32.xlu0 %v2902, 48
    %v4027 = vpop.permute.xlu0 %4026
    %4028 = vrot.lane.b32.xlu0 %v2907, 48
    %v4029 = vpop.permute.xlu0 %4028
    %4030 = vrot.lane.b32.xlu0 %v2912, 48
    %v4031 = vpop.permute.xlu0 %4030
    %4032 = vrot.lane.b32.xlu0 %v2917, 48
    %v4033 = vpop.permute.xlu0 %4032
    %v4041 = vsel %vm79, %v3993, 0
    %v4044 = vsel %vm79, %v3995, 0
    %v4047 = vsel %vm79, %v3997, 0
    %v4050 = vsel %vm79, %v3999, 0
    %v4053 = vsel %vm79, %v4001, 0
    %v4056 = vsel %vm79, %v4003, 0
    %4058 = vmatprep.subr.mxu0 0.0
    %4059 = vmatpush1.msra.mxu0 0.0
    %4060 = vmatprep.subr.mxu0 0.0
    %4061 = vmatpush1.msra.mxu0 0.0
    %4062 = vmatprep.subr.mxu0 0.0
    %4063 = vmatpush1.msra.mxu0 0.0
    %4064 = vmatprep.subr.mxu0 0.0
    %4065 = vmatpush1.msra.mxu0 0.0
    %4066 = vmatprep.subr.mxu0 0.0
    %4067 = vmatpush1.msra.mxu0 0.0
    %4068 = vmatprep.subr.mxu0 0.0
    %4069 = vmatpush1.msra.mxu0 0.0
    %4070 = vmatprep.subr.mxu0 0.0
    %4071 = vmatpush1.msra.mxu0 0.0
    %4072 = vmatprep.subr.mxu0 0.0
    %4073 = vmatpush1.msra.mxu0 0.0
    %4074 = vmatprep.subr.mxu0 0.0
    %4075 = vmatpush1.msra.mxu0 0.0
    %4076 = vmatprep.subr.mxu0 0.0
    %4077 = vmatpush1.msra.mxu0 0.0
    %4078 = vmatprep.subr.mxu0 0.0
    %4079 = vmatpush1.msra.mxu0 %v4033
    %4080 = vmatprep.subr.mxu0 0.0
    %4081 = vmatpush1.msra.mxu0 %v4031
    %4082 = vmatprep.subr.mxu0 0.0
    %4083 = vmatpush1.msra.mxu0 %v4029
    %4084 = vmatprep.subr.mxu0 0.0
    %4085 = vmatpush1.msra.mxu0 %v4027
    %4086 = vmatprep.subr.mxu0 0.0
    %4087 = vmatpush1.msra.mxu0 %v4025
    %4088 = vmatprep.subr.mxu0 0.0
    %4089 = vmatpush1.msra.mxu0 %v4023
    %4090 = vmatprep.subr.mxu0 0.0
    %4091 = vmatpush2.msra.mxu0 0.0
    %4092 = vmatprep.subr.mxu0 0.0
    %4093 = vmatpush2.msra.mxu0 0.0
    %4094 = vmatprep.subr.mxu0 0.0
    %4095 = vmatpush2.msra.mxu0 0.0
    %4096 = vmatprep.subr.mxu0 0.0
    %4097 = vmatpush2.msra.mxu0 0.0
    %4098 = vmatprep.subr.mxu0 0.0
    %4099 = vmatpush2.msra.mxu0 0.0
    %4100 = vmatprep.subr.mxu0 0.0
    %4101 = vmatpush2.msra.mxu0 0.0
    %4102 = vmatprep.subr.mxu0 0.0
    %4103 = vmatpush2.msra.mxu0 0.0
    %4104 = vmatprep.subr.mxu0 0.0
    %4105 = vmatpush2.msra.mxu0 0.0
    %4106 = vmatprep.subr.mxu0 0.0
    %4107 = vmatpush2.msra.mxu0 0.0
    %4108 = vmatprep.subr.mxu0 0.0
    %4109 = vmatpush2.msra.mxu0 0.0
    %4110 = vmatprep.subr.mxu0 0.0
    %4111 = vmatpush2.msra.mxu0 0.0
    %4112 = vmatprep.subr.mxu0 0.0
    %4113 = vmatpush2.msra.mxu0 0.0
    %4114 = vmatprep.subr.mxu0 0.0
    %4115 = vmatpush2.msra.mxu0 0.0
    %4116 = vmatprep.subr.mxu0 0.0
    %4117 = vmatpush2.msra.mxu0 0.0
    %4118 = vmatprep.subr.mxu0 0.0
    %4119 = vmatpush2.msra.mxu0 0.0
    %4120 = vmatprep.subr.mxu0 0.0
    %4121 = vmatpush2.msra.mxu0 0.0
    %4122 = vmatprep.mubr.f32.mxu0 0.0
    %4123 = vmatmul.mubr.f32.gmra.mxu0 %v4041
    %v4124 = vpop.f32.mrf.mxu0
    %v4125 = vadd.f32 0.0, %v4124
    %v4126 = vpop.f32.mrf.mxu0
    %4127 = vmatprep.mubr.f32.mxu0 0.0
    %4128 = vmatmul.mubr.f32.gmra.mxu0 %v4044
    %v4129 = vpop.f32.mrf.mxu0
    %v4130 = vadd.f32 0.0, %v4129
    %v4131 = vpop.f32.mrf.mxu0
    %4132 = vmatprep.mubr.f32.mxu0 0.0
    %4133 = vmatmul.mubr.f32.gmra.mxu0 %v4047
    %v4134 = vpop.f32.mrf.mxu0
    %v4135 = vadd.f32 0.0, %v4134
    %v4136 = vpop.f32.mrf.mxu0
    %4137 = vmatprep.mubr.f32.mxu0 0.0
    %4138 = vmatmul.mubr.f32.gmra.mxu0 %v4050
    %v4139 = vpop.f32.mrf.mxu0
    %v4140 = vadd.f32 0.0, %v4139
    %v4141 = vpop.f32.mrf.mxu0
    %4142 = vmatprep.mubr.f32.mxu0 0.0
    %4143 = vmatmul.mubr.f32.gmra.mxu0 %v4053
    %v4144 = vpop.f32.mrf.mxu0
    %v4145 = vadd.f32 0.0, %v4144
    %v4146 = vpop.f32.mrf.mxu0
    %4147 = vmatprep.mubr.f32.mxu0 0.0
    %4148 = vmatmul.mubr.f32.gmra.mxu0 %v4056
    %v4149 = vpop.f32.mrf.mxu0
    %v4150 = vadd.f32 0.0, %v4149
    %v4151 = vpop.f32.mrf.mxu0
    %4152 = vdwg.mxu0
    %v4153 = vrcp.pop %v4006
    %v4154 = vrcp.pop %v4009
    %v4155 = vrcp.pop %v4012
    %v4156 = vrcp.pop %v4015
    %v4157 = vrcp.pop %v4018
    %v4158 = vrcp.pop %v4021
    %v4159 = vmul.f32 %v4125, %v4153
    %v4160 = vmul.f32 %v4130, %v4154
    %v4161 = vmul.f32 %v4135, %v4155
    %v4162 = vmul.f32 %v4140, %v4156
    %v4163 = vmul.f32 %v4145, %v4157
    %v4164 = vmul.f32 %v4150, %v4158
    %v4166 = vsel %vm451, %v4159, 0
    %v4169 = vsel %vm451, %v4160, 0
    %v4172 = vsel %vm451, %v4161, 0
    %v4175 = vsel %vm451, %v4162, 0
    %v4178 = vsel %vm451, %v4163, 0
    %v4181 = vsel %vm451, %v4164, 0
    %4183 = vmatprep.subr.mxu0 0.0
    %4184 = vmatpush1.msra.mxu0 0.0
    %4185 = vmatprep.subr.mxu0 0.0
    %4186 = vmatpush1.msra.mxu0 0.0
    %4187 = vmatprep.subr.mxu0 0.0
    %4188 = vmatpush1.msra.mxu0 0.0
    %4189 = vmatprep.subr.mxu0 0.0
    %4190 = vmatpush1.msra.mxu0 0.0
    %4191 = vmatprep.subr.mxu0 0.0
    %4192 = vmatpush1.msra.mxu0 0.0
    %4193 = vmatprep.subr.mxu0 0.0
    %4194 = vmatpush1.msra.mxu0 0.0
    %4195 = vmatprep.subr.mxu0 0.0
    %4196 = vmatpush1.msra.mxu0 0.0
    %4197 = vmatprep.subr.mxu0 0.0
    %4198 = vmatpush1.msra.mxu0 0.0
    %4199 = vmatprep.subr.mxu0 0.0
    %4200 = vmatpush1.msra.mxu0 0.0
    %4201 = vmatprep.subr.mxu0 0.0
    %4202 = vmatpush1.msra.mxu0 0.0
    %4203 = vmatprep.subr.mxu0 0.0
    %4204 = vmatpush1.msra.mxu0 0.0
    %4205 = vmatprep.subr.mxu0 0.0
    %4206 = vmatpush1.msra.mxu0 0.0
    %4207 = vmatprep.subr.mxu0 0.0
    %4208 = vmatpush1.msra.mxu0 0.0
    %4209 = vmatprep.subr.mxu0 0.0
    %4210 = vmatpush1.msra.mxu0 0.0
    %4211 = vmatprep.subr.mxu0 0.0
    %4212 = vmatpush1.msra.mxu0 0.0
    %4213 = vmatprep.subr.mxu0 0.0
    %4214 = vmatpush1.msra.mxu0 %v2923
    %4215 = vmatprep.subr.mxu0 0.0
    %4216 = vmatpush2.msra.mxu0 0.0
    %4217 = vmatprep.subr.mxu0 0.0
    %4218 = vmatpush2.msra.mxu0 0.0
    %4219 = vmatprep.subr.mxu0 0.0
    %4220 = vmatpush2.msra.mxu0 0.0
    %4221 = vmatprep.subr.mxu0 0.0
    %4222 = vmatpush2.msra.mxu0 0.0
    %4223 = vmatprep.subr.mxu0 0.0
    %4224 = vmatpush2.msra.mxu0 0.0
    %4225 = vmatprep.subr.mxu0 0.0
    %4226 = vmatpush2.msra.mxu0 0.0
    %4227 = vmatprep.subr.mxu0 0.0
    %4228 = vmatpush2.msra.mxu0 0.0
    %4229 = vmatprep.subr.mxu0 0.0
    %4230 = vmatpush2.msra.mxu0 0.0
    %4231 = vmatprep.subr.mxu0 0.0
    %4232 = vmatpush2.msra.mxu0 0.0
    %4233 = vmatprep.subr.mxu0 0.0
    %4234 = vmatpush2.msra.mxu0 0.0
    %4235 = vmatprep.subr.mxu0 0.0
    %4236 = vmatpush2.msra.mxu0 0.0
    %4237 = vmatprep.subr.mxu0 0.0
    %4238 = vmatpush2.msra.mxu0 0.0
    %4239 = vmatprep.subr.mxu0 0.0
    %4240 = vmatpush2.msra.mxu0 0.0
    %4241 = vmatprep.subr.mxu0 0.0
    %4242 = vmatpush2.msra.mxu0 0.0
    %4243 = vmatprep.subr.mxu0 0.0
    %4244 = vmatpush2.msra.mxu0 0.0
    %4245 = vmatprep.subr.mxu0 0.0
    %4246 = vmatpush2.msra.mxu0 0.0
    %4247 = vmatprep.mubr.f32.mxu0 0.0
    %4248 = vmatmul.mubr.f32.gmra.mxu0 %v4166
    %v4249 = vpop.f32.mrf.mxu0
    %v4250 = vadd.f32 0.0, %v4249
    %v4251 = vpop.f32.mrf.mxu0
    %4252 = vmatprep.mubr.f32.mxu0 0.0
    %4253 = vmatmul.mubr.f32.gmra.mxu0 %v4169
    %v4254 = vpop.f32.mrf.mxu0
    %v4255 = vadd.f32 0.0, %v4254
    %v4256 = vpop.f32.mrf.mxu0
    %4257 = vmatprep.mubr.f32.mxu0 0.0
    %4258 = vmatmul.mubr.f32.gmra.mxu0 %v4172
    %v4259 = vpop.f32.mrf.mxu0
    %v4260 = vadd.f32 0.0, %v4259
    %v4261 = vpop.f32.mrf.mxu0
    %4262 = vmatprep.mubr.f32.mxu0 0.0
    %4263 = vmatmul.mubr.f32.gmra.mxu0 %v4175
    %v4264 = vpop.f32.mrf.mxu0
    %v4265 = vadd.f32 0.0, %v4264
    %v4266 = vpop.f32.mrf.mxu0
    %4267 = vmatprep.mubr.f32.mxu0 0.0
    %4268 = vmatmul.mubr.f32.gmra.mxu0 %v4178
    %v4269 = vpop.f32.mrf.mxu0
    %v4270 = vadd.f32 0.0, %v4269
    %v4271 = vpop.f32.mrf.mxu0
    %4272 = vmatprep.mubr.f32.mxu0 0.0
    %4273 = vmatmul.mubr.f32.gmra.mxu0 %v4181
    %v4274 = vpop.f32.mrf.mxu0
    %v4275 = vadd.f32 0.0, %v4274
    %v4276 = vpop.f32.mrf.mxu0
    %4277 = vdwg.mxu0
    %v4278 = vadd.f32 %v3797, %v4250
    %v4279 = vadd.f32 %v3802, %v4255
    %v4280 = vadd.f32 %v3807, %v4260
    %v4281 = vadd.f32 %v3812, %v4265
    %v4282 = vadd.f32 %v3817, %v4270
    %v4283 = vadd.f32 %v3822, %v4275
    %4284 = vrot.lane.b32.xlu0 %v2892, 104
    %v4285 = vpop.permute.xlu0 %4284
    %4286 = vrot.lane.b32.xlu0 %v2897, 104
    %v4287 = vpop.permute.xlu0 %4286
    %4288 = vrot.lane.b32.xlu0 %v2902, 104
    %v4289 = vpop.permute.xlu0 %4288
    %4290 = vrot.lane.b32.xlu0 %v2907, 104
    %v4291 = vpop.permute.xlu0 %4290
    %4292 = vrot.lane.b32.xlu0 %v2912, 104
    %v4293 = vpop.permute.xlu0 %4292
    %4294 = vrot.lane.b32.xlu0 %v2917, 104
    %v4295 = vpop.permute.xlu0 %4294
    %4296 = vrot.lane.b32.xlu0 %v2892, 72
    %v4297 = vpop.permute.xlu0 %4296
    %4298 = vrot.lane.b32.xlu0 %v2897, 72
    %v4299 = vpop.permute.xlu0 %4298
    %4300 = vrot.lane.b32.xlu0 %v2902, 72
    %v4301 = vpop.permute.xlu0 %4300
    %4302 = vrot.lane.b32.xlu0 %v2907, 72
    %v4303 = vpop.permute.xlu0 %4302
    %4304 = vrot.lane.b32.xlu0 %v2912, 72
    %v4305 = vpop.permute.xlu0 %4304
    %4306 = vrot.lane.b32.xlu0 %v2917, 72
    %v4307 = vpop.permute.xlu0 %4306
    %v4308 = vsel %vm451, %v4285, 0
    %v4310 = vsel %vm451, %v4287, 0
    %v4312 = vsel %vm451, %v4289, 0
    %v4314 = vsel %vm451, %v4291, 0
    %v4316 = vsel %vm451, %v4293, 0
    %v4318 = vsel %vm451, %v4295, 0
    %v4320 = vsel %vm451, %v4297, 0
    %v4322 = vsel %vm451, %v4299, 0
    %v4324 = vsel %vm451, %v4301, 0
    %v4326 = vsel %vm451, %v4303, 0
    %v4328 = vsel %vm451, %v4305, 0
    %v4330 = vsel %vm451, %v4307, 0
    %4332 = vmatprep.subr.mxu0 0.0
    %4333 = vmatpush1.xpose.msra.mxu0 0.0
    %4334 = vmatprep.subr.mxu0 0.0
    %4335 = vmatpush1.xpose.msra.mxu0 0.0
    %4336 = vmatprep.subr.mxu0 0.0
    %4337 = vmatpush1.xpose.msra.mxu0 0.0
    %4338 = vmatprep.subr.mxu0 0.0
    %4339 = vmatpush1.xpose.msra.mxu0 0.0
    %4340 = vmatprep.subr.mxu0 0.0
    %4341 = vmatpush1.xpose.msra.mxu0 0.0
    %4342 = vmatprep.subr.mxu0 0.0
    %4343 = vmatpush1.xpose.msra.mxu0 0.0
    %4344 = vmatprep.subr.mxu0 0.0
    %4345 = vmatpush1.xpose.msra.mxu0 0.0
    %4346 = vmatprep.subr.mxu0 0.0
    %4347 = vmatpush1.xpose.msra.mxu0 0.0
    %4348 = vmatprep.subr.mxu0 0.0
    %4349 = vmatpush1.xpose.msra.mxu0 0.0
    %4350 = vmatprep.subr.mxu0 0.0
    %4351 = vmatpush1.xpose.msra.mxu0 0.0
    %4352 = vmatprep.subr.mxu0 0.0
    %4353 = vmatpush1.xpose.msra.mxu0 %v4330
    %4354 = vmatprep.subr.mxu0 0.0
    %4355 = vmatpush1.xpose.msra.mxu0 %v4328
    %4356 = vmatprep.subr.mxu0 0.0
    %4357 = vmatpush1.xpose.msra.mxu0 %v4326
    %4358 = vmatprep.subr.mxu0 0.0
    %4359 = vmatpush1.xpose.msra.mxu0 %v4324
    %4360 = vmatprep.subr.mxu0 0.0
    %4361 = vmatpush1.xpose.msra.mxu0 %v4322
    %4362 = vmatprep.subr.mxu0 0.0
    %4363 = vmatpush1.xpose.msra.mxu0 %v4320
    %4364 = vmatprep.subr.mxu0 0.0
    %4365 = vmatpush2.xpose.msra.mxu0 0.0
    %4366 = vmatprep.subr.mxu0 0.0
    %4367 = vmatpush2.xpose.msra.mxu0 0.0
    %4368 = vmatprep.subr.mxu0 0.0
    %4369 = vmatpush2.xpose.msra.mxu0 0.0
    %4370 = vmatprep.subr.mxu0 0.0
    %4371 = vmatpush2.xpose.msra.mxu0 0.0
    %4372 = vmatprep.subr.mxu0 0.0
    %4373 = vmatpush2.xpose.msra.mxu0 0.0
    %4374 = vmatprep.subr.mxu0 0.0
    %4375 = vmatpush2.xpose.msra.mxu0 0.0
    %4376 = vmatprep.subr.mxu0 0.0
    %4377 = vmatpush2.xpose.msra.mxu0 0.0
    %4378 = vmatprep.subr.mxu0 0.0
    %4379 = vmatpush2.xpose.msra.mxu0 0.0
    %4380 = vmatprep.subr.mxu0 0.0
    %4381 = vmatpush2.xpose.msra.mxu0 0.0
    %4382 = vmatprep.subr.mxu0 0.0
    %4383 = vmatpush2.xpose.msra.mxu0 0.0
    %4384 = vmatprep.subr.mxu0 0.0
    %4385 = vmatpush2.xpose.msra.mxu0 0.0
    %4386 = vmatprep.subr.mxu0 0.0
    %4387 = vmatpush2.xpose.msra.mxu0 0.0
    %4388 = vmatprep.subr.mxu0 0.0
    %4389 = vmatpush2.xpose.msra.mxu0 0.0
    %4390 = vmatprep.subr.mxu0 0.0
    %4391 = vmatpush2.xpose.msra.mxu0 0.0
    %4392 = vmatprep.subr.mxu0 0.0
    %4393 = vmatpush2.xpose.msra.mxu0 0.0
    %4394 = vmatprep.subr.mxu0 0.0
    %4395 = vmatpush2.xpose.msra.mxu0 0.0
    %4396 = vmatprep.mubr.f32.mxu0 0.0
    %4397 = vmatmul.mubr.f32.gmra.mxu0 %v4308
    %v4398 = vpop.f32.mrf.mxu0
    %v4399 = vadd.f32 %v193, %v4398
    %v4400 = vpop.f32.mrf.mxu0
    %4401 = vmatprep.mubr.f32.mxu0 0.0
    %4402 = vmatmul.mubr.f32.gmra.mxu0 %v4310
    %v4403 = vpop.f32.mrf.mxu0
    %v4404 = vadd.f32 %v194, %v4403
    %v4405 = vpop.f32.mrf.mxu0
    %4406 = vmatprep.mubr.f32.mxu0 0.0
    %4407 = vmatmul.mubr.f32.gmra.mxu0 %v4312
    %v4408 = vpop.f32.mrf.mxu0
    %v4409 = vadd.f32 %v195, %v4408
    %v4410 = vpop.f32.mrf.mxu0
    %4411 = vmatprep.mubr.f32.mxu0 0.0
    %4412 = vmatmul.mubr.f32.gmra.mxu0 %v4314
    %v4413 = vpop.f32.mrf.mxu0
    %v4414 = vadd.f32 %v196, %v4413
    %v4415 = vpop.f32.mrf.mxu0
    %4416 = vmatprep.mubr.f32.mxu0 0.0
    %4417 = vmatmul.mubr.f32.gmra.mxu0 %v4316
    %v4418 = vpop.f32.mrf.mxu0
    %v4419 = vadd.f32 %v197, %v4418
    %v4420 = vpop.f32.mrf.mxu0
    %4421 = vmatprep.mubr.f32.mxu0 0.0
    %4422 = vmatmul.mubr.f32.gmra.mxu0 %v4318
    %v4423 = vpop.f32.mrf.mxu0
    %v4424 = vadd.f32 %v198, %v4423
    %v4425 = vpop.f32.mrf.mxu0
    %4426 = vdwg.mxu0
    %v4427 = vsel %vm79, %v4399, -inf
    %4428 = vmax.xlane.f32.xlu0 %v4427
    %v4429 = vpop.xlane.xlu0 %4428
    %v4430 = vsel %vm79, %v4404, -inf
    %4431 = vmax.xlane.f32.xlu0 %v4430
    %v4432 = vpop.xlane.xlu0 %4431
    %v4433 = vsel %vm79, %v4409, -inf
    %4434 = vmax.xlane.f32.xlu0 %v4433
    %v4435 = vpop.xlane.xlu0 %4434
    %v4436 = vsel %vm79, %v4414, -inf
    %4437 = vmax.xlane.f32.xlu0 %v4436
    %v4438 = vpop.xlane.xlu0 %4437
    %v4439 = vsel %vm79, %v4419, -inf
    %4440 = vmax.xlane.f32.xlu0 %v4439
    %v4441 = vpop.xlane.xlu0 %4440
    %v4442 = vsel %vm79, %v4424, -inf
    %4443 = vmax.xlane.f32.xlu0 %v4442
    %v4444 = vpop.xlane.xlu0 %4443
    %v4445 = vsub.f32 %v4399, %v4429
    %v4446 = vsub.f32 %v4404, %v4432
    %v4447 = vsub.f32 %v4409, %v4435
    %v4448 = vsub.f32 %v4414, %v4438
    %v4449 = vsub.f32 %v4419, %v4441
    %v4450 = vsub.f32 %v4424, %v4444
    %v4451 = vmul.f32 %v4445, 1.442695
    %v4452 = vpow.pop %v4451
    %v4453 = vmul.f32 %v4446, 1.442695
    %v4454 = vpow.pop %v4453
    %v4455 = vmul.f32 %v4447, 1.442695
    %v4456 = vpow.pop %v4455
    %v4457 = vmul.f32 %v4448, 1.442695
    %v4458 = vpow.pop %v4457
    %v4459 = vmul.f32 %v4449, 1.442695
    %v4460 = vpow.pop %v4459
    %v4461 = vmul.f32 %v4450, 1.442695
    %v4462 = vpow.pop %v4461
    %v4463 = vsel %vm79, %v4452, 0.0
    %4464 = vadd.xlane.f32.xlu0 %v4463
    %v4465 = vpop.xlane.xlu0 %4464
    %v4466 = vsel %vm79, %v4454, 0.0
    %4467 = vadd.xlane.f32.xlu0 %v4466
    %v4468 = vpop.xlane.xlu0 %4467
    %v4469 = vsel %vm79, %v4456, 0.0
    %4470 = vadd.xlane.f32.xlu0 %v4469
    %v4471 = vpop.xlane.xlu0 %4470
    %v4472 = vsel %vm79, %v4458, 0.0
    %4473 = vadd.xlane.f32.xlu0 %v4472
    %v4474 = vpop.xlane.xlu0 %4473
    %v4475 = vsel %vm79, %v4460, 0.0
    %4476 = vadd.xlane.f32.xlu0 %v4475
    %v4477 = vpop.xlane.xlu0 %4476
    %v4478 = vsel %vm79, %v4462, 0.0
    %4479 = vadd.xlane.f32.xlu0 %v4478
    %v4480 = vpop.xlane.xlu0 %4479
    %4481 = vrot.lane.b32.xlu0 %v2892, 40
    %v4482 = vpop.permute.xlu0 %4481
    %4483 = vrot.lane.b32.xlu0 %v2897, 40
    %v4484 = vpop.permute.xlu0 %4483
    %4485 = vrot.lane.b32.xlu0 %v2902, 40
    %v4486 = vpop.permute.xlu0 %4485
    %4487 = vrot.lane.b32.xlu0 %v2907, 40
    %v4488 = vpop.permute.xlu0 %4487
    %4489 = vrot.lane.b32.xlu0 %v2912, 40
    %v4490 = vpop.permute.xlu0 %4489
    %4491 = vrot.lane.b32.xlu0 %v2917, 40
    %v4492 = vpop.permute.xlu0 %4491
    %v4500 = vsel %vm79, %v4452, 0
    %v4503 = vsel %vm79, %v4454, 0
    %v4506 = vsel %vm79, %v4456, 0
    %v4509 = vsel %vm79, %v4458, 0
    %v4512 = vsel %vm79, %v4460, 0
    %v4515 = vsel %vm79, %v4462, 0
    %4517 = vmatprep.subr.mxu0 0.0
    %4518 = vmatpush1.msra.mxu0 0.0
    %4519 = vmatprep.subr.mxu0 0.0
    %4520 = vmatpush1.msra.mxu0 0.0
    %4521 = vmatprep.subr.mxu0 0.0
    %4522 = vmatpush1.msra.mxu0 0.0
    %4523 = vmatprep.subr.mxu0 0.0
    %4524 = vmatpush1.msra.mxu0 0.0
    %4525 = vmatprep.subr.mxu0 0.0
    %4526 = vmatpush1.msra.mxu0 0.0
    %4527 = vmatprep.subr.mxu0 0.0
    %4528 = vmatpush1.msra.mxu0 0.0
    %4529 = vmatprep.subr.mxu0 0.0
    %4530 = vmatpush1.msra.mxu0 0.0
    %4531 = vmatprep.subr.mxu0 0.0
    %4532 = vmatpush1.msra.mxu0 0.0
    %4533 = vmatprep.subr.mxu0 0.0
    %4534 = vmatpush1.msra.mxu0 0.0
    %4535 = vmatprep.subr.mxu0 0.0
    %4536 = vmatpush1.msra.mxu0 0.0
    %4537 = vmatprep.subr.mxu0 0.0
    %4538 = vmatpush1.msra.mxu0 %v4492
    %4539 = vmatprep.subr.mxu0 0.0
    %4540 = vmatpush1.msra.mxu0 %v4490
    %4541 = vmatprep.subr.mxu0 0.0
    %4542 = vmatpush1.msra.mxu0 %v4488
    %4543 = vmatprep.subr.mxu0 0.0
    %4544 = vmatpush1.msra.mxu0 %v4486
    %4545 = vmatprep.subr.mxu0 0.0
    %4546 = vmatpush1.msra.mxu0 %v4484
    %4547 = vmatprep.subr.mxu0 0.0
    %4548 = vmatpush1.msra.mxu0 %v4482
    %4549 = vmatprep.subr.mxu0 0.0
    %4550 = vmatpush2.msra.mxu0 0.0
    %4551 = vmatprep.subr.mxu0 0.0
    %4552 = vmatpush2.msra.mxu0 0.0
    %4553 = vmatprep.subr.mxu0 0.0
    %4554 = vmatpush2.msra.mxu0 0.0
    %4555 = vmatprep.subr.mxu0 0.0
    %4556 = vmatpush2.msra.mxu0 0.0
    %4557 = vmatprep.subr.mxu0 0.0
    %4558 = vmatpush2.msra.mxu0 0.0
    %4559 = vmatprep.subr.mxu0 0.0
    %4560 = vmatpush2.msra.mxu0 0.0
    %4561 = vmatprep.subr.mxu0 0.0
    %4562 = vmatpush2.msra.mxu0 0.0
    %4563 = vmatprep.subr.mxu0 0.0
    %4564 = vmatpush2.msra.mxu0 0.0
    %4565 = vmatprep.subr.mxu0 0.0
    %4566 = vmatpush2.msra.mxu0 0.0
    %4567 = vmatprep.subr.mxu0 0.0
    %4568 = vmatpush2.msra.mxu0 0.0
    %4569 = vmatprep.subr.mxu0 0.0
    %4570 = vmatpush2.msra.mxu0 0.0
    %4571 = vmatprep.subr.mxu0 0.0
    %4572 = vmatpush2.msra.mxu0 0.0
    %4573 = vmatprep.subr.mxu0 0.0
    %4574 = vmatpush2.msra.mxu0 0.0
    %4575 = vmatprep.subr.mxu0 0.0
    %4576 = vmatpush2.msra.mxu0 0.0
    %4577 = vmatprep.subr.mxu0 0.0
    %4578 = vmatpush2.msra.mxu0 0.0
    %4579 = vmatprep.subr.mxu0 0.0
    %4580 = vmatpush2.msra.mxu0 0.0
    %4581 = vmatprep.mubr.f32.mxu0 0.0
    %4582 = vmatmul.mubr.f32.gmra.mxu0 %v4500
    %v4583 = vpop.f32.mrf.mxu0
    %v4584 = vadd.f32 0.0, %v4583
    %v4585 = vpop.f32.mrf.mxu0
    %4586 = vmatprep.mubr.f32.mxu0 0.0
    %4587 = vmatmul.mubr.f32.gmra.mxu0 %v4503
    %v4588 = vpop.f32.mrf.mxu0
    %v4589 = vadd.f32 0.0, %v4588
    %v4590 = vpop.f32.mrf.mxu0
    %4591 = vmatprep.mubr.f32.mxu0 0.0
    %4592 = vmatmul.mubr.f32.gmra.mxu0 %v4506
    %v4593 = vpop.f32.mrf.mxu0
    %v4594 = vadd.f32 0.0, %v4593
    %v4595 = vpop.f32.mrf.mxu0
    %4596 = vmatprep.mubr.f32.mxu0 0.0
    %4597 = vmatmul.mubr.f32.gmra.mxu0 %v4509
    %v4598 = vpop.f32.mrf.mxu0
    %v4599 = vadd.f32 0.0, %v4598
    %v4600 = vpop.f32.mrf.mxu0
    %4601 = vmatprep.mubr.f32.mxu0 0.0
    %4602 = vmatmul.mubr.f32.gmra.mxu0 %v4512
    %v4603 = vpop.f32.mrf.mxu0
    %v4604 = vadd.f32 0.0, %v4603
    %v4605 = vpop.f32.mrf.mxu0
    %4606 = vmatprep.mubr.f32.mxu0 0.0
    %4607 = vmatmul.mubr.f32.gmra.mxu0 %v4515
    %v4608 = vpop.f32.mrf.mxu0
    %v4609 = vadd.f32 0.0, %v4608
    %v4610 = vpop.f32.mrf.mxu0
    %4611 = vdwg.mxu0
    %v4612 = vrcp.pop %v4465
    %v4613 = vrcp.pop %v4468
    %v4614 = vrcp.pop %v4471
    %v4615 = vrcp.pop %v4474
    %v4616 = vrcp.pop %v4477
    %v4617 = vrcp.pop %v4480
    %v4618 = vmul.f32 %v4584, %v4612
    %v4619 = vmul.f32 %v4589, %v4613
    %v4620 = vmul.f32 %v4594, %v4614
    %v4621 = vmul.f32 %v4599, %v4615
    %v4622 = vmul.f32 %v4604, %v4616
    %v4623 = vmul.f32 %v4609, %v4617
    %v4625 = vsel %vm451, %v4618, 0
    %v4628 = vsel %vm451, %v4619, 0
    %v4631 = vsel %vm451, %v4620, 0
    %v4634 = vsel %vm451, %v4621, 0
    %v4637 = vsel %vm451, %v4622, 0
    %v4640 = vsel %vm451, %v4623, 0
    %4642 = vmatprep.subr.mxu0 0.0
    %4643 = vmatpush1.msra.mxu0 0.0
    %4644 = vmatprep.subr.mxu0 0.0
    %4645 = vmatpush1.msra.mxu0 0.0
    %4646 = vmatprep.subr.mxu0 0.0
    %4647 = vmatpush1.msra.mxu0 0.0
    %4648 = vmatprep.subr.mxu0 0.0
    %4649 = vmatpush1.msra.mxu0 0.0
    %4650 = vmatprep.subr.mxu0 0.0
    %4651 = vmatpush1.msra.mxu0 0.0
    %4652 = vmatprep.subr.mxu0 0.0
    %4653 = vmatpush1.msra.mxu0 0.0
    %4654 = vmatprep.subr.mxu0 0.0
    %4655 = vmatpush1.msra.mxu0 0.0
    %4656 = vmatprep.subr.mxu0 0.0
    %4657 = vmatpush1.msra.mxu0 0.0
    %4658 = vmatprep.subr.mxu0 0.0
    %4659 = vmatpush1.msra.mxu0 0.0
    %4660 = vmatprep.subr.mxu0 0.0
    %4661 = vmatpush1.msra.mxu0 0.0
    %4662 = vmatprep.subr.mxu0 0.0
    %4663 = vmatpush1.msra.mxu0 0.0
    %4664 = vmatprep.subr.mxu0 0.0
    %4665 = vmatpush1.msra.mxu0 0.0
    %4666 = vmatprep.subr.mxu0 0.0
    %4667 = vmatpush1.msra.mxu0 0.0
    %4668 = vmatprep.subr.mxu0 0.0
    %4669 = vmatpush1.msra.mxu0 0.0
    %4670 = vmatprep.subr.mxu0 0.0
    %4671 = vmatpush1.msra.mxu0 0.0
    %4672 = vmatprep.subr.mxu0 0.0
    %4673 = vmatpush1.msra.mxu0 %v2924
    %4674 = vmatprep.subr.mxu0 0.0
    %4675 = vmatpush2.msra.mxu0 0.0
    %4676 = vmatprep.subr.mxu0 0.0
    %4677 = vmatpush2.msra.mxu0 0.0
    %4678 = vmatprep.subr.mxu0 0.0
    %4679 = vmatpush2.msra.mxu0 0.0
    %4680 = vmatprep.subr.mxu0 0.0
    %4681 = vmatpush2.msra.mxu0 0.0
    %4682 = vmatprep.subr.mxu0 0.0
    %4683 = vmatpush2.msra.mxu0 0.0
    %4684 = vmatprep.subr.mxu0 0.0
    %4685 = vmatpush2.msra.mxu0 0.0
    %4686 = vmatprep.subr.mxu0 0.0
    %4687 = vmatpush2.msra.mxu0 0.0
    %4688 = vmatprep.subr.mxu0 0.0
    %4689 = vmatpush2.msra.mxu0 0.0
    %4690 = vmatprep.subr.mxu0 0.0
    %4691 = vmatpush2.msra.mxu0 0.0
    %4692 = vmatprep.subr.mxu0 0.0
    %4693 = vmatpush2.msra.mxu0 0.0
    %4694 = vmatprep.subr.mxu0 0.0
    %4695 = vmatpush2.msra.mxu0 0.0
    %4696 = vmatprep.subr.mxu0 0.0
    %4697 = vmatpush2.msra.mxu0 0.0
    %4698 = vmatprep.subr.mxu0 0.0
    %4699 = vmatpush2.msra.mxu0 0.0
    %4700 = vmatprep.subr.mxu0 0.0
    %4701 = vmatpush2.msra.mxu0 0.0
    %4702 = vmatprep.subr.mxu0 0.0
    %4703 = vmatpush2.msra.mxu0 0.0
    %4704 = vmatprep.subr.mxu0 0.0
    %4705 = vmatpush2.msra.mxu0 0.0
    %4706 = vmatprep.mubr.f32.mxu0 0.0
    %4707 = vmatmul.mubr.f32.gmra.mxu0 %v4625
    %v4708 = vpop.f32.mrf.mxu0
    %v4709 = vadd.f32 0.0, %v4708
    %v4710 = vpop.f32.mrf.mxu0
    %4711 = vmatprep.mubr.f32.mxu0 0.0
    %4712 = vmatmul.mubr.f32.gmra.mxu0 %v4628
    %v4713 = vpop.f32.mrf.mxu0
    %v4714 = vadd.f32 0.0, %v4713
    %v4715 = vpop.f32.mrf.mxu0
    %4716 = vmatprep.mubr.f32.mxu0 0.0
    %4717 = vmatmul.mubr.f32.gmra.mxu0 %v4631
    %v4718 = vpop.f32.mrf.mxu0
    %v4719 = vadd.f32 0.0, %v4718
    %v4720 = vpop.f32.mrf.mxu0
    %4721 = vmatprep.mubr.f32.mxu0 0.0
    %4722 = vmatmul.mubr.f32.gmra.mxu0 %v4634
    %v4723 = vpop.f32.mrf.mxu0
    %v4724 = vadd.f32 0.0, %v4723
    %v4725 = vpop.f32.mrf.mxu0
    %4726 = vmatprep.mubr.f32.mxu0 0.0
    %4727 = vmatmul.mubr.f32.gmra.mxu0 %v4637
    %v4728 = vpop.f32.mrf.mxu0
    %v4729 = vadd.f32 0.0, %v4728
    %v4730 = vpop.f32.mrf.mxu0
    %4731 = vmatprep.mubr.f32.mxu0 0.0
    %4732 = vmatmul.mubr.f32.gmra.mxu0 %v4640
    %v4733 = vpop.f32.mrf.mxu0
    %v4734 = vadd.f32 0.0, %v4733
    %v4735 = vpop.f32.mrf.mxu0
    %4736 = vdwg.mxu0
    %v4737 = vadd.f32 %v4278, %v4709
    %v4738 = vadd.f32 %v4279, %v4714
    %v4739 = vadd.f32 %v4280, %v4719
    %v4740 = vadd.f32 %v4281, %v4724
    %v4741 = vadd.f32 %v4282, %v4729
    %v4742 = vadd.f32 %v4283, %v4734
    %v4743 = vadd.f32 %v2682, %v4737
    %v4744 = vadd.f32 %v2683, %v4738
    %v4745 = vadd.f32 %v2684, %v4739
    %v4746 = vadd.f32 %v2685, %v4740
    %v4747 = vadd.f32 %v2686, %v4741
    %v4748 = vadd.f32 %v2687, %v4742
    %s4749 = scalar_lea.vmem %s9, 1
    %v4750 = vld [vmem:[%s4749] sm:$0x1]
    %v4752 = vlaneseq
    %v4753 = vshrl.u32 %v4752, 7
    %v4754 = vsub.s32 0, %v4753
    %v4755 = vrot.slane %v4750, %v4754
    %v4757 = vadd.f32 %v4743, %v4755
    %v4758 = vadd.f32 %v4744, %v4755
    %v4759 = vadd.f32 %v4745, %v4755
    %v4760 = vadd.f32 %v4746, %v4755
    %v4761 = vadd.f32 %v4747, %v4755
    %v4762 = vadd.f32 %v4748, %v4755
    %s4763 = scalar_lea.vmem %s10, 1
    %v4764 = vld [vmem:[%s4763] sm:$0x1]
    %s4765 = scalar_lea.vmem %s11, 1
    %v4766 = vld [vmem:[%s4765] sm:$0x1]
    %v4767 = vsel %vm201, %v4757, 0.0
    %4768 = vadd.xlane.f32.xlu0 %v4767
    %v4769 = vpop.xlane.xlu0 %4768
    %v4770 = vsel %vm201, %v4758, 0.0
    %4771 = vadd.xlane.f32.xlu0 %v4770
    %v4772 = vpop.xlane.xlu0 %4771
    %v4773 = vsel %vm201, %v4759, 0.0
    %4774 = vadd.xlane.f32.xlu0 %v4773
    %v4775 = vpop.xlane.xlu0 %4774
    %v4776 = vsel %vm201, %v4760, 0.0
    %4777 = vadd.xlane.f32.xlu0 %v4776
    %v4778 = vpop.xlane.xlu0 %4777
    %v4779 = vsel %vm201, %v4761, 0.0
    %4780 = vadd.xlane.f32.xlu0 %v4779
    %v4781 = vpop.xlane.xlu0 %4780
    %v4782 = vsel %vm201, %v4762, 0.0
    %4783 = vadd.xlane.f32.xlu0 %v4782
    %v4784 = vpop.xlane.xlu0 %4783
    %v4785 = vmul.f32 %v4769, %v220
    %v4786 = vmul.f32 %v4772, %v220
    %v4787 = vmul.f32 %v4775, %v220
    %v4788 = vmul.f32 %v4778, %v220
    %v4789 = vmul.f32 %v4781, %v220
    %v4790 = vmul.f32 %v4784, %v220
    %v4791 = vsub.f32 %v4757, %v4785
    %v4792 = vsub.f32 %v4758, %v4786
    %v4793 = vsub.f32 %v4759, %v4787
    %v4794 = vsub.f32 %v4760, %v4788
    %v4795 = vsub.f32 %v4761, %v4789
    %v4796 = vsub.f32 %v4762, %v4790
    %v4797 = vmul.f32 %v4791, %v4791
    %v4798 = vmul.f32 %v4792, %v4792
    %v4799 = vmul.f32 %v4793, %v4793
    %v4800 = vmul.f32 %v4794, %v4794
    %v4801 = vmul.f32 %v4795, %v4795
    %v4802 = vmul.f32 %v4796, %v4796
    %v4803 = vsel %vm201, %v4797, 0.0
    %4804 = vadd.xlane.f32.xlu0 %v4803
    %v4805 = vpop.xlane.xlu0 %4804
    %v4806 = vsel %vm201, %v4798, 0.0
    %4807 = vadd.xlane.f32.xlu0 %v4806
    %v4808 = vpop.xlane.xlu0 %4807
    %v4809 = vsel %vm201, %v4799, 0.0
    %4810 = vadd.xlane.f32.xlu0 %v4809
    %v4811 = vpop.xlane.xlu0 %4810
    %v4812 = vsel %vm201, %v4800, 0.0
    %4813 = vadd.xlane.f32.xlu0 %v4812
    %v4814 = vpop.xlane.xlu0 %4813
    %v4815 = vsel %vm201, %v4801, 0.0
    %4816 = vadd.xlane.f32.xlu0 %v4815
    %v4817 = vpop.xlane.xlu0 %4816
    %v4818 = vsel %vm201, %v4802, 0.0
    %4819 = vadd.xlane.f32.xlu0 %v4818
    %v4820 = vpop.xlane.xlu0 %4819
    %v4821 = vmul.f32 %v4805, %v220
    %v4822 = vmul.f32 %v4808, %v220
    %v4823 = vmul.f32 %v4811, %v220
    %v4824 = vmul.f32 %v4814, %v220
    %v4825 = vmul.f32 %v4817, %v220
    %v4826 = vmul.f32 %v4820, %v220
    %v4827 = vadd.f32 %v4821, 1e-12
    %v4828 = vadd.f32 %v4822, 1e-12
    %v4829 = vadd.f32 %v4823, 1e-12
    %v4830 = vadd.f32 %v4824, 1e-12
    %v4831 = vadd.f32 %v4825, 1e-12
    %v4832 = vadd.f32 %v4826, 1e-12
    %v4833 = vrsqrt.pop %v4827
    %v4834 = vrsqrt.pop %v4828
    %v4835 = vrsqrt.pop %v4829
    %v4836 = vrsqrt.pop %v4830
    %v4837 = vrsqrt.pop %v4831
    %v4838 = vrsqrt.pop %v4832
    %v4839 = vmul.f32 %v4791, %v4833
    %v4840 = vmul.f32 %v4792, %v4834
    %v4841 = vmul.f32 %v4793, %v4835
    %v4842 = vmul.f32 %v4794, %v4836
    %v4843 = vmul.f32 %v4795, %v4837
    %v4844 = vmul.f32 %v4796, %v4838
    %v4846 = vlaneseq
    %v4847 = vshrl.u32 %v4846, 7
    %v4848 = vsub.s32 0, %v4847
    %v4849 = vrot.slane %v4764, %v4848
    %v4851 = vmul.f32 %v4839, %v4849
    %v4852 = vmul.f32 %v4840, %v4849
    %v4853 = vmul.f32 %v4841, %v4849
    %v4854 = vmul.f32 %v4842, %v4849
    %v4855 = vmul.f32 %v4843, %v4849
    %v4856 = vmul.f32 %v4844, %v4849
    %v4858 = vlaneseq
    %v4859 = vshrl.u32 %v4858, 7
    %v4860 = vsub.s32 0, %v4859
    %v4861 = vrot.slane %v4766, %v4860
    %v4863 = vadd.f32 %v4851, %v4861
    %v4864 = vadd.f32 %v4852, %v4861
    %v4865 = vadd.f32 %v4853, %v4861
    %v4866 = vadd.f32 %v4854, %v4861
    %v4867 = vadd.f32 %v4855, %v4861
    %v4868 = vadd.f32 %v4856, %v4861
    %s4869 = scalar_lea.vmem %s12, 32
    %v4870 = vld [vmem:[%s4869] sm:$0xff]
    %v4871 = vld [vmem:[%s4869 + $0x8] sm:$0xff]
    %v4872 = vld [vmem:[%s4869 + $0x10] sm:$0xff]
    %v4873 = vld [vmem:[%s4869 + $0x18] sm:$0xff]
    %s4874 = scalar_lea.vmem %s13, 1
    %v4875 = vld [vmem:[%s4874] sm:$0x1]
    %v4877 = vlaneseq
    %v4878 = vshrl.u32 %v4877, 7
    %v4879 = vsub.s32 0, %v4878
    %v4880 = vrot.slane %v4875, %v4879
    %v4883 = vsel %vm201, %v4863, 0
    %v4886 = vsel %vm201, %v4864, 0
    %v4889 = vsel %vm201, %v4865, 0
    %v4892 = vsel %vm201, %v4866, 0
    %v4895 = vsel %vm201, %v4867, 0
    %v4898 = vsel %vm201, %v4868, 0
    %4900 = vmatprep.subr.mxu0 0.0
    %4901 = vmatpush1.msra.mxu0 0.0
    %4902 = vmatprep.subr.mxu0 0.0
    %4903 = vmatpush1.msra.mxu0 0.0
    %4904 = vmatprep.subr.mxu0 0.0
    %4905 = vmatpush1.msra.mxu0 0.0
    %4906 = vmatprep.subr.mxu0 0.0
    %4907 = vmatpush1.msra.mxu0 0.0
    %4908 = vmatprep.subr.mxu0 0.0
    %4909 = vmatpush1.msra.mxu0 0.0
    %4910 = vmatprep.subr.mxu0 0.0
    %4911 = vmatpush1.msra.mxu0 0.0
    %4912 = vmatprep.subr.mxu0 0.0
    %4913 = vmatpush1.msra.mxu0 0.0
    %4914 = vmatprep.subr.mxu0 0.0
    %4915 = vmatpush1.msra.mxu0 0.0
    %4916 = vmatprep.subr.mxu0 0.0
    %4917 = vmatpush1.msra.mxu0 0.0
    %4918 = vmatprep.subr.mxu0 0.0
    %4919 = vmatpush1.msra.mxu0 0.0
    %4920 = vmatprep.subr.mxu0 0.0
    %4921 = vmatpush1.msra.mxu0 0.0
    %4922 = vmatprep.subr.mxu0 0.0
    %4923 = vmatpush1.msra.mxu0 0.0
    %4924 = vmatprep.subr.mxu0 0.0
    %4925 = vmatpush1.msra.mxu0 %v4873
    %4926 = vmatprep.subr.mxu0 0.0
    %4927 = vmatpush1.msra.mxu0 %v4872
    %4928 = vmatprep.subr.mxu0 0.0
    %4929 = vmatpush1.msra.mxu0 %v4871
    %4930 = vmatprep.subr.mxu0 0.0
    %4931 = vmatpush1.msra.mxu0 %v4870
    %4932 = vmatprep.subr.mxu0 0.0
    %4933 = vmatpush2.msra.mxu0 0.0
    %4934 = vmatprep.subr.mxu0 0.0
    %4935 = vmatpush2.msra.mxu0 0.0
    %4936 = vmatprep.subr.mxu0 0.0
    %4937 = vmatpush2.msra.mxu0 0.0
    %4938 = vmatprep.subr.mxu0 0.0
    %4939 = vmatpush2.msra.mxu0 0.0
    %4940 = vmatprep.subr.mxu0 0.0
    %4941 = vmatpush2.msra.mxu0 0.0
    %4942 = vmatprep.subr.mxu0 0.0
    %4943 = vmatpush2.msra.mxu0 0.0
    %4944 = vmatprep.subr.mxu0 0.0
    %4945 = vmatpush2.msra.mxu0 0.0
    %4946 = vmatprep.subr.mxu0 0.0
    %4947 = vmatpush2.msra.mxu0 0.0
    %4948 = vmatprep.subr.mxu0 0.0
    %4949 = vmatpush2.msra.mxu0 0.0
    %4950 = vmatprep.subr.mxu0 0.0
    %4951 = vmatpush2.msra.mxu0 0.0
    %4952 = vmatprep.subr.mxu0 0.0
    %4953 = vmatpush2.msra.mxu0 0.0
    %4954 = vmatprep.subr.mxu0 0.0
    %4955 = vmatpush2.msra.mxu0 0.0
    %4956 = vmatprep.subr.mxu0 0.0
    %4957 = vmatpush2.msra.mxu0 0.0
    %4958 = vmatprep.subr.mxu0 0.0
    %4959 = vmatpush2.msra.mxu0 0.0
    %4960 = vmatprep.subr.mxu0 0.0
    %4961 = vmatpush2.msra.mxu0 0.0
    %4962 = vmatprep.subr.mxu0 0.0
    %4963 = vmatpush2.msra.mxu0 0.0
    %4964 = vmatprep.mubr.f32.mxu0 0.0
    %4965 = vmatmul.mubr.f32.gmra.mxu0 %v4883
    %v4966 = vpop.f32.mrf.mxu0
    %v4967 = vadd.f32 %v4880, %v4966
    %v4968 = vpop.f32.mrf.mxu0
    %4969 = vmatprep.mubr.f32.mxu0 0.0
    %4970 = vmatmul.mubr.f32.gmra.mxu0 %v4886
    %v4971 = vpop.f32.mrf.mxu0
    %v4972 = vadd.f32 %v4880, %v4971
    %v4973 = vpop.f32.mrf.mxu0
    %4974 = vmatprep.mubr.f32.mxu0 0.0
    %4975 = vmatmul.mubr.f32.gmra.mxu0 %v4889
    %v4976 = vpop.f32.mrf.mxu0
    %v4977 = vadd.f32 %v4880, %v4976
    %v4978 = vpop.f32.mrf.mxu0
    %4979 = vmatprep.mubr.f32.mxu0 0.0
    %4980 = vmatmul.mubr.f32.gmra.mxu0 %v4892
    %v4981 = vpop.f32.mrf.mxu0
    %v4982 = vadd.f32 %v4880, %v4981
    %v4983 = vpop.f32.mrf.mxu0
    %4984 = vmatprep.mubr.f32.mxu0 0.0
    %4985 = vmatmul.mubr.f32.gmra.mxu0 %v4895
    %v4986 = vpop.f32.mrf.mxu0
    %v4987 = vadd.f32 %v4880, %v4986
    %v4988 = vpop.f32.mrf.mxu0
    %4989 = vmatprep.mubr.f32.mxu0 0.0
    %4990 = vmatmul.mubr.f32.gmra.mxu0 %v4898
    %v4991 = vpop.f32.mrf.mxu0
    %v4992 = vadd.f32 %v4880, %v4991
    %v4993 = vpop.f32.mrf.mxu0
    %4994 = vdwg.mxu0
    %v4995 = vmul.f32 %v4967, 0.5
    %v4996 = vmul.f32 %v4972, 0.5
    %v4997 = vmul.f32 %v4977, 0.5
    %v4998 = vmul.f32 %v4982, 0.5
    %v4999 = vmul.f32 %v4987, 0.5
    %v5000 = vmul.f32 %v4992, 0.5
    %v5001 = vmul.f32 %v4967, %v4967
    %v5002 = vmul.f32 %v4972, %v4972
    %v5003 = vmul.f32 %v4977, %v4977
    %v5004 = vmul.f32 %v4982, %v4982
    %v5005 = vmul.f32 %v4987, %v4987
    %v5006 = vmul.f32 %v4992, %v4992
    %v5007 = vmul.f32 %v5001, %v4967
    %v5008 = vmul.f32 %v5002, %v4972
    %v5009 = vmul.f32 %v5003, %v4977
    %v5010 = vmul.f32 %v5004, %v4982
    %v5011 = vmul.f32 %v5005, %v4987
    %v5012 = vmul.f32 %v5006, %v4992
    %v5013 = vmul.f32 %v5007, 0.044715
    %v5014 = vmul.f32 %v5008, 0.044715
    %v5015 = vmul.f32 %v5009, 0.044715
    %v5016 = vmul.f32 %v5010, 0.044715
    %v5017 = vmul.f32 %v5011, 0.044715
    %v5018 = vmul.f32 %v5012, 0.044715
    %v5019 = vadd.f32 %v4967, %v5013
    %v5020 = vadd.f32 %v4972, %v5014
    %v5021 = vadd.f32 %v4977, %v5015
    %v5022 = vadd.f32 %v4982, %v5016
    %v5023 = vadd.f32 %v4987, %v5017
    %v5024 = vadd.f32 %v4992, %v5018
    %v5025 = vmul.f32 %v5019, 0.7978846
    %v5026 = vmul.f32 %v5020, 0.7978846
    %v5027 = vmul.f32 %v5021, 0.7978846
    %v5028 = vmul.f32 %v5022, 0.7978846
    %v5029 = vmul.f32 %v5023, 0.7978846
    %v5030 = vmul.f32 %v5024, 0.7978846
    %v5031 = vtanh.pop %v5025
    %v5032 = vtanh.pop %v5026
    %v5033 = vtanh.pop %v5027
    %v5034 = vtanh.pop %v5028
    %v5035 = vtanh.pop %v5029
    %v5036 = vtanh.pop %v5030
    %v5037 = vadd.f32 %v5031, 1.0
    %v5038 = vadd.f32 %v5032, 1.0
    %v5039 = vadd.f32 %v5033, 1.0
    %v5040 = vadd.f32 %v5034, 1.0
    %v5041 = vadd.f32 %v5035, 1.0
    %v5042 = vadd.f32 %v5036, 1.0
    %v5043 = vmul.f32 %v4995, %v5037
    %v5044 = vmul.f32 %v4996, %v5038
    %v5045 = vmul.f32 %v4997, %v5039
    %v5046 = vmul.f32 %v4998, %v5040
    %v5047 = vmul.f32 %v4999, %v5041
    %v5048 = vmul.f32 %v5000, %v5042
    %s5049 = scalar_lea.vmem %s14, 64
    %v5050 = vld [vmem:[%s5049] sm:$0xff]
    %v5051 = vld [vmem:[%s5049 + $0x8] sm:$0xff]
    %v5052 = vld [vmem:[%s5049 + $0x10] sm:$0xff]
    %v5053 = vld [vmem:[%s5049 + $0x18] sm:$0xff]
    %v5054 = vld [vmem:[%s5049 + $0x20] sm:$0xff]
    %v5055 = vld [vmem:[%s5049 + $0x28] sm:$0xff]
    %v5056 = vld [vmem:[%s5049 + $0x30] sm:$0xff]
    %v5057 = vld [vmem:[%s5049 + $0x38] sm:$0xff]
    %s5058 = scalar_lea.vmem %s15, 1
    %v5059 = vld [vmem:[%s5058] sm:$0x1]
    %v5061 = vlaneseq
    %v5062 = vshrl.u32 %v5061, 7
    %v5063 = vsub.s32 0, %v5062
    %v5064 = vrot.slane %v5059, %v5063
    %v5067 = vsel %vm2568, %v5043, 0
    %v5070 = vsel %vm2568, %v5044, 0
    %v5073 = vsel %vm2568, %v5045, 0
    %v5076 = vsel %vm2568, %v5046, 0
    %v5079 = vsel %vm2568, %v5047, 0
    %v5082 = vsel %vm2568, %v5048, 0
    %5084 = vmatprep.subr.mxu0 0.0
    %5085 = vmatpush1.msra.mxu0 0.0
    %5086 = vmatprep.subr.mxu0 0.0
    %5087 = vmatpush1.msra.mxu0 0.0
    %5088 = vmatprep.subr.mxu0 0.0
    %5089 = vmatpush1.msra.mxu0 0.0
    %5090 = vmatprep.subr.mxu0 0.0
    %5091 = vmatpush1.msra.mxu0 0.0
    %5092 = vmatprep.subr.mxu0 0.0
    %5093 = vmatpush1.msra.mxu0 0.0
    %5094 = vmatprep.subr.mxu0 0.0
    %5095 = vmatpush1.msra.mxu0 0.0
    %5096 = vmatprep.subr.mxu0 0.0
    %5097 = vmatpush1.msra.mxu0 0.0
    %5098 = vmatprep.subr.mxu0 0.0
    %5099 = vmatpush1.msra.mxu0 0.0
    %5100 = vmatprep.subr.mxu0 0.0
    %5101 = vmatpush1.msra.mxu0 %v5057
    %5102 = vmatprep.subr.mxu0 0.0
    %5103 = vmatpush1.msra.mxu0 %v5056
    %5104 = vmatprep.subr.mxu0 0.0
    %5105 = vmatpush1.msra.mxu0 %v5055
    %5106 = vmatprep.subr.mxu0 0.0
    %5107 = vmatpush1.msra.mxu0 %v5054
    %5108 = vmatprep.subr.mxu0 0.0
    %5109 = vmatpush1.msra.mxu0 %v5053
    %5110 = vmatprep.subr.mxu0 0.0
    %5111 = vmatpush1.msra.mxu0 %v5052
    %5112 = vmatprep.subr.mxu0 0.0
    %5113 = vmatpush1.msra.mxu0 %v5051
    %5114 = vmatprep.subr.mxu0 0.0
    %5115 = vmatpush1.msra.mxu0 %v5050
    %5116 = vmatprep.subr.mxu0 0.0
    %5117 = vmatpush2.msra.mxu0 0.0
    %5118 = vmatprep.subr.mxu0 0.0
    %5119 = vmatpush2.msra.mxu0 0.0
    %5120 = vmatprep.subr.mxu0 0.0
    %5121 = vmatpush2.msra.mxu0 0.0
    %5122 = vmatprep.subr.mxu0 0.0
    %5123 = vmatpush2.msra.mxu0 0.0
    %5124 = vmatprep.subr.mxu0 0.0
    %5125 = vmatpush2.msra.mxu0 0.0
    %5126 = vmatprep.subr.mxu0 0.0
    %5127 = vmatpush2.msra.mxu0 0.0
    %5128 = vmatprep.subr.mxu0 0.0
    %5129 = vmatpush2.msra.mxu0 0.0
    %5130 = vmatprep.subr.mxu0 0.0
    %5131 = vmatpush2.msra.mxu0 0.0
    %5132 = vmatprep.subr.mxu0 0.0
    %5133 = vmatpush2.msra.mxu0 0.0
    %5134 = vmatprep.subr.mxu0 0.0
    %5135 = vmatpush2.msra.mxu0 0.0
    %5136 = vmatprep.subr.mxu0 0.0
    %5137 = vmatpush2.msra.mxu0 0.0
    %5138 = vmatprep.subr.mxu0 0.0
    %5139 = vmatpush2.msra.mxu0 0.0
    %5140 = vmatprep.subr.mxu0 0.0
    %5141 = vmatpush2.msra.mxu0 0.0
    %5142 = vmatprep.subr.mxu0 0.0
    %5143 = vmatpush2.msra.mxu0 0.0
    %5144 = vmatprep.subr.mxu0 0.0
    %5145 = vmatpush2.msra.mxu0 0.0
    %5146 = vmatprep.subr.mxu0 0.0
    %5147 = vmatpush2.msra.mxu0 0.0
    %5148 = vmatprep.mubr.f32.mxu0 0.0
    %5149 = vmatmul.mubr.f32.gmra.mxu0 %v5067
    %v5150 = vpop.f32.mrf.mxu0
    %v5151 = vadd.f32 %v5064, %v5150
    %v5152 = vpop.f32.mrf.mxu0
    %5153 = vmatprep.mubr.f32.mxu0 0.0
    %5154 = vmatmul.mubr.f32.gmra.mxu0 %v5070
    %v5155 = vpop.f32.mrf.mxu0
    %v5156 = vpop.f32.mrf.mxu0
    %5157 = vmatprep.mubr.f32.mxu0 0.0
    %5158 = vmatmul.mubr.f32.gmra.mxu0 %v5073
    %v5159 = vpop.f32.mrf.mxu0
    %v5160 = vpop.f32.mrf.mxu0
    %5161 = vmatprep.mubr.f32.mxu0 0.0
    %5162 = vmatmul.mubr.f32.gmra.mxu0 %v5076
    %v5163 = vpop.f32.mrf.mxu0
    %v5164 = vadd.f32 %v5064, %v5163
    %v5165 = vpop.f32.mrf.mxu0
    %5166 = vmatprep.mubr.f32.mxu0 0.0
    %5167 = vmatmul.mubr.f32.gmra.mxu0 %v5079
    %v5168 = vpop.f32.mrf.mxu0
    %v5169 = vpop.f32.mrf.mxu0
    %5170 = vmatprep.mubr.f32.mxu0 0.0
    %5171 = vmatmul.mubr.f32.gmra.mxu0 %v5082
    %v5172 = vpop.f32.mrf.mxu0
    %v5173 = vpop.f32.mrf.mxu0
    %5174 = vdwg.mxu0
    %v5175 = vadd.f32 %v4757, %v5151
    %v5176 = vadd.f32 %v4760, %v5164
    %v5178 = vrot.slane %v5176, 7
    %vm5180 = vcmask 1040384
    %v5181 = vsel %vm5180, %v5175, %v5178
    %v5182 = vld [vmem:[%s16] sm:$0x1]
    %v5183 = vld [vmem:[%s17] sm:$0x1]
    %vm5184 = vcmask 254976
    %v5185 = vsel %vm5184, %v5181, 0.0
    %5186 = vadd.xlane.f32.xlu0 %v5185
    %v5187 = vpop.xlane.xlu0 %5186
    %v5188 = vmul.f32 %v5187, %v220
    %v5189 = vsub.f32 %v5181, %v5188
    %v5190 = vmul.f32 %v5189, %v5189
    %v5191 = vsel %vm5184, %v5190, 0.0
    %5192 = vadd.xlane.f32.xlu0 %v5191
    %v5193 = vpop.xlane.xlu0 %5192
    %v5194 = vmul.f32 %v5193, %v220
    %v5195 = vadd.f32 %v5194, 1e-12
    %v5196 = vrsqrt.pop %v5195
    %v5197 = vmul.f32 %v5189, %v5196
    %v5199 = vlaneseq
    %v5200 = vshrl.u32 %v5199, 7
    %v5201 = vsub.s32 0, %v5200
    %v5202 = vrot.slane %v5182, %v5201
    %v5204 = vmul.f32 %v5197, %v5202
    %v5206 = vlaneseq
    %v5207 = vshrl.u32 %v5206, 7
    %v5208 = vsub.s32 0, %v5207
    %v5209 = vrot.slane %v5183, %v5208
    %v5211 = vadd.f32 %v5204, %v5209
    %5212 = vst.msk [vmem:[#allocation2] sm:$0x3] %vm5184, %v5211
    // Predicated region
    $region74: #{vit_forward.1} parent=1 // pred_check
      _
    $region75: #{vit_forward.1} parent=1 // pred_check_branch
      %5214 = sbr.rel (0) target = $region77
    $region76: #{vit_forward.1} parent=1 // pred_region
      %s5216 = ssub.s32 32, 32
      %5217 = vsyncadd [#allocation3], %s5216
      %s5219 = sshll.u32 [#allocation2], 4
      %s5220 = int_to_ptr.vmem [resolvable:$true] %s5219
      %5222 = dma.vmem_to_hbm [thread:$0]  %s5220, 32, %s18, [#allocation3]
    $region77: #{vit_forward.1} parent=1 // pred_fallthru
      _
    // Predicated region
    $region78: #{vit_forward.1} parent=1 // pred_check
      _
    $region79: #{vit_forward.1} parent=1 // pred_check_branch
      %5224 = sbr.rel (0) target = $region81
    $region80: #{vit_forward.1} parent=1 // pred_region
      %5225 = dma.done [#allocation3], 32
    $region81: #{vit_forward.1} parent=1 // pred_fallthru
      _
    %5226 = vsyncpa [#allocation3], 1

</llo_original>
